<compile_context>
chip_gen: v5e
topology: v5e:2x2
jax: 0.10.0
libtpu: 0.0.40
codegen_flags: <defaults>
</compile_context>

<pallas_src>
import math
import numpy as np
import jax
import jax.numpy as jnp
from jax.experimental import pallas as pl
from jax.experimental.pallas import tpu as pltpu

EPS = 1e-5  # torch.nn.BatchNorm2d default eps


# --------------------------- fused Pallas kernel ---------------------------

def _batchnorm_train(x, g, b):
    """BatchNorm2d in training mode: per-channel batch mean / biased var."""
    mean = jnp.mean(x, axis=0, keepdims=True)
    d = x - mean
    var = jnp.mean(d * d, axis=0, keepdims=True)      # two-pass, no cancellation
    return d * jax.lax.rsqrt(var + EPS) * g + b


def fused_resnet_kernel(p0_ref, w1_ref, g1_ref, b1_ref,
                        pmax_ref, sconv_ref,
                        wb1_ref, gb1_ref, bb1_ref,
                        wb2_ref, gb2_ref, bb2_ref,
                        aavg_ref, fcw_ref, fcb_ref, rng_ref,
                        o_ref):
    # ---- stem: Conv2d(2,64,7x7,s2,p3) as im2col GEMM + BN(train) + ReLU ----
    x = jnp.dot(p0_ref[...], w1_ref[...],
                preferred_element_type=jnp.float32)               # (128, 64) f32
    y = jnp.maximum(_batchnorm_train(x, g1_ref[...], b1_ref[...]), 0.0)
    yb = y.astype(jnp.bfloat16)

    # ---- MaxPool2d(3, stride 2, pad 1): 9 tap-selection matmuls + max ------
    # Post-ReLU values are >= 0, so zero rows (padding) behave like -inf pad.
    mp = jnp.dot(pmax_ref[0], yb, preferred_element_type=jnp.float32)
    for t in range(1, 9):
        mp = jnp.maximum(mp, jnp.dot(pmax_ref[t], yb,
                                     preferred_element_type=jnp.float32))
    # mp: (32, 64) f32  == (N, 4, 4, 64) flattened row-major

    def conv3x3(h_bf16, w_ref):
        # 3x3 / stride 1 / pad 1 conv as 9 shifted (selection) matmuls.
        acc = jnp.zeros((h_bf16.shape[0], 64), jnp.float32)
        for t in range(9):
            tap = jnp.dot(sconv_ref[t], h_bf16,
                          preferred_element_type=jnp.float32)      # exact gather
            acc = acc + jnp.dot(tap.astype(jnp.bfloat16), w_ref[t],
                                preferred_element_type=jnp.float32)
        return acc

    # ---- layer1: BasicBlock(64->64): conv-bn-relu, conv-bn, +id, relu ------
    h1 = conv3x3(mp.astype(jnp.bfloat16), wb1_ref)
    h1 = jnp.maximum(_batchnorm_train(h1, gb1_ref[...], bb1_ref[...]), 0.0)
    h2 = conv3x3(h1.astype(jnp.bfloat16), wb2_ref)
    h2 = jnp.maximum(_batchnorm_train(h2, gb2_ref[...], bb2_ref[...]) + mp, 0.0)

    # ---- head: AdaptiveAvgPool2d((1,1)) (as matmul) + Linear(64,2) + range --
    pooled = jnp.dot(aavg_ref[...], h2.astype(jnp.bfloat16),
                     preferred_element_type=jnp.float32)           # (N, 64)
    logits = jnp.dot(pooled.astype(jnp.bfloat16), fcw_ref[...],
                     preferred_element_type=jnp.float32) + fcb_ref[...]
    o_ref[...] = logits / jnp.maximum(rng_ref[...], 0.1)           # (N, 2)


def run_fused(args, out_shape):
    bytes_accessed = int(sum(int(np.prod(a.shape)) * a.dtype.itemsize
                             for a in args)) + int(np.prod(out_shape)) * 4
    return pl.pallas_call(
        fused_resnet_kernel,
        out_shape=jax.ShapeDtypeStruct(out_shape, jnp.float32),
        in_specs=[pl.BlockSpec(memory_space=pltpu.MemorySpace.VMEM)
                  for _ in args],
        out_specs=pl.BlockSpec(memory_space=pltpu.MemorySpace.VMEM),
        cost_estimate=pl.CostEstimate(flops=13_500_000, transcendentals=192,
                                      bytes_accessed=bytes_accessed),
    )(*args)


# -------------------- wrapper-side constant construction --------------------

def im2col(x, kh, kw, stride, pad, pad_value=0.0):
    """x: (N, H, W, C) -> patches (N, OH, OW, KH, KW, C). Only used on the raw input."""
    n, h, w, c = x.shape
    xp = jnp.pad(x, ((0, 0), (pad, pad), (pad, pad), (0, 0)),
                 constant_values=pad_value)
    oh = (h + 2 * pad - kh) // stride + 1
    ow = (w + 2 * pad - kw) // stride + 1
    rows = jnp.arange(oh)[:, None] * stride + jnp.arange(kh)[None, :]   # (OH, KH)
    cols = jnp.arange(ow)[:, None] * stride + jnp.arange(kw)[None, :]   # (OW, KW)
    return xp[:, rows[:, None, :, None], cols[None, :, None, :], :]


def build_maxpool_select(n, hw_in, hw_out):
    """(9, n*hw_out^2, n*hw_in^2) 0/1 matrices: tap t of a 3x3/s2/p1 maxpool."""
    m_out, m_in = n * hw_out * hw_out, n * hw_in * hw_in
    P = np.zeros((9, m_out, m_in), np.float32)
    for b in range(n):
        for oi in range(hw_out):
            for oj in range(hw_out):
                mo = b * hw_out * hw_out + oi * hw_out + oj
                for dy in range(3):
                    for dx in range(3):
                        si, sj = 2 * oi - 1 + dy, 2 * oj - 1 + dx
                        if 0 <= si < hw_in and 0 <= sj < hw_in:
                            P[dy * 3 + dx, mo, b * hw_in * hw_in + si * hw_in + sj] = 1.0
    return P


def build_conv_select(n, hw):
    """(9, n*hw^2, n*hw^2) 0/1 matrices: tap t of a 3x3/s1/p1 conv (zero pad)."""
    m = n * hw * hw
    S = np.zeros((9, m, m), np.float32)
    for b in range(n):
        for i in range(hw):
            for j in range(hw):
                mo = b * hw * hw + i * hw + j
                for dy in range(3):
                    for dx in range(3):
                        si, sj = i - 1 + dy, j - 1 + dx
                        if 0 <= si < hw and 0 <= sj < hw:
                            S[dy * 3 + dx, mo, b * hw * hw + si * hw + sj] = 1.0
    return S


def build_avgpool_select(n, hw):
    """(n, n*hw^2) averaging matrix for AdaptiveAvgPool2d((1,1))."""
    m = hw * hw
    A = np.zeros((n, n * m), np.float32)
    for b in range(n):
        A[b, b * m:(b + 1) * m] = 1.0 / m
    return A


def resnet18nano_forward(radar_nchw, ranges, p):
    """Training-mode (default state) forward of ResNet18Nano, range_flag=True."""
    x = jnp.transpose(radar_nchw, (0, 2, 3, 1)).astype(jnp.float32)   # NCHW->NHWC
    n, _, _, cin = x.shape

    # Stem im2col in XLA (the only gather; it reads the raw input once).
    patches = im2col(x, 7, 7, 2, 3)                                   # (N,8,8,7,7,2)
    oh = patches.shape[1]                                             # 8
    hw = oh // 2                                                      # 4 (post maxpool)
    patches = patches.reshape(n * oh * oh, 7 * 7 * cin).astype(jnp.bfloat16)

    pmax = jnp.asarray(build_maxpool_select(n, oh, hw), jnp.bfloat16)   # (9,32,128)
    sconv = jnp.asarray(build_conv_select(n, hw), jnp.bfloat16)         # (9,32,32)
    aavg = jnp.asarray(build_avgpool_select(n, hw), jnp.bfloat16)       # (2,32)

    args = [
        patches,
        p["w_conv1"].reshape(7 * 7 * cin, 64).astype(jnp.bfloat16),
        p["bn1_g"], p["bn1_b"],
        pmax, sconv,
        p["w_blk1"].reshape(9, 64, 64).astype(jnp.bfloat16),
        p["bn_blk1_g"], p["bn_blk1_b"],
        p["w_blk2"].reshape(9, 64, 64).astype(jnp.bfloat16),
        p["bn_blk2_g"], p["bn_blk2_b"],
        aavg,
        p["fc_w"].astype(jnp.bfloat16), p["fc_b"],
        ranges[:, 0:1],
    ]
    ratio = run_fused(args, (n, 2))
    # TODO(synk): torch.arctan has no Mosaic/Pallas lowering (no atan op); the
    # tiny (N, 2) elementwise arctan epilogue is applied in plain JAX.
    return jnp.arctan(ratio)


# ------------------------------------ main ------------------------------------

if __name__ == "__main__":
    key = jax.random.PRNGKey(0)
    ks = jax.random.split(key, 12)

    N, H, W = 2, 16, 16
    radar = jax.random.normal(ks[0], (N, 2, H, W), dtype=jnp.float32)   # 'radar1'
    ranges = jax.random.uniform(ks[1], (N, 1), dtype=jnp.float32,
                                minval=0.5, maxval=5.0)                 # 'range'

    def xavier(k, shape, fan_in, fan_out):
        std = math.sqrt(2.0 / (fan_in + fan_out))
        return std * jax.random.normal(k, shape, dtype=jnp.float32)

    params = {
        # Conv2d(2, 64, 7x7): xavier_normal; stored as (KH, KW, Cin, Cout)
        "w_conv1":  xavier(ks[2], (7, 7, 2, 64), 2 * 49, 64 * 49),
        "bn1_g":    1.0 + 0.02 * jax.random.normal(ks[3], (1, 64), dtype=jnp.float32),
        "bn1_b":    jnp.zeros((1, 64), jnp.float32),
        # BasicBlock conv1/conv2 (64 -> 64, 3x3)
        "w_blk1":   xavier(ks[4], (3, 3, 64, 64), 64 * 9, 64 * 9),
        "bn_blk1_g": 1.0 + 0.02 * jax.random.normal(ks[5], (1, 64), dtype=jnp.float32),
        "bn_blk1_b": jnp.zeros((1, 64), jnp.float32),
        "w_blk2":   xavier(ks[6], (3, 3, 64, 64), 64 * 9, 64 * 9),
        "bn_blk2_g": 1.0 + 0.02 * jax.random.normal(ks[7], (1, 64), dtype=jnp.float32),
        "bn_blk2_b": jnp.zeros((1, 64), jnp.float32),
        # Linear(64, 2): xavier_normal weight, normal bias
        "fc_w":     xavier(ks[8], (64, 2), 64, 2),
        "fc_b":     jax.random.normal(ks[9], (1, 2), dtype=jnp.float32),
    }

    flow = resnet18nano_forward(radar, ranges, params)
    flow = jax.block_until_ready(flow)
    assert flow.shape == (N, 2) and flow.dtype == jnp.float32
    assert bool(jnp.all(jnp.isfinite(flow)))
    print("KERNEL_OK")
</pallas_src>

<mosaic_0001>
module attributes {stable_mosaic.version = 11 : i64} {
  func.func @fused_resnet_kernel(%arg0: memref<128x98xbf16, #tpu.memory_space<vmem>>, %arg1: memref<98x64xbf16, #tpu.memory_space<vmem>>, %arg2: memref<1x64xf32, #tpu.memory_space<vmem>>, %arg3: memref<1x64xf32, #tpu.memory_space<vmem>>, %arg4: memref<9x32x128xbf16, #tpu.memory_space<vmem>>, %arg5: memref<9x32x32xbf16, #tpu.memory_space<vmem>>, %arg6: memref<9x64x64xbf16, #tpu.memory_space<vmem>>, %arg7: memref<1x64xf32, #tpu.memory_space<vmem>>, %arg8: memref<1x64xf32, #tpu.memory_space<vmem>>, %arg9: memref<9x64x64xbf16, #tpu.memory_space<vmem>>, %arg10: memref<1x64xf32, #tpu.memory_space<vmem>>, %arg11: memref<1x64xf32, #tpu.memory_space<vmem>>, %arg12: memref<2x32xbf16, #tpu.memory_space<vmem>>, %arg13: memref<64x2xbf16, #tpu.memory_space<vmem>>, %arg14: memref<1x2xf32, #tpu.memory_space<vmem>>, %arg15: memref<2x1xf32, #tpu.memory_space<vmem>>, %arg16: memref<2x2xf32, #tpu.memory_space<vmem>>) attributes {dimension_semantics = [], scalar_prefetch = 0 : i64, scratch_operands = 0 : i64, tpu.core_type = #tpu.core_type<tc>} {
    %c0 = arith.constant 0 : index
    %c0_0 = arith.constant 0 : index
    %0 = vector.load %arg0[%c0, %c0_0] : memref<128x98xbf16, #tpu.memory_space<vmem>>, vector<128x98xbf16>
    %c0_1 = arith.constant 0 : index
    %c0_2 = arith.constant 0 : index
    %1 = vector.load %arg1[%c0_1, %c0_2] : memref<98x64xbf16, #tpu.memory_space<vmem>>, vector<98x64xbf16>
    %cst = arith.constant dense<0.000000e+00> : vector<128x64xf32>
    %2 = tpu.matmul %0, %1, %cst {dimension_numbers = #tpu.dot_dimension_numbers<[1], [0], [0], [1], [0, 0, 1, 1], [], []>} : vector<128x98xbf16>, vector<98x64xbf16>, vector<128x64xf32> -> vector<128x64xf32>
    %c0_3 = arith.constant 0 : index
    %c0_4 = arith.constant 0 : index
    %3 = vector.load %arg2[%c0_3, %c0_4] : memref<1x64xf32, #tpu.memory_space<vmem>>, vector<1x64xf32>
    %c0_5 = arith.constant 0 : index
    %c0_6 = arith.constant 0 : index
    %4 = vector.load %arg3[%c0_5, %c0_6] : memref<1x64xf32, #tpu.memory_space<vmem>>, vector<1x64xf32>
    %cst_7 = arith.constant dense<0.000000e+00> : vector<64xf32>
    %5 = vector.multi_reduction <add>, %2, %cst_7 [0] : vector<128x64xf32> to vector<64xf32>
    %6 = vector.shape_cast %5 : vector<64xf32> to vector<1x64xf32>
    %cst_8 = arith.constant 1.280000e+02 : f32
    %7 = vector.broadcast %cst_8 : f32 to vector<1x64xf32>
    %8 = arith.divf %6, %7 : vector<1x64xf32>
    %9 = vector.broadcast %8 : vector<1x64xf32> to vector<128x64xf32>
    %10 = arith.subf %2, %9 : vector<128x64xf32>
    %11 = arith.mulf %10, %10 : vector<128x64xf32>
    %cst_9 = arith.constant dense<0.000000e+00> : vector<64xf32>
    %12 = vector.multi_reduction <add>, %11, %cst_9 [0] : vector<128x64xf32> to vector<64xf32>
    %13 = vector.shape_cast %12 : vector<64xf32> to vector<1x64xf32>
    %cst_10 = arith.constant 1.280000e+02 : f32
    %14 = vector.broadcast %cst_10 : f32 to vector<1x64xf32>
    %15 = arith.divf %13, %14 : vector<1x64xf32>
    %cst_11 = arith.constant 9.99999974E-6 : f32
    %16 = vector.broadcast %cst_11 : f32 to vector<1x64xf32>
    %17 = arith.addf %15, %16 : vector<1x64xf32>
    %18 = math.rsqrt %17 : vector<1x64xf32>
    %19 = vector.broadcast %18 : vector<1x64xf32> to vector<128x64xf32>
    %20 = arith.mulf %10, %19 : vector<128x64xf32>
    %21 = vector.broadcast %3 : vector<1x64xf32> to vector<128x64xf32>
    %22 = arith.mulf %20, %21 : vector<128x64xf32>
    %23 = vector.broadcast %4 : vector<1x64xf32> to vector<128x64xf32>
    %24 = arith.addf %22, %23 : vector<128x64xf32>
    %cst_12 = arith.constant 0.000000e+00 : f32
    %25 = vector.broadcast %cst_12 : f32 to vector<128x64xf32>
    %26 = arith.maximumf %24, %25 : vector<128x64xf32>
    %27 = arith.truncf %26 : vector<128x64xf32> to vector<128x64xbf16>
    %c0_13 = arith.constant 0 : index
    %c0_14 = arith.constant 0 : index
    %c0_15 = arith.constant 0 : index
    %28 = vector.load %arg4[%c0_13, %c0_14, %c0_15] : memref<9x32x128xbf16, #tpu.memory_space<vmem>>, vector<1x32x128xbf16>
    %29 = vector.shape_cast %28 : vector<1x32x128xbf16> to vector<32x128xbf16>
    %cst_16 = arith.constant dense<0.000000e+00> : vector<32x64xf32>
    %30 = tpu.matmul %29, %27, %cst_16 {dimension_numbers = #tpu.dot_dimension_numbers<[1], [0], [0], [1], [0, 0, 1, 1], [], []>} : vector<32x128xbf16>, vector<128x64xbf16>, vector<32x64xf32> -> vector<32x64xf32>
    %c1 = arith.constant 1 : index
    %c0_17 = arith.constant 0 : index
    %c0_18 = arith.constant 0 : index
    %31 = vector.load %arg4[%c1, %c0_17, %c0_18] : memref<9x32x128xbf16, #tpu.memory_space<vmem>>, vector<1x32x128xbf16>
    %32 = vector.shape_cast %31 : vector<1x32x128xbf16> to vector<32x128xbf16>
    %cst_19 = arith.constant dense<0.000000e+00> : vector<32x64xf32>
    %33 = tpu.matmul %32, %27, %cst_19 {dimension_numbers = #tpu.dot_dimension_numbers<[1], [0], [0], [1], [0, 0, 1, 1], [], []>} : vector<32x128xbf16>, vector<128x64xbf16>, vector<32x64xf32> -> vector<32x64xf32>
    %34 = arith.maximumf %30, %33 : vector<32x64xf32>
    %c2 = arith.constant 2 : index
    %c0_20 = arith.constant 0 : index
    %c0_21 = arith.constant 0 : index
    %35 = vector.load %arg4[%c2, %c0_20, %c0_21] : memref<9x32x128xbf16, #tpu.memory_space<vmem>>, vector<1x32x128xbf16>
    %36 = vector.shape_cast %35 : vector<1x32x128xbf16> to vector<32x128xbf16>
    %cst_22 = arith.constant dense<0.000000e+00> : vector<32x64xf32>
    %37 = tpu.matmul %36, %27, %cst_22 {dimension_numbers = #tpu.dot_dimension_numbers<[1], [0], [0], [1], [0, 0, 1, 1], [], []>} : vector<32x128xbf16>, vector<128x64xbf16>, vector<32x64xf32> -> vector<32x64xf32>
    %38 = arith.maximumf %34, %37 : vector<32x64xf32>
    %c3 = arith.constant 3 : index
    %c0_23 = arith.constant 0 : index
    %c0_24 = arith.constant 0 : index
    %39 = vector.load %arg4[%c3, %c0_23, %c0_24] : memref<9x32x128xbf16, #tpu.memory_space<vmem>>, vector<1x32x128xbf16>
    %40 = vector.shape_cast %39 : vector<1x32x128xbf16> to vector<32x128xbf16>
    %cst_25 = arith.constant dense<0.000000e+00> : vector<32x64xf32>
    %41 = tpu.matmul %40, %27, %cst_25 {dimension_numbers = #tpu.dot_dimension_numbers<[1], [0], [0], [1], [0, 0, 1, 1], [], []>} : vector<32x128xbf16>, vector<128x64xbf16>, vector<32x64xf32> -> vector<32x64xf32>
    %42 = arith.maximumf %38, %41 : vector<32x64xf32>
    %c4 = arith.constant 4 : index
    %c0_26 = arith.constant 0 : index
    %c0_27 = arith.constant 0 : index
    %43 = vector.load %arg4[%c4, %c0_26, %c0_27] : memref<9x32x128xbf16, #tpu.memory_space<vmem>>, vector<1x32x128xbf16>
    %44 = vector.shape_cast %43 : vector<1x32x128xbf16> to vector<32x128xbf16>
    %cst_28 = arith.constant dense<0.000000e+00> : vector<32x64xf32>
    %45 = tpu.matmul %44, %27, %cst_28 {dimension_numbers = #tpu.dot_dimension_numbers<[1], [0], [0], [1], [0, 0, 1, 1], [], []>} : vector<32x128xbf16>, vector<128x64xbf16>, vector<32x64xf32> -> vector<32x64xf32>
    %46 = arith.maximumf %42, %45 : vector<32x64xf32>
    %c5 = arith.constant 5 : index
    %c0_29 = arith.constant 0 : index
    %c0_30 = arith.constant 0 : index
    %47 = vector.load %arg4[%c5, %c0_29, %c0_30] : memref<9x32x128xbf16, #tpu.memory_space<vmem>>, vector<1x32x128xbf16>
    %48 = vector.shape_cast %47 : vector<1x32x128xbf16> to vector<32x128xbf16>
    %cst_31 = arith.constant dense<0.000000e+00> : vector<32x64xf32>
    %49 = tpu.matmul %48, %27, %cst_31 {dimension_numbers = #tpu.dot_dimension_numbers<[1], [0], [0], [1], [0, 0, 1, 1], [], []>} : vector<32x128xbf16>, vector<128x64xbf16>, vector<32x64xf32> -> vector<32x64xf32>
    %50 = arith.maximumf %46, %49 : vector<32x64xf32>
    %c6 = arith.constant 6 : index
    %c0_32 = arith.constant 0 : index
    %c0_33 = arith.constant 0 : index
    %51 = vector.load %arg4[%c6, %c0_32, %c0_33] : memref<9x32x128xbf16, #tpu.memory_space<vmem>>, vector<1x32x128xbf16>
    %52 = vector.shape_cast %51 : vector<1x32x128xbf16> to vector<32x128xbf16>
    %cst_34 = arith.constant dense<0.000000e+00> : vector<32x64xf32>
    %53 = tpu.matmul %52, %27, %cst_34 {dimension_numbers = #tpu.dot_dimension_numbers<[1], [0], [0], [1], [0, 0, 1, 1], [], []>} : vector<32x128xbf16>, vector<128x64xbf16>, vector<32x64xf32> -> vector<32x64xf32>
    %54 = arith.maximumf %50, %53 : vector<32x64xf32>
    %c7 = arith.constant 7 : index
    %c0_35 = arith.constant 0 : index
    %c0_36 = arith.constant 0 : index
    %55 = vector.load %arg4[%c7, %c0_35, %c0_36] : memref<9x32x128xbf16, #tpu.memory_space<vmem>>, vector<1x32x128xbf16>
    %56 = vector.shape_cast %55 : vector<1x32x128xbf16> to vector<32x128xbf16>
    %cst_37 = arith.constant dense<0.000000e+00> : vector<32x64xf32>
    %57 = tpu.matmul %56, %27, %cst_37 {dimension_numbers = #tpu.dot_dimension_numbers<[1], [0], [0], [1], [0, 0, 1, 1], [], []>} : vector<32x128xbf16>, vector<128x64xbf16>, vector<32x64xf32> -> vector<32x64xf32>
    %58 = arith.maximumf %54, %57 : vector<32x64xf32>
    %c8 = arith.constant 8 : index
    %c0_38 = arith.constant 0 : index
    %c0_39 = arith.constant 0 : index
    %59 = vector.load %arg4[%c8, %c0_38, %c0_39] : memref<9x32x128xbf16, #tpu.memory_space<vmem>>, vector<1x32x128xbf16>
    %60 = vector.shape_cast %59 : vector<1x32x128xbf16> to vector<32x128xbf16>
    %cst_40 = arith.constant dense<0.000000e+00> : vector<32x64xf32>
    %61 = tpu.matmul %60, %27, %cst_40 {dimension_numbers = #tpu.dot_dimension_numbers<[1], [0], [0], [1], [0, 0, 1, 1], [], []>} : vector<32x128xbf16>, vector<128x64xbf16>, vector<32x64xf32> -> vector<32x64xf32>
    %62 = arith.maximumf %58, %61 : vector<32x64xf32>
    %63 = arith.truncf %62 : vector<32x64xf32> to vector<32x64xbf16>
    %cst_41 = arith.constant 0.000000e+00 : f32
    %64 = vector.broadcast %cst_41 : f32 to vector<32x64xf32>
    %c0_42 = arith.constant 0 : index
    %c0_43 = arith.constant 0 : index
    %c0_44 = arith.constant 0 : index
    %65 = vector.load %arg5[%c0_42, %c0_43, %c0_44] : memref<9x32x32xbf16, #tpu.memory_space<vmem>>, vector<1x32x32xbf16>
    %66 = vector.shape_cast %65 : vector<1x32x32xbf16> to vector<32x32xbf16>
    %cst_45 = arith.constant dense<0.000000e+00> : vector<32x64xf32>
    %67 = tpu.matmul %66, %63, %cst_45 {dimension_numbers = #tpu.dot_dimension_numbers<[1], [0], [0], [1], [0, 0, 1, 1], [], []>} : vector<32x32xbf16>, vector<32x64xbf16>, vector<32x64xf32> -> vector<32x64xf32>
    %68 = arith.truncf %67 : vector<32x64xf32> to vector<32x64xbf16>
    %c0_46 = arith.constant 0 : index
    %c0_47 = arith.constant 0 : index
    %c0_48 = arith.constant 0 : index
    %69 = vector.load %arg6[%c0_46, %c0_47, %c0_48] : memref<9x64x64xbf16, #tpu.memory_space<vmem>>, vector<1x64x64xbf16>
    %70 = vector.shape_cast %69 : vector<1x64x64xbf16> to vector<64x64xbf16>
    %cst_49 = arith.constant dense<0.000000e+00> : vector<32x64xf32>
    %71 = tpu.matmul %68, %70, %cst_49 {dimension_numbers = #tpu.dot_dimension_numbers<[1], [0], [0], [1], [0, 0, 1, 1], [], []>} : vector<32x64xbf16>, vector<64x64xbf16>, vector<32x64xf32> -> vector<32x64xf32>
    %72 = arith.addf %64, %71 : vector<32x64xf32>
    %c1_50 = arith.constant 1 : index
    %c0_51 = arith.constant 0 : index
    %c0_52 = arith.constant 0 : index
    %73 = vector.load %arg5[%c1_50, %c0_51, %c0_52] : memref<9x32x32xbf16, #tpu.memory_space<vmem>>, vector<1x32x32xbf16>
    %74 = vector.shape_cast %73 : vector<1x32x32xbf16> to vector<32x32xbf16>
    %cst_53 = arith.constant dense<0.000000e+00> : vector<32x64xf32>
    %75 = tpu.matmul %74, %63, %cst_53 {dimension_numbers = #tpu.dot_dimension_numbers<[1], [0], [0], [1], [0, 0, 1, 1], [], []>} : vector<32x32xbf16>, vector<32x64xbf16>, vector<32x64xf32> -> vector<32x64xf32>
    %76 = arith.truncf %75 : vector<32x64xf32> to vector<32x64xbf16>
    %c1_54 = arith.constant 1 : index
    %c0_55 = arith.constant 0 : index
    %c0_56 = arith.constant 0 : index
    %77 = vector.load %arg6[%c1_54, %c0_55, %c0_56] : memref<9x64x64xbf16, #tpu.memory_space<vmem>>, vector<1x64x64xbf16>
    %78 = vector.shape_cast %77 : vector<1x64x64xbf16> to vector<64x64xbf16>
    %cst_57 = arith.constant dense<0.000000e+00> : vector<32x64xf32>
    %79 = tpu.matmul %76, %78, %cst_57 {dimension_numbers = #tpu.dot_dimension_numbers<[1], [0], [0], [1], [0, 0, 1, 1], [], []>} : vector<32x64xbf16>, vector<64x64xbf16>, vector<32x64xf32> -> vector<32x64xf32>
    %80 = arith.addf %72, %79 : vector<32x64xf32>
    %c2_58 = arith.constant 2 : index
    %c0_59 = arith.constant 0 : index
    %c0_60 = arith.constant 0 : index
    %81 = vector.load %arg5[%c2_58, %c0_59, %c0_60] : memref<9x32x32xbf16, #tpu.memory_space<vmem>>, vector<1x32x32xbf16>
    %82 = vector.shape_cast %81 : vector<1x32x32xbf16> to vector<32x32xbf16>
    %cst_61 = arith.constant dense<0.000000e+00> : vector<32x64xf32>
    %83 = tpu.matmul %82, %63, %cst_61 {dimension_numbers = #tpu.dot_dimension_numbers<[1], [0], [0], [1], [0, 0, 1, 1], [], []>} : vector<32x32xbf16>, vector<32x64xbf16>, vector<32x64xf32> -> vector<32x64xf32>
    %84 = arith.truncf %83 : vector<32x64xf32> to vector<32x64xbf16>
    %c2_62 = arith.constant 2 : index
    %c0_63 = arith.constant 0 : index
    %c0_64 = arith.constant 0 : index
    %85 = vector.load %arg6[%c2_62, %c0_63, %c0_64] : memref<9x64x64xbf16, #tpu.memory_space<vmem>>, vector<1x64x64xbf16>
    %86 = vector.shape_cast %85 : vector<1x64x64xbf16> to vector<64x64xbf16>
    %cst_65 = arith.constant dense<0.000000e+00> : vector<32x64xf32>
    %87 = tpu.matmul %84, %86, %cst_65 {dimension_numbers = #tpu.dot_dimension_numbers<[1], [0], [0], [1], [0, 0, 1, 1], [], []>} : vector<32x64xbf16>, vector<64x64xbf16>, vector<32x64xf32> -> vector<32x64xf32>
    %88 = arith.addf %80, %87 : vector<32x64xf32>
    %c3_66 = arith.constant 3 : index
    %c0_67 = arith.constant 0 : index
    %c0_68 = arith.constant 0 : index
    %89 = vector.load %arg5[%c3_66, %c0_67, %c0_68] : memref<9x32x32xbf16, #tpu.memory_space<vmem>>, vector<1x32x32xbf16>
    %90 = vector.shape_cast %89 : vector<1x32x32xbf16> to vector<32x32xbf16>
    %cst_69 = arith.constant dense<0.000000e+00> : vector<32x64xf32>
    %91 = tpu.matmul %90, %63, %cst_69 {dimension_numbers = #tpu.dot_dimension_numbers<[1], [0], [0], [1], [0, 0, 1, 1], [], []>} : vector<32x32xbf16>, vector<32x64xbf16>, vector<32x64xf32> -> vector<32x64xf32>
    %92 = arith.truncf %91 : vector<32x64xf32> to vector<32x64xbf16>
    %c3_70 = arith.constant 3 : index
    %c0_71 = arith.constant 0 : index
    %c0_72 = arith.constant 0 : index
    %93 = vector.load %arg6[%c3_70, %c0_71, %c0_72] : memref<9x64x64xbf16, #tpu.memory_space<vmem>>, vector<1x64x64xbf16>
    %94 = vector.shape_cast %93 : vector<1x64x64xbf16> to vector<64x64xbf16>
    %cst_73 = arith.constant dense<0.000000e+00> : vector<32x64xf32>
    %95 = tpu.matmul %92, %94, %cst_73 {dimension_numbers = #tpu.dot_dimension_numbers<[1], [0], [0], [1], [0, 0, 1, 1], [], []>} : vector<32x64xbf16>, vector<64x64xbf16>, vector<32x64xf32> -> vector<32x64xf32>
    %96 = arith.addf %88, %95 : vector<32x64xf32>
    %c4_74 = arith.constant 4 : index
    %c0_75 = arith.constant 0 : index
    %c0_76 = arith.constant 0 : index
    %97 = vector.load %arg5[%c4_74, %c0_75, %c0_76] : memref<9x32x32xbf16, #tpu.memory_space<vmem>>, vector<1x32x32xbf16>
    %98 = vector.shape_cast %97 : vector<1x32x32xbf16> to vector<32x32xbf16>
    %cst_77 = arith.constant dense<0.000000e+00> : vector<32x64xf32>
    %99 = tpu.matmul %98, %63, %cst_77 {dimension_numbers = #tpu.dot_dimension_numbers<[1], [0], [0], [1], [0, 0, 1, 1], [], []>} : vector<32x32xbf16>, vector<32x64xbf16>, vector<32x64xf32> -> vector<32x64xf32>
    %100 = arith.truncf %99 : vector<32x64xf32> to vector<32x64xbf16>
    %c4_78 = arith.constant 4 : index
    %c0_79 = arith.constant 0 : index
    %c0_80 = arith.constant 0 : index
    %101 = vector.load %arg6[%c4_78, %c0_79, %c0_80] : memref<9x64x64xbf16, #tpu.memory_space<vmem>>, vector<1x64x64xbf16>
    %102 = vector.shape_cast %101 : vector<1x64x64xbf16> to vector<64x64xbf16>
    %cst_81 = arith.constant dense<0.000000e+00> : vector<32x64xf32>
    %103 = tpu.matmul %100, %102, %cst_81 {dimension_numbers = #tpu.dot_dimension_numbers<[1], [0], [0], [1], [0, 0, 1, 1], [], []>} : vector<32x64xbf16>, vector<64x64xbf16>, vector<32x64xf32> -> vector<32x64xf32>
    %104 = arith.addf %96, %103 : vector<32x64xf32>
    %c5_82 = arith.constant 5 : index
    %c0_83 = arith.constant 0 : index
    %c0_84 = arith.constant 0 : index
    %105 = vector.load %arg5[%c5_82, %c0_83, %c0_84] : memref<9x32x32xbf16, #tpu.memory_space<vmem>>, vector<1x32x32xbf16>
    %106 = vector.shape_cast %105 : vector<1x32x32xbf16> to vector<32x32xbf16>
    %cst_85 = arith.constant dense<0.000000e+00> : vector<32x64xf32>
    %107 = tpu.matmul %106, %63, %cst_85 {dimension_numbers = #tpu.dot_dimension_numbers<[1], [0], [0], [1], [0, 0, 1, 1], [], []>} : vector<32x32xbf16>, vector<32x64xbf16>, vector<32x64xf32> -> vector<32x64xf32>
    %108 = arith.truncf %107 : vector<32x64xf32> to vector<32x64xbf16>
    %c5_86 = arith.constant 5 : index
    %c0_87 = arith.constant 0 : index
    %c0_88 = arith.constant 0 : index
    %109 = vector.load %arg6[%c5_86, %c0_87, %c0_88] : memref<9x64x64xbf16, #tpu.memory_space<vmem>>, vector<1x64x64xbf16>
    %110 = vector.shape_cast %109 : vector<1x64x64xbf16> to vector<64x64xbf16>
    %cst_89 = arith.constant dense<0.000000e+00> : vector<32x64xf32>
    %111 = tpu.matmul %108, %110, %cst_89 {dimension_numbers = #tpu.dot_dimension_numbers<[1], [0], [0], [1], [0, 0, 1, 1], [], []>} : vector<32x64xbf16>, vector<64x64xbf16>, vector<32x64xf32> -> vector<32x64xf32>
    %112 = arith.addf %104, %111 : vector<32x64xf32>
    %c6_90 = arith.constant 6 : index
    %c0_91 = arith.constant 0 : index
    %c0_92 = arith.constant 0 : index
    %113 = vector.load %arg5[%c6_90, %c0_91, %c0_92] : memref<9x32x32xbf16, #tpu.memory_space<vmem>>, vector<1x32x32xbf16>
    %114 = vector.shape_cast %113 : vector<1x32x32xbf16> to vector<32x32xbf16>
    %cst_93 = arith.constant dense<0.000000e+00> : vector<32x64xf32>
    %115 = tpu.matmul %114, %63, %cst_93 {dimension_numbers = #tpu.dot_dimension_numbers<[1], [0], [0], [1], [0, 0, 1, 1], [], []>} : vector<32x32xbf16>, vector<32x64xbf16>, vector<32x64xf32> -> vector<32x64xf32>
    %116 = arith.truncf %115 : vector<32x64xf32> to vector<32x64xbf16>
    %c6_94 = arith.constant 6 : index
    %c0_95 = arith.constant 0 : index
    %c0_96 = arith.constant 0 : index
    %117 = vector.load %arg6[%c6_94, %c0_95, %c0_96] : memref<9x64x64xbf16, #tpu.memory_space<vmem>>, vector<1x64x64xbf16>
    %118 = vector.shape_cast %117 : vector<1x64x64xbf16> to vector<64x64xbf16>
    %cst_97 = arith.constant dense<0.000000e+00> : vector<32x64xf32>
    %119 = tpu.matmul %116, %118, %cst_97 {dimension_numbers = #tpu.dot_dimension_numbers<[1], [0], [0], [1], [0, 0, 1, 1], [], []>} : vector<32x64xbf16>, vector<64x64xbf16>, vector<32x64xf32> -> vector<32x64xf32>
    %120 = arith.addf %112, %119 : vector<32x64xf32>
    %c7_98 = arith.constant 7 : index
    %c0_99 = arith.constant 0 : index
    %c0_100 = arith.constant 0 : index
    %121 = vector.load %arg5[%c7_98, %c0_99, %c0_100] : memref<9x32x32xbf16, #tpu.memory_space<vmem>>, vector<1x32x32xbf16>
    %122 = vector.shape_cast %121 : vector<1x32x32xbf16> to vector<32x32xbf16>
    %cst_101 = arith.constant dense<0.000000e+00> : vector<32x64xf32>
    %123 = tpu.matmul %122, %63, %cst_101 {dimension_numbers = #tpu.dot_dimension_numbers<[1], [0], [0], [1], [0, 0, 1, 1], [], []>} : vector<32x32xbf16>, vector<32x64xbf16>, vector<32x64xf32> -> vector<32x64xf32>
    %124 = arith.truncf %123 : vector<32x64xf32> to vector<32x64xbf16>
    %c7_102 = arith.constant 7 : index
    %c0_103 = arith.constant 0 : index
    %c0_104 = arith.constant 0 : index
    %125 = vector.load %arg6[%c7_102, %c0_103, %c0_104] : memref<9x64x64xbf16, #tpu.memory_space<vmem>>, vector<1x64x64xbf16>
    %126 = vector.shape_cast %125 : vector<1x64x64xbf16> to vector<64x64xbf16>
    %cst_105 = arith.constant dense<0.000000e+00> : vector<32x64xf32>
    %127 = tpu.matmul %124, %126, %cst_105 {dimension_numbers = #tpu.dot_dimension_numbers<[1], [0], [0], [1], [0, 0, 1, 1], [], []>} : vector<32x64xbf16>, vector<64x64xbf16>, vector<32x64xf32> -> vector<32x64xf32>
    %128 = arith.addf %120, %127 : vector<32x64xf32>
    %c8_106 = arith.constant 8 : index
    %c0_107 = arith.constant 0 : index
    %c0_108 = arith.constant 0 : index
    %129 = vector.load %arg5[%c8_106, %c0_107, %c0_108] : memref<9x32x32xbf16, #tpu.memory_space<vmem>>, vector<1x32x32xbf16>
    %130 = vector.shape_cast %129 : vector<1x32x32xbf16> to vector<32x32xbf16>
    %cst_109 = arith.constant dense<0.000000e+00> : vector<32x64xf32>
    %131 = tpu.matmul %130, %63, %cst_109 {dimension_numbers = #tpu.dot_dimension_numbers<[1], [0], [0], [1], [0, 0, 1, 1], [], []>} : vector<32x32xbf16>, vector<32x64xbf16>, vector<32x64xf32> -> vector<32x64xf32>
    %132 = arith.truncf %131 : vector<32x64xf32> to vector<32x64xbf16>
    %c8_110 = arith.constant 8 : index
    %c0_111 = arith.constant 0 : index
    %c0_112 = arith.constant 0 : index
    %133 = vector.load %arg6[%c8_110, %c0_111, %c0_112] : memref<9x64x64xbf16, #tpu.memory_space<vmem>>, vector<1x64x64xbf16>
    %134 = vector.shape_cast %133 : vector<1x64x64xbf16> to vector<64x64xbf16>
    %cst_113 = arith.constant dense<0.000000e+00> : vector<32x64xf32>
    %135 = tpu.matmul %132, %134, %cst_113 {dimension_numbers = #tpu.dot_dimension_numbers<[1], [0], [0], [1], [0, 0, 1, 1], [], []>} : vector<32x64xbf16>, vector<64x64xbf16>, vector<32x64xf32> -> vector<32x64xf32>
    %136 = arith.addf %128, %135 : vector<32x64xf32>
    %c0_114 = arith.constant 0 : index
    %c0_115 = arith.constant 0 : index
    %137 = vector.load %arg7[%c0_114, %c0_115] : memref<1x64xf32, #tpu.memory_space<vmem>>, vector<1x64xf32>
    %c0_116 = arith.constant 0 : index
    %c0_117 = arith.constant 0 : index
    %138 = vector.load %arg8[%c0_116, %c0_117] : memref<1x64xf32, #tpu.memory_space<vmem>>, vector<1x64xf32>
    %cst_118 = arith.constant dense<0.000000e+00> : vector<64xf32>
    %139 = vector.multi_reduction <add>, %136, %cst_118 [0] : vector<32x64xf32> to vector<64xf32>
    %140 = vector.shape_cast %139 : vector<64xf32> to vector<1x64xf32>
    %cst_119 = arith.constant 3.200000e+01 : f32
    %141 = vector.broadcast %cst_119 : f32 to vector<1x64xf32>
    %142 = arith.divf %140, %141 : vector<1x64xf32>
    %143 = vector.broadcast %142 : vector<1x64xf32> to vector<32x64xf32>
    %144 = arith.subf %136, %143 : vector<32x64xf32>
    %145 = arith.mulf %144, %144 : vector<32x64xf32>
    %cst_120 = arith.constant dense<0.000000e+00> : vector<64xf32>
    %146 = vector.multi_reduction <add>, %145, %cst_120 [0] : vector<32x64xf32> to vector<64xf32>
    %147 = vector.shape_cast %146 : vector<64xf32> to vector<1x64xf32>
    %cst_121 = arith.constant 3.200000e+01 : f32
    %148 = vector.broadcast %cst_121 : f32 to vector<1x64xf32>
    %149 = arith.divf %147, %148 : vector<1x64xf32>
    %cst_122 = arith.constant 9.99999974E-6 : f32
    %150 = vector.broadcast %cst_122 : f32 to vector<1x64xf32>
    %151 = arith.addf %149, %150 : vector<1x64xf32>
    %152 = math.rsqrt %151 : vector<1x64xf32>
    %153 = vector.broadcast %152 : vector<1x64xf32> to vector<32x64xf32>
    %154 = arith.mulf %144, %153 : vector<32x64xf32>
    %155 = vector.broadcast %137 : vector<1x64xf32> to vector<32x64xf32>
    %156 = arith.mulf %154, %155 : vector<32x64xf32>
    %157 = vector.broadcast %138 : vector<1x64xf32> to vector<32x64xf32>
    %158 = arith.addf %156, %157 : vector<32x64xf32>
    %cst_123 = arith.constant 0.000000e+00 : f32
    %159 = vector.broadcast %cst_123 : f32 to vector<32x64xf32>
    %160 = arith.maximumf %158, %159 : vector<32x64xf32>
    %161 = arith.truncf %160 : vector<32x64xf32> to vector<32x64xbf16>
    %cst_124 = arith.constant 0.000000e+00 : f32
    %162 = vector.broadcast %cst_124 : f32 to vector<32x64xf32>
    %c0_125 = arith.constant 0 : index
    %c0_126 = arith.constant 0 : index
    %c0_127 = arith.constant 0 : index
    %163 = vector.load %arg5[%c0_125, %c0_126, %c0_127] : memref<9x32x32xbf16, #tpu.memory_space<vmem>>, vector<1x32x32xbf16>
    %164 = vector.shape_cast %163 : vector<1x32x32xbf16> to vector<32x32xbf16>
    %cst_128 = arith.constant dense<0.000000e+00> : vector<32x64xf32>
    %165 = tpu.matmul %164, %161, %cst_128 {dimension_numbers = #tpu.dot_dimension_numbers<[1], [0], [0], [1], [0, 0, 1, 1], [], []>} : vector<32x32xbf16>, vector<32x64xbf16>, vector<32x64xf32> -> vector<32x64xf32>
    %166 = arith.truncf %165 : vector<32x64xf32> to vector<32x64xbf16>
    %c0_129 = arith.constant 0 : index
    %c0_130 = arith.constant 0 : index
    %c0_131 = arith.constant 0 : index
    %167 = vector.load %arg9[%c0_129, %c0_130, %c0_131] : memref<9x64x64xbf16, #tpu.memory_space<vmem>>, vector<1x64x64xbf16>
    %168 = vector.shape_cast %167 : vector<1x64x64xbf16> to vector<64x64xbf16>
    %cst_132 = arith.constant dense<0.000000e+00> : vector<32x64xf32>
    %169 = tpu.matmul %166, %168, %cst_132 {dimension_numbers = #tpu.dot_dimension_numbers<[1], [0], [0], [1], [0, 0, 1, 1], [], []>} : vector<32x64xbf16>, vector<64x64xbf16>, vector<32x64xf32> -> vector<32x64xf32>
    %170 = arith.addf %162, %169 : vector<32x64xf32>
    %c1_133 = arith.constant 1 : index
    %c0_134 = arith.constant 0 : index
    %c0_135 = arith.constant 0 : index
    %171 = vector.load %arg5[%c1_133, %c0_134, %c0_135] : memref<9x32x32xbf16, #tpu.memory_space<vmem>>, vector<1x32x32xbf16>
    %172 = vector.shape_cast %171 : vector<1x32x32xbf16> to vector<32x32xbf16>
    %cst_136 = arith.constant dense<0.000000e+00> : vector<32x64xf32>
    %173 = tpu.matmul %172, %161, %cst_136 {dimension_numbers = #tpu.dot_dimension_numbers<[1], [0], [0], [1], [0, 0, 1, 1], [], []>} : vector<32x32xbf16>, vector<32x64xbf16>, vector<32x64xf32> -> vector<32x64xf32>
    %174 = arith.truncf %173 : vector<32x64xf32> to vector<32x64xbf16>
    %c1_137 = arith.constant 1 : index
    %c0_138 = arith.constant 0 : index
    %c0_139 = arith.constant 0 : index
    %175 = vector.load %arg9[%c1_137, %c0_138, %c0_139] : memref<9x64x64xbf16, #tpu.memory_space<vmem>>, vector<1x64x64xbf16>
    %176 = vector.shape_cast %175 : vector<1x64x64xbf16> to vector<64x64xbf16>
    %cst_140 = arith.constant dense<0.000000e+00> : vector<32x64xf32>
    %177 = tpu.matmul %174, %176, %cst_140 {dimension_numbers = #tpu.dot_dimension_numbers<[1], [0], [0], [1], [0, 0, 1, 1], [], []>} : vector<32x64xbf16>, vector<64x64xbf16>, vector<32x64xf32> -> vector<32x64xf32>
    %178 = arith.addf %170, %177 : vector<32x64xf32>
    %c2_141 = arith.constant 2 : index
    %c0_142 = arith.constant 0 : index
    %c0_143 = arith.constant 0 : index
    %179 = vector.load %arg5[%c2_141, %c0_142, %c0_143] : memref<9x32x32xbf16, #tpu.memory_space<vmem>>, vector<1x32x32xbf16>
    %180 = vector.shape_cast %179 : vector<1x32x32xbf16> to vector<32x32xbf16>
    %cst_144 = arith.constant dense<0.000000e+00> : vector<32x64xf32>
    %181 = tpu.matmul %180, %161, %cst_144 {dimension_numbers = #tpu.dot_dimension_numbers<[1], [0], [0], [1], [0, 0, 1, 1], [], []>} : vector<32x32xbf16>, vector<32x64xbf16>, vector<32x64xf32> -> vector<32x64xf32>
    %182 = arith.truncf %181 : vector<32x64xf32> to vector<32x64xbf16>
    %c2_145 = arith.constant 2 : index
    %c0_146 = arith.constant 0 : index
    %c0_147 = arith.constant 0 : index
    %183 = vector.load %arg9[%c2_145, %c0_146, %c0_147] : memref<9x64x64xbf16, #tpu.memory_space<vmem>>, vector<1x64x64xbf16>
    %184 = vector.shape_cast %183 : vector<1x64x64xbf16> to vector<64x64xbf16>
    %cst_148 = arith.constant dense<0.000000e+00> : vector<32x64xf32>
    %185 = tpu.matmul %182, %184, %cst_148 {dimension_numbers = #tpu.dot_dimension_numbers<[1], [0], [0], [1], [0, 0, 1, 1], [], []>} : vector<32x64xbf16>, vector<64x64xbf16>, vector<32x64xf32> -> vector<32x64xf32>
    %186 = arith.addf %178, %185 : vector<32x64xf32>
    %c3_149 = arith.constant 3 : index
    %c0_150 = arith.constant 0 : index
    %c0_151 = arith.constant 0 : index
    %187 = vector.load %arg5[%c3_149, %c0_150, %c0_151] : memref<9x32x32xbf16, #tpu.memory_space<vmem>>, vector<1x32x32xbf16>
    %188 = vector.shape_cast %187 : vector<1x32x32xbf16> to vector<32x32xbf16>
    %cst_152 = arith.constant dense<0.000000e+00> : vector<32x64xf32>
    %189 = tpu.matmul %188, %161, %cst_152 {dimension_numbers = #tpu.dot_dimension_numbers<[1], [0], [0], [1], [0, 0, 1, 1], [], []>} : vector<32x32xbf16>, vector<32x64xbf16>, vector<32x64xf32> -> vector<32x64xf32>
    %190 = arith.truncf %189 : vector<32x64xf32> to vector<32x64xbf16>
    %c3_153 = arith.constant 3 : index
    %c0_154 = arith.constant 0 : index
    %c0_155 = arith.constant 0 : index
    %191 = vector.load %arg9[%c3_153, %c0_154, %c0_155] : memref<9x64x64xbf16, #tpu.memory_space<vmem>>, vector<1x64x64xbf16>
    %192 = vector.shape_cast %191 : vector<1x64x64xbf16> to vector<64x64xbf16>
    %cst_156 = arith.constant dense<0.000000e+00> : vector<32x64xf32>
    %193 = tpu.matmul %190, %192, %cst_156 {dimension_numbers = #tpu.dot_dimension_numbers<[1], [0], [0], [1], [0, 0, 1, 1], [], []>} : vector<32x64xbf16>, vector<64x64xbf16>, vector<32x64xf32> -> vector<32x64xf32>
    %194 = arith.addf %186, %193 : vector<32x64xf32>
    %c4_157 = arith.constant 4 : index
    %c0_158 = arith.constant 0 : index
    %c0_159 = arith.constant 0 : index
    %195 = vector.load %arg5[%c4_157, %c0_158, %c0_159] : memref<9x32x32xbf16, #tpu.memory_space<vmem>>, vector<1x32x32xbf16>
    %196 = vector.shape_cast %195 : vector<1x32x32xbf16> to vector<32x32xbf16>
    %cst_160 = arith.constant dense<0.000000e+00> : vector<32x64xf32>
    %197 = tpu.matmul %196, %161, %cst_160 {dimension_numbers = #tpu.dot_dimension_numbers<[1], [0], [0], [1], [0, 0, 1, 1], [], []>} : vector<32x32xbf16>, vector<32x64xbf16>, vector<32x64xf32> -> vector<32x64xf32>
    %198 = arith.truncf %197 : vector<32x64xf32> to vector<32x64xbf16>
    %c4_161 = arith.constant 4 : index
    %c0_162 = arith.constant 0 : index
    %c0_163 = arith.constant 0 : index
    %199 = vector.load %arg9[%c4_161, %c0_162, %c0_163] : memref<9x64x64xbf16, #tpu.memory_space<vmem>>, vector<1x64x64xbf16>
    %200 = vector.shape_cast %199 : vector<1x64x64xbf16> to vector<64x64xbf16>
    %cst_164 = arith.constant dense<0.000000e+00> : vector<32x64xf32>
    %201 = tpu.matmul %198, %200, %cst_164 {dimension_numbers = #tpu.dot_dimension_numbers<[1], [0], [0], [1], [0, 0, 1, 1], [], []>} : vector<32x64xbf16>, vector<64x64xbf16>, vector<32x64xf32> -> vector<32x64xf32>
    %202 = arith.addf %194, %201 : vector<32x64xf32>
    %c5_165 = arith.constant 5 : index
    %c0_166 = arith.constant 0 : index
    %c0_167 = arith.constant 0 : index
    %203 = vector.load %arg5[%c5_165, %c0_166, %c0_167] : memref<9x32x32xbf16, #tpu.memory_space<vmem>>, vector<1x32x32xbf16>
    %204 = vector.shape_cast %203 : vector<1x32x32xbf16> to vector<32x32xbf16>
    %cst_168 = arith.constant dense<0.000000e+00> : vector<32x64xf32>
    %205 = tpu.matmul %204, %161, %cst_168 {dimension_numbers = #tpu.dot_dimension_numbers<[1], [0], [0], [1], [0, 0, 1, 1], [], []>} : vector<32x32xbf16>, vector<32x64xbf16>, vector<32x64xf32> -> vector<32x64xf32>
    %206 = arith.truncf %205 : vector<32x64xf32> to vector<32x64xbf16>
    %c5_169 = arith.constant 5 : index
    %c0_170 = arith.constant 0 : index
    %c0_171 = arith.constant 0 : index
    %207 = vector.load %arg9[%c5_169, %c0_170, %c0_171] : memref<9x64x64xbf16, #tpu.memory_space<vmem>>, vector<1x64x64xbf16>
    %208 = vector.shape_cast %207 : vector<1x64x64xbf16> to vector<64x64xbf16>
    %cst_172 = arith.constant dense<0.000000e+00> : vector<32x64xf32>
    %209 = tpu.matmul %206, %208, %cst_172 {dimension_numbers = #tpu.dot_dimension_numbers<[1], [0], [0], [1], [0, 0, 1, 1], [], []>} : vector<32x64xbf16>, vector<64x64xbf16>, vector<32x64xf32> -> vector<32x64xf32>
    %210 = arith.addf %202, %209 : vector<32x64xf32>
    %c6_173 = arith.constant 6 : index
    %c0_174 = arith.constant 0 : index
    %c0_175 = arith.constant 0 : index
    %211 = vector.load %arg5[%c6_173, %c0_174, %c0_175] : memref<9x32x32xbf16, #tpu.memory_space<vmem>>, vector<1x32x32xbf16>
    %212 = vector.shape_cast %211 : vector<1x32x32xbf16> to vector<32x32xbf16>
    %cst_176 = arith.constant dense<0.000000e+00> : vector<32x64xf32>
    %213 = tpu.matmul %212, %161, %cst_176 {dimension_numbers = #tpu.dot_dimension_numbers<[1], [0], [0], [1], [0, 0, 1, 1], [], []>} : vector<32x32xbf16>, vector<32x64xbf16>, vector<32x64xf32> -> vector<32x64xf32>
    %214 = arith.truncf %213 : vector<32x64xf32> to vector<32x64xbf16>
    %c6_177 = arith.constant 6 : index
    %c0_178 = arith.constant 0 : index
    %c0_179 = arith.constant 0 : index
    %215 = vector.load %arg9[%c6_177, %c0_178, %c0_179] : memref<9x64x64xbf16, #tpu.memory_space<vmem>>, vector<1x64x64xbf16>
    %216 = vector.shape_cast %215 : vector<1x64x64xbf16> to vector<64x64xbf16>
    %cst_180 = arith.constant dense<0.000000e+00> : vector<32x64xf32>
    %217 = tpu.matmul %214, %216, %cst_180 {dimension_numbers = #tpu.dot_dimension_numbers<[1], [0], [0], [1], [0, 0, 1, 1], [], []>} : vector<32x64xbf16>, vector<64x64xbf16>, vector<32x64xf32> -> vector<32x64xf32>
    %218 = arith.addf %210, %217 : vector<32x64xf32>
    %c7_181 = arith.constant 7 : index
    %c0_182 = arith.constant 0 : index
    %c0_183 = arith.constant 0 : index
    %219 = vector.load %arg5[%c7_181, %c0_182, %c0_183] : memref<9x32x32xbf16, #tpu.memory_space<vmem>>, vector<1x32x32xbf16>
    %220 = vector.shape_cast %219 : vector<1x32x32xbf16> to vector<32x32xbf16>
    %cst_184 = arith.constant dense<0.000000e+00> : vector<32x64xf32>
    %221 = tpu.matmul %220, %161, %cst_184 {dimension_numbers = #tpu.dot_dimension_numbers<[1], [0], [0], [1], [0, 0, 1, 1], [], []>} : vector<32x32xbf16>, vector<32x64xbf16>, vector<32x64xf32> -> vector<32x64xf32>
    %222 = arith.truncf %221 : vector<32x64xf32> to vector<32x64xbf16>
    %c7_185 = arith.constant 7 : index
    %c0_186 = arith.constant 0 : index
    %c0_187 = arith.constant 0 : index
    %223 = vector.load %arg9[%c7_185, %c0_186, %c0_187] : memref<9x64x64xbf16, #tpu.memory_space<vmem>>, vector<1x64x64xbf16>
    %224 = vector.shape_cast %223 : vector<1x64x64xbf16> to vector<64x64xbf16>
    %cst_188 = arith.constant dense<0.000000e+00> : vector<32x64xf32>
    %225 = tpu.matmul %222, %224, %cst_188 {dimension_numbers = #tpu.dot_dimension_numbers<[1], [0], [0], [1], [0, 0, 1, 1], [], []>} : vector<32x64xbf16>, vector<64x64xbf16>, vector<32x64xf32> -> vector<32x64xf32>
    %226 = arith.addf %218, %225 : vector<32x64xf32>
    %c8_189 = arith.constant 8 : index
    %c0_190 = arith.constant 0 : index
    %c0_191 = arith.constant 0 : index
    %227 = vector.load %arg5[%c8_189, %c0_190, %c0_191] : memref<9x32x32xbf16, #tpu.memory_space<vmem>>, vector<1x32x32xbf16>
    %228 = vector.shape_cast %227 : vector<1x32x32xbf16> to vector<32x32xbf16>
    %cst_192 = arith.constant dense<0.000000e+00> : vector<32x64xf32>
    %229 = tpu.matmul %228, %161, %cst_192 {dimension_numbers = #tpu.dot_dimension_numbers<[1], [0], [0], [1], [0, 0, 1, 1], [], []>} : vector<32x32xbf16>, vector<32x64xbf16>, vector<32x64xf32> -> vector<32x64xf32>
    %230 = arith.truncf %229 : vector<32x64xf32> to vector<32x64xbf16>
    %c8_193 = arith.constant 8 : index
    %c0_194 = arith.constant 0 : index
    %c0_195 = arith.constant 0 : index
    %231 = vector.load %arg9[%c8_193, %c0_194, %c0_195] : memref<9x64x64xbf16, #tpu.memory_space<vmem>>, vector<1x64x64xbf16>
    %232 = vector.shape_cast %231 : vector<1x64x64xbf16> to vector<64x64xbf16>
    %cst_196 = arith.constant dense<0.000000e+00> : vector<32x64xf32>
    %233 = tpu.matmul %230, %232, %cst_196 {dimension_numbers = #tpu.dot_dimension_numbers<[1], [0], [0], [1], [0, 0, 1, 1], [], []>} : vector<32x64xbf16>, vector<64x64xbf16>, vector<32x64xf32> -> vector<32x64xf32>
    %234 = arith.addf %226, %233 : vector<32x64xf32>
    %c0_197 = arith.constant 0 : index
    %c0_198 = arith.constant 0 : index
    %235 = vector.load %arg10[%c0_197, %c0_198] : memref<1x64xf32, #tpu.memory_space<vmem>>, vector<1x64xf32>
    %c0_199 = arith.constant 0 : index
    %c0_200 = arith.constant 0 : index
    %236 = vector.load %arg11[%c0_199, %c0_200] : memref<1x64xf32, #tpu.memory_space<vmem>>, vector<1x64xf32>
    %cst_201 = arith.constant dense<0.000000e+00> : vector<64xf32>
    %237 = vector.multi_reduction <add>, %234, %cst_201 [0] : vector<32x64xf32> to vector<64xf32>
    %238 = vector.shape_cast %237 : vector<64xf32> to vector<1x64xf32>
    %cst_202 = arith.constant 3.200000e+01 : f32
    %239 = vector.broadcast %cst_202 : f32 to vector<1x64xf32>
    %240 = arith.divf %238, %239 : vector<1x64xf32>
    %241 = vector.broadcast %240 : vector<1x64xf32> to vector<32x64xf32>
    %242 = arith.subf %234, %241 : vector<32x64xf32>
    %243 = arith.mulf %242, %242 : vector<32x64xf32>
    %cst_203 = arith.constant dense<0.000000e+00> : vector<64xf32>
    %244 = vector.multi_reduction <add>, %243, %cst_203 [0] : vector<32x64xf32> to vector<64xf32>
    %245 = vector.shape_cast %244 : vector<64xf32> to vector<1x64xf32>
    %cst_204 = arith.constant 3.200000e+01 : f32
    %246 = vector.broadcast %cst_204 : f32 to vector<1x64xf32>
    %247 = arith.divf %245, %246 : vector<1x64xf32>
    %cst_205 = arith.constant 9.99999974E-6 : f32
    %248 = vector.broadcast %cst_205 : f32 to vector<1x64xf32>
    %249 = arith.addf %247, %248 : vector<1x64xf32>
    %250 = math.rsqrt %249 : vector<1x64xf32>
    %251 = vector.broadcast %250 : vector<1x64xf32> to vector<32x64xf32>
    %252 = arith.mulf %242, %251 : vector<32x64xf32>
    %253 = vector.broadcast %235 : vector<1x64xf32> to vector<32x64xf32>
    %254 = arith.mulf %252, %253 : vector<32x64xf32>
    %255 = vector.broadcast %236 : vector<1x64xf32> to vector<32x64xf32>
    %256 = arith.addf %254, %255 : vector<32x64xf32>
    %257 = arith.addf %256, %62 : vector<32x64xf32>
    %cst_206 = arith.constant 0.000000e+00 : f32
    %258 = vector.broadcast %cst_206 : f32 to vector<32x64xf32>
    %259 = arith.maximumf %257, %258 : vector<32x64xf32>
    %c0_207 = arith.constant 0 : index
    %c0_208 = arith.constant 0 : index
    %260 = vector.load %arg12[%c0_207, %c0_208] : memref<2x32xbf16, #tpu.memory_space<vmem>>, vector<2x32xbf16>
    %261 = arith.truncf %259 : vector<32x64xf32> to vector<32x64xbf16>
    %cst_209 = arith.constant dense<0.000000e+00> : vector<2x64xf32>
    %262 = tpu.matmul %260, %261, %cst_209 {dimension_numbers = #tpu.dot_dimension_numbers<[1], [0], [0], [1], [0, 0, 1, 1], [], []>} : vector<2x32xbf16>, vector<32x64xbf16>, vector<2x64xf32> -> vector<2x64xf32>
    %263 = arith.truncf %262 : vector<2x64xf32> to vector<2x64xbf16>
    %c0_210 = arith.constant 0 : index
    %c0_211 = arith.constant 0 : index
    %264 = vector.load %arg13[%c0_210, %c0_211] : memref<64x2xbf16, #tpu.memory_space<vmem>>, vector<64x2xbf16>
    %cst_212 = arith.constant dense<0.000000e+00> : vector<2x2xf32>
    %265 = tpu.matmul %263, %264, %cst_212 {dimension_numbers = #tpu.dot_dimension_numbers<[1], [0], [0], [1], [0, 0, 1, 1], [], []>} : vector<2x64xbf16>, vector<64x2xbf16>, vector<2x2xf32> -> vector<2x2xf32>
    %c0_213 = arith.constant 0 : index
    %c0_214 = arith.constant 0 : index
    %266 = vector.load %arg14[%c0_213, %c0_214] : memref<1x2xf32, #tpu.memory_space<vmem>>, vector<1x2xf32>
    %267 = vector.broadcast %266 : vector<1x2xf32> to vector<2x2xf32>
    %268 = arith.addf %265, %267 : vector<2x2xf32>
    %c0_215 = arith.constant 0 : index
    %c0_216 = arith.constant 0 : index
    %269 = vector.load %arg15[%c0_215, %c0_216] : memref<2x1xf32, #tpu.memory_space<vmem>>, vector<2x1xf32>
    %cst_217 = arith.constant 1.000000e-01 : f32
    %270 = vector.broadcast %cst_217 : f32 to vector<2x1xf32>
    %271 = arith.maximumf %269, %270 : vector<2x1xf32>
    %272 = vector.broadcast %271 : vector<2x1xf32> to vector<2x2xf32>
    %273 = arith.divf %268, %272 : vector<2x2xf32>
    %c0_218 = arith.constant 0 : index
    %c0_219 = arith.constant 0 : index
    %274 = vector.load %arg16[%c0_218, %c0_219] : memref<2x2xf32, #tpu.memory_space<vmem>>, vector<2x2xf32>
    tpu.vector_store %arg16[%c0_218, %c0_219], %273 {strides = array<i32>} : memref<2x2xf32, #tpu.memory_space<vmem>>, vector<2x2xf32>,
    return
  }
}

</mosaic_0001>

<llo_original>
// kernel: tpu_custom_call.1
$region0: #{tpu_custom_call.1}
  #allocation0 [shape = 'u32[]', space=smem, size = 0x4, offset = 0x4, fixed_abs, tag = 'smem constant byte address 0x4 - core index']
  #allocation1 [shape = 'u32[72,128]{1,0:T(1,128)}', space=vmem, size = 0x9000, scoped, tag = 'internal scratch']
  %s0 = inlined_call_operand.vmem [shape: bf16[128,98], index: 0, kind: input, shape index: {}]
  %s1 = inlined_call_operand.vmem [shape: bf16[98,64], index: 1, kind: input, shape index: {}]
  %s2 = inlined_call_operand.vmem [shape: f32[1,64], index: 2, kind: input, shape index: {}]
  %s3 = inlined_call_operand.vmem [shape: f32[1,64], index: 3, kind: input, shape index: {}]
  %s4 = inlined_call_operand.vmem [shape: bf16[9,32,128], index: 4, kind: input, shape index: {}]
  %s5 = inlined_call_operand.hbm [shape: bf16[9,32,32], index: 5, kind: input, shape index: {}]
  %s6 = inlined_call_operand.hbm [shape: bf16[9,64,64], index: 6, kind: input, shape index: {}]
  %s7 = inlined_call_operand.vmem [shape: f32[1,64], index: 7, kind: input, shape index: {}]
  %s8 = inlined_call_operand.vmem [shape: f32[1,64], index: 8, kind: input, shape index: {}]
  %s9 = inlined_call_operand.hbm [shape: bf16[9,64,64], index: 9, kind: input, shape index: {}]
  %s10 = inlined_call_operand.vmem [shape: f32[1,64], index: 10, kind: input, shape index: {}]
  %s11 = inlined_call_operand.vmem [shape: f32[1,64], index: 11, kind: input, shape index: {}]
  %s12 = inlined_call_operand.vmem [shape: bf16[2,32], index: 12, kind: input, shape index: {}]
  %s13 = inlined_call_operand.vmem [shape: bf16[64,2], index: 13, kind: input, shape index: {}]
  %s14 = inlined_call_operand.vmem [shape: f32[1,2], index: 14, kind: input, shape index: {}]
  %s15 = inlined_call_operand.vmem [shape: f32[2,1], index: 15, kind: input, shape index: {}]
  %s16 = inlined_call_operand.hbm [shape: f32[2,2], index: 16, kind: output, shape index: {}]
  %s17 = sld [smem:[#allocation0]]
  $region86: #{tpu_custom_call.1} parent=0
    _
  %s19 = ssub.s32 1, %s17
  %s20 = scalar_select 0, %s19, %s17
  $region1: #{tpu_custom_call.1} parent=0
    #allocation2 [shape = 'u8[73728]{0}', space=vmem, size = 0x12000, scoped, tag = 'input window, operand 5, single buffered']
    #allocation3 [shape = 's32[1]{0}', space=sflag, size = 0x4, scoped, tag = 'scoped memory for tpu_custom_call.1']
    #allocation4 [shape = 's32[1]{0}', space=sflag, size = 0x4, scoped, tag = 'scoped memory for tpu_custom_call.1']
    #allocation5 [shape = 'u8[147456]{0}', space=vmem, size = 0x24000, scoped, tag = 'input window, operand 6, single buffered']
    #allocation6 [shape = 's32[1]{0}', space=sflag, size = 0x4, scoped, tag = 'scoped memory for tpu_custom_call.1']
    #allocation7 [shape = 'u8[147456]{0}', space=vmem, size = 0x24000, scoped, tag = 'input window, operand 9, single buffered']
    #allocation8 [shape = 'u8[1024]{0}', space=vmem, size = 0x400, scoped, tag = 'output window, operand 0, single buffered']
    %21 = vsyncpa [#allocation3], 0
    %22 = vsyncpa [#allocation6], 0
    %23 = vsyncpa [#allocation4], 0
    // Predicated region
    $region2: #{tpu_custom_call.1} parent=1 // pred_check
      _
    $region3: #{tpu_custom_call.1} parent=1 // pred_check_branch
      %25 = sbr.rel (0) target = $region5
    $region4: #{tpu_custom_call.1} parent=1 // pred_region
      _
    $region5: #{tpu_custom_call.1} parent=1 // pred_fallthru
      _
    // Predicated region
    $region6: #{tpu_custom_call.1} parent=1 // pred_check
      _
    $region7: #{tpu_custom_call.1} parent=1 // pred_check_branch
      %27 = sbr.rel (0) target = $region9
    $region8: #{tpu_custom_call.1} parent=1 // pred_region
      _
    $region9: #{tpu_custom_call.1} parent=1 // pred_fallthru
      _
    // Predicated region
    $region10: #{tpu_custom_call.1} parent=1 // pred_check
      _
    $region11: #{tpu_custom_call.1} parent=1 // pred_check_branch
      %29 = sbr.rel (0) target = $region13
    $region12: #{tpu_custom_call.1} parent=1 // pred_region
      _
    $region13: #{tpu_custom_call.1} parent=1 // pred_fallthru
      _
    // Predicated region
    $region14: #{tpu_custom_call.1} parent=1 // pred_check
      _
    $region15: #{tpu_custom_call.1} parent=1 // pred_check_branch
      %31 = sbr.rel (0) target = $region17
    $region16: #{tpu_custom_call.1} parent=1 // pred_region
      _
    $region17: #{tpu_custom_call.1} parent=1 // pred_fallthru
      _
    // Predicated region
    $region18: #{tpu_custom_call.1} parent=1 // pred_check
      _
    $region19: #{tpu_custom_call.1} parent=1 // pred_check_branch
      %33 = sbr.rel (0) target = $region21
    $region20: #{tpu_custom_call.1} parent=1 // pred_region
      _
    $region21: #{tpu_custom_call.1} parent=1 // pred_fallthru
      _
    // Predicated region
    $region22: #{tpu_custom_call.1} parent=1 // pred_check
      _
    $region23: #{tpu_custom_call.1} parent=1 // pred_check_branch
      %35 = sbr.rel (0) target = $region25
    $region24: #{tpu_custom_call.1} parent=1 // pred_region
      %37 = vsyncadd [#allocation3], 0
      %s38 = sshll.u32 %s5, 4
      %s39 = int_to_ptr.hbm [resolvable:$true] %s38
      %s40 = sshll.u32 [#allocation2], 4
      %s41 = int_to_ptr.vmem [resolvable:$true] %s40
      %46 = dma.hbm_to_vmem [thread:$0]  %s39, 2304, %s41, [#allocation3], 64, 64, 4
    $region25: #{tpu_custom_call.1} parent=1 // pred_fallthru
      _
    // Predicated region
    $region26: #{tpu_custom_call.1} parent=1 // pred_check
      _
    $region27: #{tpu_custom_call.1} parent=1 // pred_check_branch
      %48 = sbr.rel (0) target = $region29
    $region28: #{tpu_custom_call.1} parent=1 // pred_region
      %50 = vsyncadd [#allocation6], 0
      %s51 = sshll.u32 %s6, 4
      %s52 = int_to_ptr.hbm [resolvable:$true] %s51
      %s53 = sshll.u32 [#allocation5], 4
      %s54 = int_to_ptr.vmem [resolvable:$true] %s53
      %59 = dma.hbm_to_vmem [thread:$0]  %s52, 4608, %s54, [#allocation6], 64, 64, 4
    $region29: #{tpu_custom_call.1} parent=1 // pred_fallthru
      _
    // Predicated region
    $region30: #{tpu_custom_call.1} parent=1 // pred_check
      _
    $region31: #{tpu_custom_call.1} parent=1 // pred_check_branch
      %61 = sbr.rel (0) target = $region33
    $region32: #{tpu_custom_call.1} parent=1 // pred_region
      _
    $region33: #{tpu_custom_call.1} parent=1 // pred_fallthru
      _
    // Predicated region
    $region34: #{tpu_custom_call.1} parent=1 // pred_check
      _
    $region35: #{tpu_custom_call.1} parent=1 // pred_check_branch
      %63 = sbr.rel (0) target = $region37
    $region36: #{tpu_custom_call.1} parent=1 // pred_region
      _
    $region37: #{tpu_custom_call.1} parent=1 // pred_fallthru
      _
    // Predicated region
    $region38: #{tpu_custom_call.1} parent=1 // pred_check
      _
    $region39: #{tpu_custom_call.1} parent=1 // pred_check_branch
      %65 = sbr.rel (0) target = $region41
    $region40: #{tpu_custom_call.1} parent=1 // pred_region
      %67 = vsyncadd [#allocation6], 0
      %s68 = sshll.u32 %s9, 4
      %s69 = int_to_ptr.hbm [resolvable:$true] %s68
      %s70 = sshll.u32 [#allocation7], 4
      %s71 = int_to_ptr.vmem [resolvable:$true] %s70
      %76 = dma.hbm_to_vmem [thread:$0]  %s69, 4608, %s71, [#allocation6], 64, 64, 4
    $region41: #{tpu_custom_call.1} parent=1 // pred_fallthru
      _
    // Predicated region
    $region42: #{tpu_custom_call.1} parent=1 // pred_check
      _
    $region43: #{tpu_custom_call.1} parent=1 // pred_check_branch
      %78 = sbr.rel (0) target = $region45
    $region44: #{tpu_custom_call.1} parent=1 // pred_region
      _
    $region45: #{tpu_custom_call.1} parent=1 // pred_fallthru
      _
    // Predicated region
    $region46: #{tpu_custom_call.1} parent=1 // pred_check
      _
    $region47: #{tpu_custom_call.1} parent=1 // pred_check_branch
      %80 = sbr.rel (0) target = $region49
    $region48: #{tpu_custom_call.1} parent=1 // pred_region
      _
    $region49: #{tpu_custom_call.1} parent=1 // pred_fallthru
      _
    // Predicated region
    $region50: #{tpu_custom_call.1} parent=1 // pred_check
      _
    $region51: #{tpu_custom_call.1} parent=1 // pred_check_branch
      %82 = sbr.rel (0) target = $region53
    $region52: #{tpu_custom_call.1} parent=1 // pred_region
      _
    $region53: #{tpu_custom_call.1} parent=1 // pred_fallthru
      _
    // Predicated region
    $region54: #{tpu_custom_call.1} parent=1 // pred_check
      _
    $region55: #{tpu_custom_call.1} parent=1 // pred_check_branch
      %84 = sbr.rel (0) target = $region57
    $region56: #{tpu_custom_call.1} parent=1 // pred_region
      _
    $region57: #{tpu_custom_call.1} parent=1 // pred_fallthru
      _
    // Predicated region
    $region58: #{tpu_custom_call.1} parent=1 // pred_check
      _
    $region59: #{tpu_custom_call.1} parent=1 // pred_check_branch
      %86 = sbr.rel (0) target = $region61
    $region60: #{tpu_custom_call.1} parent=1 // pred_region
      _
    $region61: #{tpu_custom_call.1} parent=1 // pred_fallthru
      _
    // Predicated region
    $region62: #{tpu_custom_call.1} parent=1 // pred_check
      _
    $region63: #{tpu_custom_call.1} parent=1 // pred_check_branch
      %88 = sbr.rel (0) target = $region65
    $region64: #{tpu_custom_call.1} parent=1 // pred_region
      _
    $region65: #{tpu_custom_call.1} parent=1 // pred_fallthru
      _
    // Predicated region
    $region66: #{tpu_custom_call.1} parent=1 // pred_check
      _
    $region67: #{tpu_custom_call.1} parent=1 // pred_check_branch
      %90 = sbr.rel (0) target = $region69
    $region68: #{tpu_custom_call.1} parent=1 // pred_region
      %92 = dma.done [#allocation3], 2304
    $region69: #{tpu_custom_call.1} parent=1 // pred_fallthru
      _
    // Predicated region
    $region70: #{tpu_custom_call.1} parent=1 // pred_check
      _
    $region71: #{tpu_custom_call.1} parent=1 // pred_check_branch
      %94 = sbr.rel (0) target = $region73
    $region72: #{tpu_custom_call.1} parent=1 // pred_region
      %96 = dma.done [#allocation6], 4608
    $region73: #{tpu_custom_call.1} parent=1 // pred_fallthru
      _
    // Predicated region
    $region74: #{tpu_custom_call.1} parent=1 // pred_check
      _
    $region75: #{tpu_custom_call.1} parent=1 // pred_check_branch
      %98 = sbr.rel (0) target = $region77
    $region76: #{tpu_custom_call.1} parent=1 // pred_region
      %100 = dma.done [#allocation6], 4608
    $region77: #{tpu_custom_call.1} parent=1 // pred_fallthru
      _
    %v102 = vld [vmem:[%s0] sm:$0xf]
    %v103 = vld [vmem:[%s0 + $0x4] sm:$0xf]
    %v104 = vld [vmem:[%s0 + $0x8] sm:$0xf]
    %v105 = vld [vmem:[%s0 + $0xc] sm:$0xf]
    %v106 = vld [vmem:[%s0 + $0x10] sm:$0xf]
    %v107 = vld [vmem:[%s0 + $0x14] sm:$0xf]
    %v108 = vld [vmem:[%s0 + $0x18] sm:$0xf]
    %v109 = vld [vmem:[%s0 + $0x1c] sm:$0xf]
    %v110 = vld [vmem:[%s0 + $0x20] sm:$0xf]
    %v111 = vld [vmem:[%s0 + $0x24] sm:$0xf]
    %v112 = vld [vmem:[%s0 + $0x28] sm:$0xf]
    %v113 = vld [vmem:[%s0 + $0x2c] sm:$0xf]
    %v114 = vld [vmem:[%s0 + $0x30] sm:$0xf]
    %v115 = vld [vmem:[%s0 + $0x34] sm:$0xf]
    %v116 = vld [vmem:[%s0 + $0x38] sm:$0xf]
    %v117 = vld [vmem:[%s0 + $0x3c] sm:$0xf]
    %v118 = vld [vmem:[%s1] sm:$0xf]
    %v119 = vld [vmem:[%s1 + $0x4] sm:$0xf]
    %v120 = vld [vmem:[%s1 + $0x8] sm:$0xf]
    %v121 = vld [vmem:[%s1 + $0xc] sm:$0xf]
    %v122 = vld [vmem:[%s1 + $0x10] sm:$0xf]
    %v123 = vld [vmem:[%s1 + $0x14] sm:$0xf]
    %v124 = vld [vmem:[%s1 + $0x18] sm:$0xf]
    %v125 = vld [vmem:[%s1 + $0x1c] sm:$0xf]
    %v126 = vld [vmem:[%s1 + $0x20] sm:$0xf]
    %v127 = vld [vmem:[%s1 + $0x24] sm:$0xf]
    %v128 = vld [vmem:[%s1 + $0x28] sm:$0xf]
    %v129 = vld [vmem:[%s1 + $0x2c] sm:$0xf]
    %v130 = vld [vmem:[%s1 + $0x30] sm:$0x1]
    %v147 = vunpack.c.l.b16 %v102
    %v148 = vunpack.c.l.b16 %v103
    %v149 = vunpack.c.l.b16 %v104
    %v150 = vunpack.c.l.b16 %v105
    %v151 = vunpack.c.l.b16 %v106
    %v152 = vunpack.c.l.b16 %v107
    %v153 = vunpack.c.l.b16 %v108
    %v154 = vunpack.c.l.b16 %v109
    %v155 = vunpack.c.l.b16 %v110
    %v156 = vunpack.c.l.b16 %v111
    %v157 = vunpack.c.l.b16 %v112
    %v158 = vunpack.c.l.b16 %v113
    %v159 = vunpack.c.l.b16 %v114
    %v160 = vunpack.c.l.b16 %v115
    %v161 = vunpack.c.l.b16 %v116
    %v162 = vunpack.c.l.b16 %v117
    %v163 = vpack.c.b16 %v148, %v147
    %v164 = vpack.c.b16 %v150, %v149
    %v165 = vpack.c.b16 %v152, %v151
    %v166 = vpack.c.b16 %v154, %v153
    %v167 = vpack.c.b16 %v156, %v155
    %v168 = vpack.c.b16 %v158, %v157
    %v169 = vpack.c.b16 %v160, %v159
    %v170 = vpack.c.b16 %v162, %v161
    %v184 = vunpack.c.l.b16 %v118
    %v185 = vunpack.c.l.b16 %v119
    %v186 = vunpack.c.l.b16 %v120
    %v187 = vunpack.c.l.b16 %v121
    %v188 = vunpack.c.l.b16 %v122
    %v189 = vunpack.c.l.b16 %v123
    %v190 = vunpack.c.l.b16 %v124
    %v191 = vunpack.c.l.b16 %v125
    %v192 = vunpack.c.l.b16 %v126
    %v193 = vunpack.c.l.b16 %v127
    %v194 = vunpack.c.l.b16 %v128
    %v195 = vunpack.c.l.b16 %v129
    %v196 = vunpack.c.l.b16 %v130
    %v197 = vpack.c.b16 %v185, %v184
    %v198 = vpack.c.b16 %v187, %v186
    %v199 = vpack.c.b16 %v189, %v188
    %v200 = vpack.c.b16 %v191, %v190
    %v201 = vpack.c.b16 %v193, %v192
    %v202 = vpack.c.b16 %v195, %v194
    %v203 = vpack.c.b16 %v196, %v196
    %vm210 = vcmask 801792
    %v212 = vsel %vm210, %v163, 0
    %v215 = vsel %vm210, %v164, 0
    %v218 = vsel %vm210, %v165, 0
    %v221 = vsel %vm210, %v166, 0
    %v224 = vsel %vm210, %v167, 0
    %v227 = vsel %vm210, %v168, 0
    %v230 = vsel %vm210, %v169, 0
    %v233 = vsel %vm210, %v170, 0
    %vm235 = vcmask 1040384
    %v237 = vsel %vm235, %v203, 0
    %239 = vmatpush.bf16.msra.mxu0 0
    %240 = vmatpush.bf16.msra.mxu0 %v237
    %241 = vmatpush.bf16.msra.mxu0 %v202
    %242 = vmatpush.bf16.msra.mxu0 %v201
    %243 = vmatpush.bf16.msra.mxu0 %v200
    %244 = vmatpush.bf16.msra.mxu0 %v199
    %245 = vmatpush.bf16.msra.mxu0 %v198
    %246 = vmatpush.bf16.msra.mxu0 %v197
    %247 = vmatmul.bf16.gmra.mxu0 %v212
    %v248 = vpop.f32.mrf.mxu0
    %v249 = vadd.f32 0.0, %v248
    %v250 = vpop.f32.mrf.mxu0
    %v251 = vadd.f32 0.0, %v250
    %252 = vmatmul.bf16.gmra.mxu0 %v215
    %v253 = vpop.f32.mrf.mxu0
    %v254 = vadd.f32 0.0, %v253
    %v255 = vpop.f32.mrf.mxu0
    %v256 = vadd.f32 0.0, %v255
    %257 = vmatmul.bf16.gmra.mxu0 %v218
    %v258 = vpop.f32.mrf.mxu0
    %v259 = vadd.f32 0.0, %v258
    %v260 = vpop.f32.mrf.mxu0
    %v261 = vadd.f32 0.0, %v260
    %262 = vmatmul.bf16.gmra.mxu0 %v221
    %v263 = vpop.f32.mrf.mxu0
    %v264 = vadd.f32 0.0, %v263
    %v265 = vpop.f32.mrf.mxu0
    %v266 = vadd.f32 0.0, %v265
    %267 = vmatmul.bf16.gmra.mxu0 %v224
    %v268 = vpop.f32.mrf.mxu0
    %v269 = vadd.f32 0.0, %v268
    %v270 = vpop.f32.mrf.mxu0
    %v271 = vadd.f32 0.0, %v270
    %272 = vmatmul.bf16.gmra.mxu0 %v227
    %v273 = vpop.f32.mrf.mxu0
    %v274 = vadd.f32 0.0, %v273
    %v275 = vpop.f32.mrf.mxu0
    %v276 = vadd.f32 0.0, %v275
    %277 = vmatmul.bf16.gmra.mxu0 %v230
    %v278 = vpop.f32.mrf.mxu0
    %v279 = vadd.f32 0.0, %v278
    %v280 = vpop.f32.mrf.mxu0
    %v281 = vadd.f32 0.0, %v280
    %282 = vmatmul.bf16.gmra.mxu0 %v233
    %v283 = vpop.f32.mrf.mxu0
    %v284 = vadd.f32 0.0, %v283
    %v285 = vpop.f32.mrf.mxu0
    %v286 = vadd.f32 0.0, %v285
    %287 = vdwg.mxu0
    %v288 = vld [vmem:[%s2] sm:$0x1]
    %v289 = vld [vmem:[%s3] sm:$0x1]
    %vm290 = vcmask 523264
    %v291 = vsel %vm290, %v249, 0.0
    %v292 = vsel %vm290, %v251, 0.0
    %v293 = vadd.f32 %v291, %v292
    %v294 = vsel %vm290, %v254, 0.0
    %v295 = vadd.f32 %v293, %v294
    %v296 = vsel %vm290, %v256, 0.0
    %v297 = vadd.f32 %v295, %v296
    %v298 = vsel %vm290, %v259, 0.0
    %v299 = vadd.f32 %v297, %v298
    %v300 = vsel %vm290, %v261, 0.0
    %v301 = vadd.f32 %v299, %v300
    %v302 = vsel %vm290, %v264, 0.0
    %v303 = vadd.f32 %v301, %v302
    %v304 = vsel %vm290, %v266, 0.0
    %v305 = vadd.f32 %v303, %v304
    %v306 = vsel %vm290, %v269, 0.0
    %v307 = vadd.f32 %v305, %v306
    %v308 = vsel %vm290, %v271, 0.0
    %v309 = vadd.f32 %v307, %v308
    %v310 = vsel %vm290, %v274, 0.0
    %v311 = vadd.f32 %v309, %v310
    %v312 = vsel %vm290, %v276, 0.0
    %v313 = vadd.f32 %v311, %v312
    %v314 = vsel %vm290, %v279, 0.0
    %v315 = vadd.f32 %v313, %v314
    %v316 = vsel %vm290, %v281, 0.0
    %v317 = vadd.f32 %v315, %v316
    %v318 = vsel %vm290, %v284, 0.0
    %v319 = vadd.f32 %v317, %v318
    %v320 = vsel %vm290, %v286, 0.0
    %v321 = vadd.f32 %v319, %v320
    %v322 = vrot.slane %v321, 4
    %v323 = vadd.f32 %v321, %v322
    %v324 = vrot.slane %v323, 2
    %v325 = vadd.f32 %v323, %v324
    %v326 = vrot.slane %v325, 1
    %v327 = vadd.f32 %v325, %v326
    %v328 = vrcp.pop 128.0
    %v329 = vmul.f32 128.0, %v328
    %v330 = vsub.f32 1.0, %v329
    %v331 = vmul.f32 %v328, %v330
    %v332 = vadd.f32 %v328, %v331
    %vm333 = vweird.f32 %v328
    %v334 = vsel %vm333, %v328, %v332
    %v335 = vmul.f32 %v327, %v334
    %v336 = vsub.f32 %v249, %v335
    %v337 = vsub.f32 %v251, %v335
    %v338 = vsub.f32 %v254, %v335
    %v339 = vsub.f32 %v256, %v335
    %v340 = vsub.f32 %v259, %v335
    %v341 = vsub.f32 %v261, %v335
    %v342 = vsub.f32 %v264, %v335
    %v343 = vsub.f32 %v266, %v335
    %v344 = vsub.f32 %v269, %v335
    %v345 = vsub.f32 %v271, %v335
    %v346 = vsub.f32 %v274, %v335
    %v347 = vsub.f32 %v276, %v335
    %v348 = vsub.f32 %v279, %v335
    %v349 = vsub.f32 %v281, %v335
    %v350 = vsub.f32 %v284, %v335
    %v351 = vsub.f32 %v286, %v335
    %v352 = vmul.f32 %v336, %v336
    %v353 = vmul.f32 %v337, %v337
    %v354 = vmul.f32 %v338, %v338
    %v355 = vmul.f32 %v339, %v339
    %v356 = vmul.f32 %v340, %v340
    %v357 = vmul.f32 %v341, %v341
    %v358 = vmul.f32 %v342, %v342
    %v359 = vmul.f32 %v343, %v343
    %v360 = vmul.f32 %v344, %v344
    %v361 = vmul.f32 %v345, %v345
    %v362 = vmul.f32 %v346, %v346
    %v363 = vmul.f32 %v347, %v347
    %v364 = vmul.f32 %v348, %v348
    %v365 = vmul.f32 %v349, %v349
    %v366 = vmul.f32 %v350, %v350
    %v367 = vmul.f32 %v351, %v351
    %v368 = vsel %vm290, %v352, 0.0
    %v369 = vsel %vm290, %v353, 0.0
    %v370 = vadd.f32 %v368, %v369
    %v371 = vsel %vm290, %v354, 0.0
    %v372 = vadd.f32 %v370, %v371
    %v373 = vsel %vm290, %v355, 0.0
    %v374 = vadd.f32 %v372, %v373
    %v375 = vsel %vm290, %v356, 0.0
    %v376 = vadd.f32 %v374, %v375
    %v377 = vsel %vm290, %v357, 0.0
    %v378 = vadd.f32 %v376, %v377
    %v379 = vsel %vm290, %v358, 0.0
    %v380 = vadd.f32 %v378, %v379
    %v381 = vsel %vm290, %v359, 0.0
    %v382 = vadd.f32 %v380, %v381
    %v383 = vsel %vm290, %v360, 0.0
    %v384 = vadd.f32 %v382, %v383
    %v385 = vsel %vm290, %v361, 0.0
    %v386 = vadd.f32 %v384, %v385
    %v387 = vsel %vm290, %v362, 0.0
    %v388 = vadd.f32 %v386, %v387
    %v389 = vsel %vm290, %v363, 0.0
    %v390 = vadd.f32 %v388, %v389
    %v391 = vsel %vm290, %v364, 0.0
    %v392 = vadd.f32 %v390, %v391
    %v393 = vsel %vm290, %v365, 0.0
    %v394 = vadd.f32 %v392, %v393
    %v395 = vsel %vm290, %v366, 0.0
    %v396 = vadd.f32 %v394, %v395
    %v397 = vsel %vm290, %v367, 0.0
    %v398 = vadd.f32 %v396, %v397
    %v399 = vrot.slane %v398, 4
    %v400 = vadd.f32 %v398, %v399
    %v401 = vrot.slane %v400, 2
    %v402 = vadd.f32 %v400, %v401
    %v403 = vrot.slane %v402, 1
    %v404 = vadd.f32 %v402, %v403
    %v405 = vmul.f32 %v404, %v334
    %v406 = vadd.f32 %v405, 1e-05
    %v407 = vrsqrt.pop %v406
    %v408 = vmul.f32 %v407, %v406
    %v409 = vmul.f32 %v408, %v407
    %v410 = vmul.f32 0.5, %v409
    %v411 = vsub.f32 1.5, %v410
    %v412 = vmul.f32 %v407, %v411
    %vm413 = vweird.f32 %v406
    %vm414 = vweird.f32 %v407
    %vm415 = vmor %vm413, %vm414
    %v416 = vsel %vm415, %v407, %v412
    %v417 = vmul.f32 %v336, %v416
    %v418 = vmul.f32 %v337, %v416
    %v419 = vmul.f32 %v338, %v416
    %v420 = vmul.f32 %v339, %v416
    %v421 = vmul.f32 %v340, %v416
    %v422 = vmul.f32 %v341, %v416
    %v423 = vmul.f32 %v342, %v416
    %v424 = vmul.f32 %v343, %v416
    %v425 = vmul.f32 %v344, %v416
    %v426 = vmul.f32 %v345, %v416
    %v427 = vmul.f32 %v346, %v416
    %v428 = vmul.f32 %v347, %v416
    %v429 = vmul.f32 %v348, %v416
    %v430 = vmul.f32 %v349, %v416
    %v431 = vmul.f32 %v350, %v416
    %v432 = vmul.f32 %v351, %v416
    %v434 = vperm.slane %v288, 0
    %v436 = vmul.f32 %v417, %v434
    %v437 = vmul.f32 %v418, %v434
    %v438 = vmul.f32 %v419, %v434
    %v439 = vmul.f32 %v420, %v434
    %v440 = vmul.f32 %v421, %v434
    %v441 = vmul.f32 %v422, %v434
    %v442 = vmul.f32 %v423, %v434
    %v443 = vmul.f32 %v424, %v434
    %v444 = vmul.f32 %v425, %v434
    %v445 = vmul.f32 %v426, %v434
    %v446 = vmul.f32 %v427, %v434
    %v447 = vmul.f32 %v428, %v434
    %v448 = vmul.f32 %v429, %v434
    %v449 = vmul.f32 %v430, %v434
    %v450 = vmul.f32 %v431, %v434
    %v451 = vmul.f32 %v432, %v434
    %v453 = vperm.slane %v289, 0
    %v455 = vadd.f32 %v436, %v453
    %v456 = vadd.f32 %v437, %v453
    %v457 = vadd.f32 %v438, %v453
    %v458 = vadd.f32 %v439, %v453
    %v459 = vadd.f32 %v440, %v453
    %v460 = vadd.f32 %v441, %v453
    %v461 = vadd.f32 %v442, %v453
    %v462 = vadd.f32 %v443, %v453
    %v463 = vadd.f32 %v444, %v453
    %v464 = vadd.f32 %v445, %v453
    %v465 = vadd.f32 %v446, %v453
    %v466 = vadd.f32 %v447, %v453
    %v467 = vadd.f32 %v448, %v453
    %v468 = vadd.f32 %v449, %v453
    %v469 = vadd.f32 %v450, %v453
    %v470 = vadd.f32 %v451, %v453
    %v471 = vmax.f32 %v455, 0.0
    %v472 = vmax.f32 %v456, 0.0
    %v473 = vmax.f32 %v457, 0.0
    %v474 = vmax.f32 %v458, 0.0
    %v475 = vmax.f32 %v459, 0.0
    %v476 = vmax.f32 %v460, 0.0
    %v477 = vmax.f32 %v461, 0.0
    %v478 = vmax.f32 %v462, 0.0
    %v479 = vmax.f32 %v463, 0.0
    %v480 = vmax.f32 %v464, 0.0
    %v481 = vmax.f32 %v465, 0.0
    %v482 = vmax.f32 %v466, 0.0
    %v483 = vmax.f32 %v467, 0.0
    %v484 = vmax.f32 %v468, 0.0
    %v485 = vmax.f32 %v469, 0.0
    %v486 = vmax.f32 %v470, 0.0
    %v487 = vpack.c.bf16 %v472, %v471
    %v488 = vpack.c.bf16 %v474, %v473
    %v489 = vpack.c.bf16 %v476, %v475
    %v490 = vpack.c.bf16 %v478, %v477
    %v491 = vpack.c.bf16 %v480, %v479
    %v492 = vpack.c.bf16 %v482, %v481
    %v493 = vpack.c.bf16 %v484, %v483
    %v494 = vpack.c.bf16 %v486, %v485
    %v495 = vld [vmem:[%s4] sm:$0xf]
    %v496 = vld [vmem:[%s4 + $0x4] sm:$0xf]
    %v497 = vld [vmem:[%s4 + $0x8] sm:$0xf]
    %v498 = vld [vmem:[%s4 + $0xc] sm:$0xf]
    %v503 = vunpack.c.l.b16 %v495
    %v504 = vunpack.c.l.b16 %v496
    %v505 = vunpack.c.l.b16 %v497
    %v506 = vunpack.c.l.b16 %v498
    %v507 = vpack.c.b16 %v504, %v503
    %v508 = vpack.c.b16 %v506, %v505
    %511 = vmatpush.bf16.msra.mxu0 %v494
    %512 = vmatpush.bf16.msra.mxu0 %v493
    %513 = vmatpush.bf16.msra.mxu0 %v492
    %514 = vmatpush.bf16.msra.mxu0 %v491
    %515 = vmatpush.bf16.msra.mxu0 %v490
    %516 = vmatpush.bf16.msra.mxu0 %v489
    %517 = vmatpush.bf16.msra.mxu0 %v488
    %518 = vmatpush.bf16.msra.mxu0 %v487
    %519 = vmatmul.bf16.gmra.mxu0 %v507
    %v520 = vpop.f32.mrf.mxu0
    %v521 = vadd.f32 0.0, %v520
    %v522 = vpop.f32.mrf.mxu0
    %v523 = vadd.f32 0.0, %v522
    %524 = vmatmul.bf16.gmra.mxu0 %v508
    %v525 = vpop.f32.mrf.mxu0
    %v526 = vadd.f32 0.0, %v525
    %v527 = vpop.f32.mrf.mxu0
    %v528 = vadd.f32 0.0, %v527
    %529 = vdwg.mxu0
    %s530 = scalar_lea.vmem %s4, 16
    %v531 = vld [vmem:[%s530] sm:$0xf]
    %v532 = vld [vmem:[%s530 + $0x4] sm:$0xf]
    %v533 = vld [vmem:[%s530 + $0x8] sm:$0xf]
    %v534 = vld [vmem:[%s530 + $0xc] sm:$0xf]
    %v539 = vunpack.c.l.b16 %v531
    %v540 = vunpack.c.l.b16 %v532
    %v541 = vunpack.c.l.b16 %v533
    %v542 = vunpack.c.l.b16 %v534
    %v543 = vpack.c.b16 %v540, %v539
    %v544 = vpack.c.b16 %v542, %v541
    %547 = vmatpush.bf16.msra.mxu0 %v494
    %548 = vmatpush.bf16.msra.mxu0 %v493
    %549 = vmatpush.bf16.msra.mxu0 %v492
    %550 = vmatpush.bf16.msra.mxu0 %v491
    %551 = vmatpush.bf16.msra.mxu0 %v490
    %552 = vmatpush.bf16.msra.mxu0 %v489
    %553 = vmatpush.bf16.msra.mxu0 %v488
    %554 = vmatpush.bf16.msra.mxu0 %v487
    %555 = vmatmul.bf16.gmra.mxu0 %v543
    %v556 = vpop.f32.mrf.mxu0
    %v557 = vadd.f32 0.0, %v556
    %v558 = vpop.f32.mrf.mxu0
    %v559 = vadd.f32 0.0, %v558
    %560 = vmatmul.bf16.gmra.mxu0 %v544
    %v561 = vpop.f32.mrf.mxu0
    %v562 = vadd.f32 0.0, %v561
    %v563 = vpop.f32.mrf.mxu0
    %v564 = vadd.f32 0.0, %v563
    %565 = vdwg.mxu0
    %v566 = vmax.f32 %v521, %v557
    %v567 = vmax.f32 %v523, %v559
    %v568 = vmax.f32 %v526, %v562
    %v569 = vmax.f32 %v528, %v564
    %s570 = scalar_lea.vmem %s4, 32
    %v571 = vld [vmem:[%s570] sm:$0xf]
    %v572 = vld [vmem:[%s570 + $0x4] sm:$0xf]
    %v573 = vld [vmem:[%s570 + $0x8] sm:$0xf]
    %v574 = vld [vmem:[%s570 + $0xc] sm:$0xf]
    %v579 = vunpack.c.l.b16 %v571
    %v580 = vunpack.c.l.b16 %v572
    %v581 = vunpack.c.l.b16 %v573
    %v582 = vunpack.c.l.b16 %v574
    %v583 = vpack.c.b16 %v580, %v579
    %v584 = vpack.c.b16 %v582, %v581
    %587 = vmatpush.bf16.msra.mxu0 %v494
    %588 = vmatpush.bf16.msra.mxu0 %v493
    %589 = vmatpush.bf16.msra.mxu0 %v492
    %590 = vmatpush.bf16.msra.mxu0 %v491
    %591 = vmatpush.bf16.msra.mxu0 %v490
    %592 = vmatpush.bf16.msra.mxu0 %v489
    %593 = vmatpush.bf16.msra.mxu0 %v488
    %594 = vmatpush.bf16.msra.mxu0 %v487
    %595 = vmatmul.bf16.gmra.mxu0 %v583
    %v596 = vpop.f32.mrf.mxu0
    %v597 = vadd.f32 0.0, %v596
    %v598 = vpop.f32.mrf.mxu0
    %v599 = vadd.f32 0.0, %v598
    %600 = vmatmul.bf16.gmra.mxu0 %v584
    %v601 = vpop.f32.mrf.mxu0
    %v602 = vadd.f32 0.0, %v601
    %v603 = vpop.f32.mrf.mxu0
    %v604 = vadd.f32 0.0, %v603
    %605 = vdwg.mxu0
    %v606 = vmax.f32 %v566, %v597
    %v607 = vmax.f32 %v567, %v599
    %v608 = vmax.f32 %v568, %v602
    %v609 = vmax.f32 %v569, %v604
    %s610 = scalar_lea.vmem %s4, 48
    %v611 = vld [vmem:[%s610] sm:$0xf]
    %v612 = vld [vmem:[%s610 + $0x4] sm:$0xf]
    %v613 = vld [vmem:[%s610 + $0x8] sm:$0xf]
    %v614 = vld [vmem:[%s610 + $0xc] sm:$0xf]
    %v619 = vunpack.c.l.b16 %v611
    %v620 = vunpack.c.l.b16 %v612
    %v621 = vunpack.c.l.b16 %v613
    %v622 = vunpack.c.l.b16 %v614
    %v623 = vpack.c.b16 %v620, %v619
    %v624 = vpack.c.b16 %v622, %v621
    %627 = vmatpush.bf16.msra.mxu0 %v494
    %628 = vmatpush.bf16.msra.mxu0 %v493
    %629 = vmatpush.bf16.msra.mxu0 %v492
    %630 = vmatpush.bf16.msra.mxu0 %v491
    %631 = vmatpush.bf16.msra.mxu0 %v490
    %632 = vmatpush.bf16.msra.mxu0 %v489
    %633 = vmatpush.bf16.msra.mxu0 %v488
    %634 = vmatpush.bf16.msra.mxu0 %v487
    %635 = vmatmul.bf16.gmra.mxu0 %v623
    %v636 = vpop.f32.mrf.mxu0
    %v637 = vadd.f32 0.0, %v636
    %v638 = vpop.f32.mrf.mxu0
    %v639 = vadd.f32 0.0, %v638
    %640 = vmatmul.bf16.gmra.mxu0 %v624
    %v641 = vpop.f32.mrf.mxu0
    %v642 = vadd.f32 0.0, %v641
    %v643 = vpop.f32.mrf.mxu0
    %v644 = vadd.f32 0.0, %v643
    %645 = vdwg.mxu0
    %v646 = vmax.f32 %v606, %v637
    %v647 = vmax.f32 %v607, %v639
    %v648 = vmax.f32 %v608, %v642
    %v649 = vmax.f32 %v609, %v644
    %s650 = scalar_lea.vmem %s4, 64
    %v651 = vld [vmem:[%s650] sm:$0xf]
    %v652 = vld [vmem:[%s650 + $0x4] sm:$0xf]
    %v653 = vld [vmem:[%s650 + $0x8] sm:$0xf]
    %v654 = vld [vmem:[%s650 + $0xc] sm:$0xf]
    %v659 = vunpack.c.l.b16 %v651
    %v660 = vunpack.c.l.b16 %v652
    %v661 = vunpack.c.l.b16 %v653
    %v662 = vunpack.c.l.b16 %v654
    %v663 = vpack.c.b16 %v660, %v659
    %v664 = vpack.c.b16 %v662, %v661
    %667 = vmatpush.bf16.msra.mxu0 %v494
    %668 = vmatpush.bf16.msra.mxu0 %v493
    %669 = vmatpush.bf16.msra.mxu0 %v492
    %670 = vmatpush.bf16.msra.mxu0 %v491
    %671 = vmatpush.bf16.msra.mxu0 %v490
    %672 = vmatpush.bf16.msra.mxu0 %v489
    %673 = vmatpush.bf16.msra.mxu0 %v488
    %674 = vmatpush.bf16.msra.mxu0 %v487
    %675 = vmatmul.bf16.gmra.mxu0 %v663
    %v676 = vpop.f32.mrf.mxu0
    %v677 = vadd.f32 0.0, %v676
    %v678 = vpop.f32.mrf.mxu0
    %v679 = vadd.f32 0.0, %v678
    %680 = vmatmul.bf16.gmra.mxu0 %v664
    %v681 = vpop.f32.mrf.mxu0
    %v682 = vadd.f32 0.0, %v681
    %v683 = vpop.f32.mrf.mxu0
    %v684 = vadd.f32 0.0, %v683
    %685 = vdwg.mxu0
    %v686 = vmax.f32 %v646, %v677
    %v687 = vmax.f32 %v647, %v679
    %v688 = vmax.f32 %v648, %v682
    %v689 = vmax.f32 %v649, %v684
    %s690 = scalar_lea.vmem %s4, 80
    %v691 = vld [vmem:[%s690] sm:$0xf]
    %v692 = vld [vmem:[%s690 + $0x4] sm:$0xf]
    %v693 = vld [vmem:[%s690 + $0x8] sm:$0xf]
    %v694 = vld [vmem:[%s690 + $0xc] sm:$0xf]
    %v699 = vunpack.c.l.b16 %v691
    %v700 = vunpack.c.l.b16 %v692
    %v701 = vunpack.c.l.b16 %v693
    %v702 = vunpack.c.l.b16 %v694
    %v703 = vpack.c.b16 %v700, %v699
    %v704 = vpack.c.b16 %v702, %v701
    %707 = vmatpush.bf16.msra.mxu0 %v494
    %708 = vmatpush.bf16.msra.mxu0 %v493
    %709 = vmatpush.bf16.msra.mxu0 %v492
    %710 = vmatpush.bf16.msra.mxu0 %v491
    %711 = vmatpush.bf16.msra.mxu0 %v490
    %712 = vmatpush.bf16.msra.mxu0 %v489
    %713 = vmatpush.bf16.msra.mxu0 %v488
    %714 = vmatpush.bf16.msra.mxu0 %v487
    %715 = vmatmul.bf16.gmra.mxu0 %v703
    %v716 = vpop.f32.mrf.mxu0
    %v717 = vadd.f32 0.0, %v716
    %v718 = vpop.f32.mrf.mxu0
    %v719 = vadd.f32 0.0, %v718
    %720 = vmatmul.bf16.gmra.mxu0 %v704
    %v721 = vpop.f32.mrf.mxu0
    %v722 = vadd.f32 0.0, %v721
    %v723 = vpop.f32.mrf.mxu0
    %v724 = vadd.f32 0.0, %v723
    %725 = vdwg.mxu0
    %v726 = vmax.f32 %v686, %v717
    %v727 = vmax.f32 %v687, %v719
    %v728 = vmax.f32 %v688, %v722
    %v729 = vmax.f32 %v689, %v724
    %s730 = scalar_lea.vmem %s4, 96
    %v731 = vld [vmem:[%s730] sm:$0xf]
    %v732 = vld [vmem:[%s730 + $0x4] sm:$0xf]
    %v733 = vld [vmem:[%s730 + $0x8] sm:$0xf]
    %v734 = vld [vmem:[%s730 + $0xc] sm:$0xf]
    %v739 = vunpack.c.l.b16 %v731
    %v740 = vunpack.c.l.b16 %v732
    %v741 = vunpack.c.l.b16 %v733
    %v742 = vunpack.c.l.b16 %v734
    %v743 = vpack.c.b16 %v740, %v739
    %v744 = vpack.c.b16 %v742, %v741
    %747 = vmatpush.bf16.msra.mxu0 %v494
    %748 = vmatpush.bf16.msra.mxu0 %v493
    %749 = vmatpush.bf16.msra.mxu0 %v492
    %750 = vmatpush.bf16.msra.mxu0 %v491
    %751 = vmatpush.bf16.msra.mxu0 %v490
    %752 = vmatpush.bf16.msra.mxu0 %v489
    %753 = vmatpush.bf16.msra.mxu0 %v488
    %754 = vmatpush.bf16.msra.mxu0 %v487
    %755 = vmatmul.bf16.gmra.mxu0 %v743
    %v756 = vpop.f32.mrf.mxu0
    %v757 = vadd.f32 0.0, %v756
    %v758 = vpop.f32.mrf.mxu0
    %v759 = vadd.f32 0.0, %v758
    %760 = vmatmul.bf16.gmra.mxu0 %v744
    %v761 = vpop.f32.mrf.mxu0
    %v762 = vadd.f32 0.0, %v761
    %v763 = vpop.f32.mrf.mxu0
    %v764 = vadd.f32 0.0, %v763
    %765 = vdwg.mxu0
    %v766 = vmax.f32 %v726, %v757
    %v767 = vmax.f32 %v727, %v759
    %v768 = vmax.f32 %v728, %v762
    %v769 = vmax.f32 %v729, %v764
    %s770 = scalar_lea.vmem %s4, 112
    %v771 = vld [vmem:[%s770] sm:$0xf]
    %v772 = vld [vmem:[%s770 + $0x4] sm:$0xf]
    %v773 = vld [vmem:[%s770 + $0x8] sm:$0xf]
    %v774 = vld [vmem:[%s770 + $0xc] sm:$0xf]
    %v779 = vunpack.c.l.b16 %v771
    %v780 = vunpack.c.l.b16 %v772
    %v781 = vunpack.c.l.b16 %v773
    %v782 = vunpack.c.l.b16 %v774
    %v783 = vpack.c.b16 %v780, %v779
    %v784 = vpack.c.b16 %v782, %v781
    %787 = vmatpush.bf16.msra.mxu0 %v494
    %788 = vmatpush.bf16.msra.mxu0 %v493
    %789 = vmatpush.bf16.msra.mxu0 %v492
    %790 = vmatpush.bf16.msra.mxu0 %v491
    %791 = vmatpush.bf16.msra.mxu0 %v490
    %792 = vmatpush.bf16.msra.mxu0 %v489
    %793 = vmatpush.bf16.msra.mxu0 %v488
    %794 = vmatpush.bf16.msra.mxu0 %v487
    %795 = vmatmul.bf16.gmra.mxu0 %v783
    %v796 = vpop.f32.mrf.mxu0
    %v797 = vadd.f32 0.0, %v796
    %v798 = vpop.f32.mrf.mxu0
    %v799 = vadd.f32 0.0, %v798
    %800 = vmatmul.bf16.gmra.mxu0 %v784
    %v801 = vpop.f32.mrf.mxu0
    %v802 = vadd.f32 0.0, %v801
    %v803 = vpop.f32.mrf.mxu0
    %v804 = vadd.f32 0.0, %v803
    %805 = vdwg.mxu0
    %v806 = vmax.f32 %v766, %v797
    %v807 = vmax.f32 %v767, %v799
    %v808 = vmax.f32 %v768, %v802
    %v809 = vmax.f32 %v769, %v804
    %s810 = scalar_lea.vmem %s4, 128
    %v811 = vld [vmem:[%s810] sm:$0xf]
    %v812 = vld [vmem:[%s810 + $0x4] sm:$0xf]
    %v813 = vld [vmem:[%s810 + $0x8] sm:$0xf]
    %v814 = vld [vmem:[%s810 + $0xc] sm:$0xf]
    %v819 = vunpack.c.l.b16 %v811
    %v820 = vunpack.c.l.b16 %v812
    %v821 = vunpack.c.l.b16 %v813
    %v822 = vunpack.c.l.b16 %v814
    %v823 = vpack.c.b16 %v820, %v819
    %v824 = vpack.c.b16 %v822, %v821
    %827 = vmatpush.bf16.msra.mxu0 %v494
    %828 = vmatpush.bf16.msra.mxu0 %v493
    %829 = vmatpush.bf16.msra.mxu0 %v492
    %830 = vmatpush.bf16.msra.mxu0 %v491
    %831 = vmatpush.bf16.msra.mxu0 %v490
    %832 = vmatpush.bf16.msra.mxu0 %v489
    %833 = vmatpush.bf16.msra.mxu0 %v488
    %834 = vmatpush.bf16.msra.mxu0 %v487
    %835 = vmatmul.bf16.gmra.mxu0 %v823
    %v836 = vpop.f32.mrf.mxu0
    %v837 = vadd.f32 0.0, %v836
    %v838 = vpop.f32.mrf.mxu0
    %v839 = vadd.f32 0.0, %v838
    %840 = vmatmul.bf16.gmra.mxu0 %v824
    %v841 = vpop.f32.mrf.mxu0
    %v842 = vadd.f32 0.0, %v841
    %v843 = vpop.f32.mrf.mxu0
    %v844 = vadd.f32 0.0, %v843
    %845 = vdwg.mxu0
    %v846 = vmax.f32 %v806, %v837
    %v847 = vmax.f32 %v807, %v839
    %v848 = vmax.f32 %v808, %v842
    %v849 = vmax.f32 %v809, %v844
    %v850 = vpack.c.bf16 %v847, %v846
    %v851 = vpack.c.bf16 %v849, %v848
    %v852 = vld [vmem:[#allocation2] sm:$0xf]
    %v853 = vld [vmem:[#allocation2 + $0x4] sm:$0xf]
    %v854 = vld [vmem:[#allocation2 + $0x8] sm:$0xf]
    %v855 = vld [vmem:[#allocation2 + $0xc] sm:$0xf]
    %v860 = vunpack.c.l.b16 %v852
    %v861 = vunpack.c.l.b16 %v853
    %v862 = vunpack.c.l.b16 %v854
    %v863 = vunpack.c.l.b16 %v855
    %v864 = vpack.c.b16 %v861, %v860
    %v865 = vpack.c.b16 %v863, %v862
    %vm866 = vcmask 261120
    %v868 = vsel %vm866, %v864, 0
    %v871 = vsel %vm866, %v865, 0
    %873 = vmatpush.bf16.msra.mxu0 0
    %874 = vmatpush.bf16.msra.mxu0 0
    %875 = vmatpush.bf16.msra.mxu0 0
    %876 = vmatpush.bf16.msra.mxu0 0
    %877 = vmatpush.bf16.msra.mxu0 0
    %878 = vmatpush.bf16.msra.mxu0 0
    %879 = vmatpush.bf16.msra.mxu0 %v851
    %880 = vmatpush.bf16.msra.mxu0 %v850
    %881 = vmatmul.bf16.gmra.mxu0 %v868
    %v882 = vpop.f32.mrf.mxu0
    %v883 = vadd.f32 0.0, %v882
    %v884 = vpop.f32.mrf.mxu0
    %v885 = vadd.f32 0.0, %v884
    %886 = vmatmul.bf16.gmra.mxu0 %v871
    %v887 = vpop.f32.mrf.mxu0
    %v888 = vadd.f32 0.0, %v887
    %v889 = vpop.f32.mrf.mxu0
    %v890 = vadd.f32 0.0, %v889
    %891 = vdwg.mxu0
    %v892 = vpack.c.bf16 %v885, %v883
    %v893 = vpack.c.bf16 %v890, %v888
    %v894 = vld [vmem:[#allocation5] sm:$0xf]
    %v895 = vld [vmem:[#allocation5 + $0x4] sm:$0xf]
    %v896 = vld [vmem:[#allocation5 + $0x8] sm:$0xf]
    %v897 = vld [vmem:[#allocation5 + $0xc] sm:$0xf]
    %v898 = vld [vmem:[#allocation5 + $0x10] sm:$0xf]
    %v899 = vld [vmem:[#allocation5 + $0x14] sm:$0xf]
    %v900 = vld [vmem:[#allocation5 + $0x18] sm:$0xf]
    %v901 = vld [vmem:[#allocation5 + $0x1c] sm:$0xf]
    %s902 = scalar_lea.vmem [#allocation2], 16
    %v903 = vld [vmem:[%s902] sm:$0xf]
    %v904 = vld [vmem:[%s902 + $0x4] sm:$0xf]
    %v905 = vld [vmem:[%s902 + $0x8] sm:$0xf]
    %v906 = vld [vmem:[%s902 + $0xc] sm:$0xf]
    %v911 = vunpack.c.l.b16 %v903
    %v912 = vunpack.c.l.b16 %v904
    %v913 = vunpack.c.l.b16 %v905
    %v914 = vunpack.c.l.b16 %v906
    %v915 = vpack.c.b16 %v912, %v911
    %v916 = vpack.c.b16 %v914, %v913
    %v918 = vsel %vm866, %v915, 0
    %v921 = vsel %vm866, %v916, 0
    %923 = vmatpush.bf16.msra.mxu0 0
    %924 = vmatpush.bf16.msra.mxu0 0
    %925 = vmatpush.bf16.msra.mxu0 0
    %926 = vmatpush.bf16.msra.mxu0 0
    %927 = vmatpush.bf16.msra.mxu0 0
    %928 = vmatpush.bf16.msra.mxu0 0
    %929 = vmatpush.bf16.msra.mxu0 %v851
    %930 = vmatpush.bf16.msra.mxu0 %v850
    %931 = vmatmul.bf16.gmra.mxu0 %v918
    %v932 = vpop.f32.mrf.mxu0
    %v933 = vadd.f32 0.0, %v932
    %v934 = vpop.f32.mrf.mxu0
    %v935 = vadd.f32 0.0, %v934
    %936 = vmatmul.bf16.gmra.mxu0 %v921
    %v937 = vpop.f32.mrf.mxu0
    %v938 = vadd.f32 0.0, %v937
    %v939 = vpop.f32.mrf.mxu0
    %v940 = vadd.f32 0.0, %v939
    %941 = vdwg.mxu0
    %v942 = vpack.c.bf16 %v935, %v933
    %v943 = vpack.c.bf16 %v940, %v938
    %s944 = scalar_lea.vmem [#allocation5], 32
    %v945 = vld [vmem:[%s944] sm:$0xf]
    %v946 = vld [vmem:[%s944 + $0x4] sm:$0xf]
    %v947 = vld [vmem:[%s944 + $0x8] sm:$0xf]
    %v948 = vld [vmem:[%s944 + $0xc] sm:$0xf]
    %v949 = vld [vmem:[%s944 + $0x10] sm:$0xf]
    %v950 = vld [vmem:[%s944 + $0x14] sm:$0xf]
    %v951 = vld [vmem:[%s944 + $0x18] sm:$0xf]
    %v952 = vld [vmem:[%s944 + $0x1c] sm:$0xf]
    %v961 = vunpack.c.l.b16 %v945
    %v962 = vunpack.c.l.b16 %v946
    %v963 = vunpack.c.l.b16 %v947
    %v964 = vunpack.c.l.b16 %v948
    %v965 = vunpack.c.l.b16 %v949
    %v966 = vunpack.c.l.b16 %v950
    %v967 = vunpack.c.l.b16 %v951
    %v968 = vunpack.c.l.b16 %v952
    %v969 = vpack.c.b16 %v962, %v961
    %v970 = vpack.c.b16 %v964, %v963
    %v971 = vpack.c.b16 %v966, %v965
    %v972 = vpack.c.b16 %v968, %v967
    %v978 = vsel %vm290, %v942, 0
    %v981 = vsel %vm290, %v943, 0
    %983 = vmatpush.bf16.msra.mxu0 0
    %984 = vmatpush.bf16.msra.mxu0 0
    %985 = vmatpush.bf16.msra.mxu0 0
    %986 = vmatpush.bf16.msra.mxu0 0
    %987 = vmatpush.bf16.msra.mxu0 %v972
    %988 = vmatpush.bf16.msra.mxu0 %v971
    %989 = vmatpush.bf16.msra.mxu0 %v970
    %990 = vmatpush.bf16.msra.mxu0 %v969
    %991 = vmatmul.bf16.gmra.mxu0 %v978
    %v992 = vpop.f32.mrf.mxu0
    %v993 = vadd.f32 0.0, %v992
    %v994 = vpop.f32.mrf.mxu0
    %v995 = vadd.f32 0.0, %v994
    %996 = vmatmul.bf16.gmra.mxu0 %v981
    %v997 = vpop.f32.mrf.mxu0
    %v998 = vadd.f32 0.0, %v997
    %v999 = vpop.f32.mrf.mxu0
    %v1000 = vadd.f32 0.0, %v999
    %1001 = vdwg.mxu0
    %v1010 = vunpack.c.l.b16 %v894
    %v1011 = vunpack.c.l.b16 %v895
    %v1012 = vunpack.c.l.b16 %v896
    %v1013 = vunpack.c.l.b16 %v897
    %v1014 = vunpack.c.l.b16 %v898
    %v1015 = vunpack.c.l.b16 %v899
    %v1016 = vunpack.c.l.b16 %v900
    %v1017 = vunpack.c.l.b16 %v901
    %v1018 = vpack.c.b16 %v1011, %v1010
    %v1019 = vpack.c.b16 %v1013, %v1012
    %v1020 = vpack.c.b16 %v1015, %v1014
    %v1021 = vpack.c.b16 %v1017, %v1016
    %v1027 = vsel %vm290, %v892, 0
    %v1030 = vsel %vm290, %v893, 0
    %1032 = vmatpush.bf16.msra.mxu0 0
    %1033 = vmatpush.bf16.msra.mxu0 0
    %1034 = vmatpush.bf16.msra.mxu0 0
    %1035 = vmatpush.bf16.msra.mxu0 0
    %1036 = vmatpush.bf16.msra.mxu0 %v1021
    %1037 = vmatpush.bf16.msra.mxu0 %v1020
    %1038 = vmatpush.bf16.msra.mxu0 %v1019
    %1039 = vmatpush.bf16.msra.mxu0 %v1018
    %1040 = vmatmul.bf16.gmra.mxu0 %v1027
    %v1041 = vpop.f32.mrf.mxu0
    %v1042 = vadd.f32 %v993, %v1041
    %v1043 = vpop.f32.mrf.mxu0
    %v1044 = vadd.f32 %v995, %v1043
    %1045 = vmatmul.bf16.gmra.mxu0 %v1030
    %v1046 = vpop.f32.mrf.mxu0
    %v1047 = vadd.f32 %v998, %v1046
    %v1048 = vpop.f32.mrf.mxu0
    %v1049 = vadd.f32 %v1000, %v1048
    %1050 = vdwg.mxu0
    %s1051 = scalar_lea.vmem [#allocation2], 32
    %v1052 = vld [vmem:[%s1051] sm:$0xf]
    %v1053 = vld [vmem:[%s1051 + $0x4] sm:$0xf]
    %v1054 = vld [vmem:[%s1051 + $0x8] sm:$0xf]
    %v1055 = vld [vmem:[%s1051 + $0xc] sm:$0xf]
    %v1060 = vunpack.c.l.b16 %v1052
    %v1061 = vunpack.c.l.b16 %v1053
    %v1062 = vunpack.c.l.b16 %v1054
    %v1063 = vunpack.c.l.b16 %v1055
    %v1064 = vpack.c.b16 %v1061, %v1060
    %v1065 = vpack.c.b16 %v1063, %v1062
    %v1067 = vsel %vm866, %v1064, 0
    %v1070 = vsel %vm866, %v1065, 0
    %1072 = vmatpush.bf16.msra.mxu0 0
    %1073 = vmatpush.bf16.msra.mxu0 0
    %1074 = vmatpush.bf16.msra.mxu0 0
    %1075 = vmatpush.bf16.msra.mxu0 0
    %1076 = vmatpush.bf16.msra.mxu0 0
    %1077 = vmatpush.bf16.msra.mxu0 0
    %1078 = vmatpush.bf16.msra.mxu0 %v851
    %1079 = vmatpush.bf16.msra.mxu0 %v850
    %1080 = vmatmul.bf16.gmra.mxu0 %v1067
    %v1081 = vpop.f32.mrf.mxu0
    %v1082 = vadd.f32 0.0, %v1081
    %v1083 = vpop.f32.mrf.mxu0
    %v1084 = vadd.f32 0.0, %v1083
    %1085 = vmatmul.bf16.gmra.mxu0 %v1070
    %v1086 = vpop.f32.mrf.mxu0
    %v1087 = vadd.f32 0.0, %v1086
    %v1088 = vpop.f32.mrf.mxu0
    %v1089 = vadd.f32 0.0, %v1088
    %1090 = vdwg.mxu0
    %v1091 = vpack.c.bf16 %v1084, %v1082
    %v1092 = vpack.c.bf16 %v1089, %v1087
    %s1093 = scalar_lea.vmem [#allocation5], 64
    %v1094 = vld [vmem:[%s1093] sm:$0xf]
    %v1095 = vld [vmem:[%s1093 + $0x4] sm:$0xf]
    %v1096 = vld [vmem:[%s1093 + $0x8] sm:$0xf]
    %v1097 = vld [vmem:[%s1093 + $0xc] sm:$0xf]
    %v1098 = vld [vmem:[%s1093 + $0x10] sm:$0xf]
    %v1099 = vld [vmem:[%s1093 + $0x14] sm:$0xf]
    %v1100 = vld [vmem:[%s1093 + $0x18] sm:$0xf]
    %v1101 = vld [vmem:[%s1093 + $0x1c] sm:$0xf]
    %v1110 = vunpack.c.l.b16 %v1094
    %v1111 = vunpack.c.l.b16 %v1095
    %v1112 = vunpack.c.l.b16 %v1096
    %v1113 = vunpack.c.l.b16 %v1097
    %v1114 = vunpack.c.l.b16 %v1098
    %v1115 = vunpack.c.l.b16 %v1099
    %v1116 = vunpack.c.l.b16 %v1100
    %v1117 = vunpack.c.l.b16 %v1101
    %v1118 = vpack.c.b16 %v1111, %v1110
    %v1119 = vpack.c.b16 %v1113, %v1112
    %v1120 = vpack.c.b16 %v1115, %v1114
    %v1121 = vpack.c.b16 %v1117, %v1116
    %v1127 = vsel %vm290, %v1091, 0
    %v1130 = vsel %vm290, %v1092, 0
    %1132 = vmatpush.bf16.msra.mxu0 0
    %1133 = vmatpush.bf16.msra.mxu0 0
    %1134 = vmatpush.bf16.msra.mxu0 0
    %1135 = vmatpush.bf16.msra.mxu0 0
    %1136 = vmatpush.bf16.msra.mxu0 %v1121
    %1137 = vmatpush.bf16.msra.mxu0 %v1120
    %1138 = vmatpush.bf16.msra.mxu0 %v1119
    %1139 = vmatpush.bf16.msra.mxu0 %v1118
    %1140 = vmatmul.bf16.gmra.mxu0 %v1127
    %v1141 = vpop.f32.mrf.mxu0
    %v1142 = vadd.f32 0.0, %v1141
    %v1143 = vpop.f32.mrf.mxu0
    %v1144 = vadd.f32 0.0, %v1143
    %1145 = vmatmul.bf16.gmra.mxu0 %v1130
    %v1146 = vpop.f32.mrf.mxu0
    %v1147 = vadd.f32 0.0, %v1146
    %v1148 = vpop.f32.mrf.mxu0
    %v1149 = vadd.f32 0.0, %v1148
    %1150 = vdwg.mxu0
    %v1151 = vadd.f32 %v1042, %v1142
    %v1152 = vadd.f32 %v1044, %v1144
    %v1153 = vadd.f32 %v1047, %v1147
    %v1154 = vadd.f32 %v1049, %v1149
    %s1155 = scalar_lea.vmem [#allocation2], 48
    %v1156 = vld [vmem:[%s1155] sm:$0xf]
    %v1157 = vld [vmem:[%s1155 + $0x4] sm:$0xf]
    %v1158 = vld [vmem:[%s1155 + $0x8] sm:$0xf]
    %v1159 = vld [vmem:[%s1155 + $0xc] sm:$0xf]
    %v1164 = vunpack.c.l.b16 %v1156
    %v1165 = vunpack.c.l.b16 %v1157
    %v1166 = vunpack.c.l.b16 %v1158
    %v1167 = vunpack.c.l.b16 %v1159
    %v1168 = vpack.c.b16 %v1165, %v1164
    %v1169 = vpack.c.b16 %v1167, %v1166
    %v1171 = vsel %vm866, %v1168, 0
    %v1174 = vsel %vm866, %v1169, 0
    %1176 = vmatpush.bf16.msra.mxu0 0
    %1177 = vmatpush.bf16.msra.mxu0 0
    %1178 = vmatpush.bf16.msra.mxu0 0
    %1179 = vmatpush.bf16.msra.mxu0 0
    %1180 = vmatpush.bf16.msra.mxu0 0
    %1181 = vmatpush.bf16.msra.mxu0 0
    %1182 = vmatpush.bf16.msra.mxu0 %v851
    %1183 = vmatpush.bf16.msra.mxu0 %v850
    %1184 = vmatmul.bf16.gmra.mxu0 %v1171
    %v1185 = vpop.f32.mrf.mxu0
    %v1186 = vadd.f32 0.0, %v1185
    %v1187 = vpop.f32.mrf.mxu0
    %v1188 = vadd.f32 0.0, %v1187
    %1189 = vmatmul.bf16.gmra.mxu0 %v1174
    %v1190 = vpop.f32.mrf.mxu0
    %v1191 = vadd.f32 0.0, %v1190
    %v1192 = vpop.f32.mrf.mxu0
    %v1193 = vadd.f32 0.0, %v1192
    %1194 = vdwg.mxu0
    %v1195 = vpack.c.bf16 %v1188, %v1186
    %v1196 = vpack.c.bf16 %v1193, %v1191
    %s1197 = scalar_lea.vmem [#allocation5], 96
    %v1198 = vld [vmem:[%s1197] sm:$0xf]
    %v1199 = vld [vmem:[%s1197 + $0x4] sm:$0xf]
    %v1200 = vld [vmem:[%s1197 + $0x8] sm:$0xf]
    %v1201 = vld [vmem:[%s1197 + $0xc] sm:$0xf]
    %v1202 = vld [vmem:[%s1197 + $0x10] sm:$0xf]
    %v1203 = vld [vmem:[%s1197 + $0x14] sm:$0xf]
    %v1204 = vld [vmem:[%s1197 + $0x18] sm:$0xf]
    %v1205 = vld [vmem:[%s1197 + $0x1c] sm:$0xf]
    %v1214 = vunpack.c.l.b16 %v1198
    %v1215 = vunpack.c.l.b16 %v1199
    %v1216 = vunpack.c.l.b16 %v1200
    %v1217 = vunpack.c.l.b16 %v1201
    %v1218 = vunpack.c.l.b16 %v1202
    %v1219 = vunpack.c.l.b16 %v1203
    %v1220 = vunpack.c.l.b16 %v1204
    %v1221 = vunpack.c.l.b16 %v1205
    %v1222 = vpack.c.b16 %v1215, %v1214
    %v1223 = vpack.c.b16 %v1217, %v1216
    %v1224 = vpack.c.b16 %v1219, %v1218
    %v1225 = vpack.c.b16 %v1221, %v1220
    %v1231 = vsel %vm290, %v1195, 0
    %v1234 = vsel %vm290, %v1196, 0
    %1236 = vmatpush.bf16.msra.mxu0 0
    %1237 = vmatpush.bf16.msra.mxu0 0
    %1238 = vmatpush.bf16.msra.mxu0 0
    %1239 = vmatpush.bf16.msra.mxu0 0
    %1240 = vmatpush.bf16.msra.mxu0 %v1225
    %1241 = vmatpush.bf16.msra.mxu0 %v1224
    %1242 = vmatpush.bf16.msra.mxu0 %v1223
    %1243 = vmatpush.bf16.msra.mxu0 %v1222
    %1244 = vmatmul.bf16.gmra.mxu0 %v1231
    %v1245 = vpop.f32.mrf.mxu0
    %v1246 = vadd.f32 0.0, %v1245
    %v1247 = vpop.f32.mrf.mxu0
    %v1248 = vadd.f32 0.0, %v1247
    %1249 = vmatmul.bf16.gmra.mxu0 %v1234
    %v1250 = vpop.f32.mrf.mxu0
    %v1251 = vadd.f32 0.0, %v1250
    %v1252 = vpop.f32.mrf.mxu0
    %v1253 = vadd.f32 0.0, %v1252
    %1254 = vdwg.mxu0
    %v1255 = vadd.f32 %v1151, %v1246
    %v1256 = vadd.f32 %v1152, %v1248
    %v1257 = vadd.f32 %v1153, %v1251
    %v1258 = vadd.f32 %v1154, %v1253
    %s1259 = scalar_lea.vmem [#allocation2], 64
    %v1260 = vld [vmem:[%s1259] sm:$0xf]
    %v1261 = vld [vmem:[%s1259 + $0x4] sm:$0xf]
    %v1262 = vld [vmem:[%s1259 + $0x8] sm:$0xf]
    %v1263 = vld [vmem:[%s1259 + $0xc] sm:$0xf]
    %v1268 = vunpack.c.l.b16 %v1260
    %v1269 = vunpack.c.l.b16 %v1261
    %v1270 = vunpack.c.l.b16 %v1262
    %v1271 = vunpack.c.l.b16 %v1263
    %v1272 = vpack.c.b16 %v1269, %v1268
    %v1273 = vpack.c.b16 %v1271, %v1270
    %v1275 = vsel %vm866, %v1272, 0
    %v1278 = vsel %vm866, %v1273, 0
    %1280 = vmatpush.bf16.msra.mxu0 0
    %1281 = vmatpush.bf16.msra.mxu0 0
    %1282 = vmatpush.bf16.msra.mxu0 0
    %1283 = vmatpush.bf16.msra.mxu0 0
    %1284 = vmatpush.bf16.msra.mxu0 0
    %1285 = vmatpush.bf16.msra.mxu0 0
    %1286 = vmatpush.bf16.msra.mxu0 %v851
    %1287 = vmatpush.bf16.msra.mxu0 %v850
    %1288 = vmatmul.bf16.gmra.mxu0 %v1275
    %v1289 = vpop.f32.mrf.mxu0
    %v1290 = vadd.f32 0.0, %v1289
    %v1291 = vpop.f32.mrf.mxu0
    %v1292 = vadd.f32 0.0, %v1291
    %1293 = vmatmul.bf16.gmra.mxu0 %v1278
    %v1294 = vpop.f32.mrf.mxu0
    %v1295 = vadd.f32 0.0, %v1294
    %v1296 = vpop.f32.mrf.mxu0
    %v1297 = vadd.f32 0.0, %v1296
    %1298 = vdwg.mxu0
    %v1299 = vpack.c.bf16 %v1292, %v1290
    %v1300 = vpack.c.bf16 %v1297, %v1295
    %s1301 = scalar_lea.vmem [#allocation5], 128
    %v1302 = vld [vmem:[%s1301] sm:$0xf]
    %v1303 = vld [vmem:[%s1301 + $0x4] sm:$0xf]
    %v1304 = vld [vmem:[%s1301 + $0x8] sm:$0xf]
    %v1305 = vld [vmem:[%s1301 + $0xc] sm:$0xf]
    %v1306 = vld [vmem:[%s1301 + $0x10] sm:$0xf]
    %v1307 = vld [vmem:[%s1301 + $0x14] sm:$0xf]
    %v1308 = vld [vmem:[%s1301 + $0x18] sm:$0xf]
    %v1309 = vld [vmem:[%s1301 + $0x1c] sm:$0xf]
    %v1318 = vunpack.c.l.b16 %v1302
    %v1319 = vunpack.c.l.b16 %v1303
    %v1320 = vunpack.c.l.b16 %v1304
    %v1321 = vunpack.c.l.b16 %v1305
    %v1322 = vunpack.c.l.b16 %v1306
    %v1323 = vunpack.c.l.b16 %v1307
    %v1324 = vunpack.c.l.b16 %v1308
    %v1325 = vunpack.c.l.b16 %v1309
    %v1326 = vpack.c.b16 %v1319, %v1318
    %v1327 = vpack.c.b16 %v1321, %v1320
    %v1328 = vpack.c.b16 %v1323, %v1322
    %v1329 = vpack.c.b16 %v1325, %v1324
    %v1335 = vsel %vm290, %v1299, 0
    %v1338 = vsel %vm290, %v1300, 0
    %1340 = vmatpush.bf16.msra.mxu0 0
    %1341 = vmatpush.bf16.msra.mxu0 0
    %1342 = vmatpush.bf16.msra.mxu0 0
    %1343 = vmatpush.bf16.msra.mxu0 0
    %1344 = vmatpush.bf16.msra.mxu0 %v1329
    %1345 = vmatpush.bf16.msra.mxu0 %v1328
    %1346 = vmatpush.bf16.msra.mxu0 %v1327
    %1347 = vmatpush.bf16.msra.mxu0 %v1326
    %1348 = vmatmul.bf16.gmra.mxu0 %v1335
    %v1349 = vpop.f32.mrf.mxu0
    %v1350 = vadd.f32 0.0, %v1349
    %v1351 = vpop.f32.mrf.mxu0
    %v1352 = vadd.f32 0.0, %v1351
    %1353 = vmatmul.bf16.gmra.mxu0 %v1338
    %v1354 = vpop.f32.mrf.mxu0
    %v1355 = vadd.f32 0.0, %v1354
    %v1356 = vpop.f32.mrf.mxu0
    %v1357 = vadd.f32 0.0, %v1356
    %1358 = vdwg.mxu0
    %v1359 = vadd.f32 %v1255, %v1350
    %v1360 = vadd.f32 %v1256, %v1352
    %v1361 = vadd.f32 %v1257, %v1355
    %v1362 = vadd.f32 %v1258, %v1357
    %s1363 = scalar_lea.vmem [#allocation2], 80
    %v1364 = vld [vmem:[%s1363] sm:$0xf]
    %v1365 = vld [vmem:[%s1363 + $0x4] sm:$0xf]
    %v1366 = vld [vmem:[%s1363 + $0x8] sm:$0xf]
    %v1367 = vld [vmem:[%s1363 + $0xc] sm:$0xf]
    %v1372 = vunpack.c.l.b16 %v1364
    %v1373 = vunpack.c.l.b16 %v1365
    %v1374 = vunpack.c.l.b16 %v1366
    %v1375 = vunpack.c.l.b16 %v1367
    %v1376 = vpack.c.b16 %v1373, %v1372
    %v1377 = vpack.c.b16 %v1375, %v1374
    %v1379 = vsel %vm866, %v1376, 0
    %v1382 = vsel %vm866, %v1377, 0
    %1384 = vmatpush.bf16.msra.mxu0 0
    %1385 = vmatpush.bf16.msra.mxu0 0
    %1386 = vmatpush.bf16.msra.mxu0 0
    %1387 = vmatpush.bf16.msra.mxu0 0
    %1388 = vmatpush.bf16.msra.mxu0 0
    %1389 = vmatpush.bf16.msra.mxu0 0
    %1390 = vmatpush.bf16.msra.mxu0 %v851
    %1391 = vmatpush.bf16.msra.mxu0 %v850
    %1392 = vmatmul.bf16.gmra.mxu0 %v1379
    %v1393 = vpop.f32.mrf.mxu0
    %v1394 = vadd.f32 0.0, %v1393
    %v1395 = vpop.f32.mrf.mxu0
    %v1396 = vadd.f32 0.0, %v1395
    %1397 = vmatmul.bf16.gmra.mxu0 %v1382
    %v1398 = vpop.f32.mrf.mxu0
    %v1399 = vadd.f32 0.0, %v1398
    %v1400 = vpop.f32.mrf.mxu0
    %v1401 = vadd.f32 0.0, %v1400
    %1402 = vdwg.mxu0
    %v1403 = vpack.c.bf16 %v1396, %v1394
    %v1404 = vpack.c.bf16 %v1401, %v1399
    %s1405 = scalar_lea.vmem [#allocation5], 160
    %v1406 = vld [vmem:[%s1405] sm:$0xf]
    %v1407 = vld [vmem:[%s1405 + $0x4] sm:$0xf]
    %v1408 = vld [vmem:[%s1405 + $0x8] sm:$0xf]
    %v1409 = vld [vmem:[%s1405 + $0xc] sm:$0xf]
    %v1410 = vld [vmem:[%s1405 + $0x10] sm:$0xf]
    %v1411 = vld [vmem:[%s1405 + $0x14] sm:$0xf]
    %v1412 = vld [vmem:[%s1405 + $0x18] sm:$0xf]
    %v1413 = vld [vmem:[%s1405 + $0x1c] sm:$0xf]
    %v1422 = vunpack.c.l.b16 %v1406
    %v1423 = vunpack.c.l.b16 %v1407
    %v1424 = vunpack.c.l.b16 %v1408
    %v1425 = vunpack.c.l.b16 %v1409
    %v1426 = vunpack.c.l.b16 %v1410
    %v1427 = vunpack.c.l.b16 %v1411
    %v1428 = vunpack.c.l.b16 %v1412
    %v1429 = vunpack.c.l.b16 %v1413
    %v1430 = vpack.c.b16 %v1423, %v1422
    %v1431 = vpack.c.b16 %v1425, %v1424
    %v1432 = vpack.c.b16 %v1427, %v1426
    %v1433 = vpack.c.b16 %v1429, %v1428
    %v1439 = vsel %vm290, %v1403, 0
    %v1442 = vsel %vm290, %v1404, 0
    %1444 = vmatpush.bf16.msra.mxu0 0
    %1445 = vmatpush.bf16.msra.mxu0 0
    %1446 = vmatpush.bf16.msra.mxu0 0
    %1447 = vmatpush.bf16.msra.mxu0 0
    %1448 = vmatpush.bf16.msra.mxu0 %v1433
    %1449 = vmatpush.bf16.msra.mxu0 %v1432
    %1450 = vmatpush.bf16.msra.mxu0 %v1431
    %1451 = vmatpush.bf16.msra.mxu0 %v1430
    %1452 = vmatmul.bf16.gmra.mxu0 %v1439
    %v1453 = vpop.f32.mrf.mxu0
    %v1454 = vadd.f32 0.0, %v1453
    %v1455 = vpop.f32.mrf.mxu0
    %v1456 = vadd.f32 0.0, %v1455
    %1457 = vmatmul.bf16.gmra.mxu0 %v1442
    %v1458 = vpop.f32.mrf.mxu0
    %v1459 = vadd.f32 0.0, %v1458
    %v1460 = vpop.f32.mrf.mxu0
    %v1461 = vadd.f32 0.0, %v1460
    %1462 = vdwg.mxu0
    %v1463 = vadd.f32 %v1359, %v1454
    %v1464 = vadd.f32 %v1360, %v1456
    %v1465 = vadd.f32 %v1361, %v1459
    %v1466 = vadd.f32 %v1362, %v1461
    %s1467 = scalar_lea.vmem [#allocation2], 96
    %v1468 = vld [vmem:[%s1467] sm:$0xf]
    %v1469 = vld [vmem:[%s1467 + $0x4] sm:$0xf]
    %v1470 = vld [vmem:[%s1467 + $0x8] sm:$0xf]
    %v1471 = vld [vmem:[%s1467 + $0xc] sm:$0xf]
    %v1476 = vunpack.c.l.b16 %v1468
    %v1477 = vunpack.c.l.b16 %v1469
    %v1478 = vunpack.c.l.b16 %v1470
    %v1479 = vunpack.c.l.b16 %v1471
    %v1480 = vpack.c.b16 %v1477, %v1476
    %v1481 = vpack.c.b16 %v1479, %v1478
    %v1483 = vsel %vm866, %v1480, 0
    %v1486 = vsel %vm866, %v1481, 0
    %1488 = vmatpush.bf16.msra.mxu0 0
    %1489 = vmatpush.bf16.msra.mxu0 0
    %1490 = vmatpush.bf16.msra.mxu0 0
    %1491 = vmatpush.bf16.msra.mxu0 0
    %1492 = vmatpush.bf16.msra.mxu0 0
    %1493 = vmatpush.bf16.msra.mxu0 0
    %1494 = vmatpush.bf16.msra.mxu0 %v851
    %1495 = vmatpush.bf16.msra.mxu0 %v850
    %1496 = vmatmul.bf16.gmra.mxu0 %v1483
    %v1497 = vpop.f32.mrf.mxu0
    %v1498 = vadd.f32 0.0, %v1497
    %v1499 = vpop.f32.mrf.mxu0
    %v1500 = vadd.f32 0.0, %v1499
    %1501 = vmatmul.bf16.gmra.mxu0 %v1486
    %v1502 = vpop.f32.mrf.mxu0
    %v1503 = vadd.f32 0.0, %v1502
    %v1504 = vpop.f32.mrf.mxu0
    %v1505 = vadd.f32 0.0, %v1504
    %1506 = vdwg.mxu0
    %v1507 = vpack.c.bf16 %v1500, %v1498
    %v1508 = vpack.c.bf16 %v1505, %v1503
    %s1509 = scalar_lea.vmem [#allocation5], 192
    %v1510 = vld [vmem:[%s1509] sm:$0xf]
    %v1511 = vld [vmem:[%s1509 + $0x4] sm:$0xf]
    %v1512 = vld [vmem:[%s1509 + $0x8] sm:$0xf]
    %v1513 = vld [vmem:[%s1509 + $0xc] sm:$0xf]
    %v1514 = vld [vmem:[%s1509 + $0x10] sm:$0xf]
    %v1515 = vld [vmem:[%s1509 + $0x14] sm:$0xf]
    %v1516 = vld [vmem:[%s1509 + $0x18] sm:$0xf]
    %v1517 = vld [vmem:[%s1509 + $0x1c] sm:$0xf]
    %v1526 = vunpack.c.l.b16 %v1510
    %v1527 = vunpack.c.l.b16 %v1511
    %v1528 = vunpack.c.l.b16 %v1512
    %v1529 = vunpack.c.l.b16 %v1513
    %v1530 = vunpack.c.l.b16 %v1514
    %v1531 = vunpack.c.l.b16 %v1515
    %v1532 = vunpack.c.l.b16 %v1516
    %v1533 = vunpack.c.l.b16 %v1517
    %v1534 = vpack.c.b16 %v1527, %v1526
    %v1535 = vpack.c.b16 %v1529, %v1528
    %v1536 = vpack.c.b16 %v1531, %v1530
    %v1537 = vpack.c.b16 %v1533, %v1532
    %v1543 = vsel %vm290, %v1507, 0
    %v1546 = vsel %vm290, %v1508, 0
    %1548 = vmatpush.bf16.msra.mxu0 0
    %1549 = vmatpush.bf16.msra.mxu0 0
    %1550 = vmatpush.bf16.msra.mxu0 0
    %1551 = vmatpush.bf16.msra.mxu0 0
    %1552 = vmatpush.bf16.msra.mxu0 %v1537
    %1553 = vmatpush.bf16.msra.mxu0 %v1536
    %1554 = vmatpush.bf16.msra.mxu0 %v1535
    %1555 = vmatpush.bf16.msra.mxu0 %v1534
    %1556 = vmatmul.bf16.gmra.mxu0 %v1543
    %v1557 = vpop.f32.mrf.mxu0
    %v1558 = vadd.f32 0.0, %v1557
    %v1559 = vpop.f32.mrf.mxu0
    %v1560 = vadd.f32 0.0, %v1559
    %1561 = vmatmul.bf16.gmra.mxu0 %v1546
    %v1562 = vpop.f32.mrf.mxu0
    %v1563 = vadd.f32 0.0, %v1562
    %v1564 = vpop.f32.mrf.mxu0
    %v1565 = vadd.f32 0.0, %v1564
    %1566 = vdwg.mxu0
    %v1567 = vadd.f32 %v1463, %v1558
    %v1568 = vadd.f32 %v1464, %v1560
    %v1569 = vadd.f32 %v1465, %v1563
    %v1570 = vadd.f32 %v1466, %v1565
    %s1571 = scalar_lea.vmem [#allocation2], 112
    %v1572 = vld [vmem:[%s1571] sm:$0xf]
    %v1573 = vld [vmem:[%s1571 + $0x4] sm:$0xf]
    %v1574 = vld [vmem:[%s1571 + $0x8] sm:$0xf]
    %v1575 = vld [vmem:[%s1571 + $0xc] sm:$0xf]
    %v1580 = vunpack.c.l.b16 %v1572
    %v1581 = vunpack.c.l.b16 %v1573
    %v1582 = vunpack.c.l.b16 %v1574
    %v1583 = vunpack.c.l.b16 %v1575
    %v1584 = vpack.c.b16 %v1581, %v1580
    %v1585 = vpack.c.b16 %v1583, %v1582
    %v1587 = vsel %vm866, %v1584, 0
    %v1590 = vsel %vm866, %v1585, 0
    %1592 = vmatpush.bf16.msra.mxu0 0
    %1593 = vmatpush.bf16.msra.mxu0 0
    %1594 = vmatpush.bf16.msra.mxu0 0
    %1595 = vmatpush.bf16.msra.mxu0 0
    %1596 = vmatpush.bf16.msra.mxu0 0
    %1597 = vmatpush.bf16.msra.mxu0 0
    %1598 = vmatpush.bf16.msra.mxu0 %v851
    %1599 = vmatpush.bf16.msra.mxu0 %v850
    %1600 = vmatmul.bf16.gmra.mxu0 %v1587
    %v1601 = vpop.f32.mrf.mxu0
    %v1602 = vadd.f32 0.0, %v1601
    %v1603 = vpop.f32.mrf.mxu0
    %v1604 = vadd.f32 0.0, %v1603
    %1605 = vmatmul.bf16.gmra.mxu0 %v1590
    %v1606 = vpop.f32.mrf.mxu0
    %v1607 = vadd.f32 0.0, %v1606
    %v1608 = vpop.f32.mrf.mxu0
    %v1609 = vadd.f32 0.0, %v1608
    %1610 = vdwg.mxu0
    %v1611 = vpack.c.bf16 %v1604, %v1602
    %v1612 = vpack.c.bf16 %v1609, %v1607
    %s1613 = scalar_lea.vmem [#allocation5], 224
    %v1614 = vld [vmem:[%s1613] sm:$0xf]
    %v1615 = vld [vmem:[%s1613 + $0x4] sm:$0xf]
    %v1616 = vld [vmem:[%s1613 + $0x8] sm:$0xf]
    %v1617 = vld [vmem:[%s1613 + $0xc] sm:$0xf]
    %v1618 = vld [vmem:[%s1613 + $0x10] sm:$0xf]
    %v1619 = vld [vmem:[%s1613 + $0x14] sm:$0xf]
    %v1620 = vld [vmem:[%s1613 + $0x18] sm:$0xf]
    %v1621 = vld [vmem:[%s1613 + $0x1c] sm:$0xf]
    %v1630 = vunpack.c.l.b16 %v1614
    %v1631 = vunpack.c.l.b16 %v1615
    %v1632 = vunpack.c.l.b16 %v1616
    %v1633 = vunpack.c.l.b16 %v1617
    %v1634 = vunpack.c.l.b16 %v1618
    %v1635 = vunpack.c.l.b16 %v1619
    %v1636 = vunpack.c.l.b16 %v1620
    %v1637 = vunpack.c.l.b16 %v1621
    %v1638 = vpack.c.b16 %v1631, %v1630
    %v1639 = vpack.c.b16 %v1633, %v1632
    %v1640 = vpack.c.b16 %v1635, %v1634
    %v1641 = vpack.c.b16 %v1637, %v1636
    %v1647 = vsel %vm290, %v1611, 0
    %v1650 = vsel %vm290, %v1612, 0
    %1652 = vmatpush.bf16.msra.mxu0 0
    %1653 = vmatpush.bf16.msra.mxu0 0
    %1654 = vmatpush.bf16.msra.mxu0 0
    %1655 = vmatpush.bf16.msra.mxu0 0
    %1656 = vmatpush.bf16.msra.mxu0 %v1641
    %1657 = vmatpush.bf16.msra.mxu0 %v1640
    %1658 = vmatpush.bf16.msra.mxu0 %v1639
    %1659 = vmatpush.bf16.msra.mxu0 %v1638
    %1660 = vmatmul.bf16.gmra.mxu0 %v1647
    %v1661 = vpop.f32.mrf.mxu0
    %v1662 = vadd.f32 0.0, %v1661
    %v1663 = vpop.f32.mrf.mxu0
    %v1664 = vadd.f32 0.0, %v1663
    %1665 = vmatmul.bf16.gmra.mxu0 %v1650
    %v1666 = vpop.f32.mrf.mxu0
    %v1667 = vadd.f32 0.0, %v1666
    %v1668 = vpop.f32.mrf.mxu0
    %v1669 = vadd.f32 0.0, %v1668
    %1670 = vdwg.mxu0
    %v1671 = vadd.f32 %v1567, %v1662
    %v1672 = vadd.f32 %v1568, %v1664
    %v1673 = vadd.f32 %v1569, %v1667
    %v1674 = vadd.f32 %v1570, %v1669
    %s1675 = scalar_lea.vmem [#allocation2], 128
    %v1676 = vld [vmem:[%s1675] sm:$0xf]
    %v1677 = vld [vmem:[%s1675 + $0x4] sm:$0xf]
    %v1678 = vld [vmem:[%s1675 + $0x8] sm:$0xf]
    %v1679 = vld [vmem:[%s1675 + $0xc] sm:$0xf]
    %v1684 = vunpack.c.l.b16 %v1676
    %v1685 = vunpack.c.l.b16 %v1677
    %v1686 = vunpack.c.l.b16 %v1678
    %v1687 = vunpack.c.l.b16 %v1679
    %v1688 = vpack.c.b16 %v1685, %v1684
    %v1689 = vpack.c.b16 %v1687, %v1686
    %v1691 = vsel %vm866, %v1688, 0
    %v1694 = vsel %vm866, %v1689, 0
    %1696 = vmatpush.bf16.msra.mxu0 0
    %1697 = vmatpush.bf16.msra.mxu0 0
    %1698 = vmatpush.bf16.msra.mxu0 0
    %1699 = vmatpush.bf16.msra.mxu0 0
    %1700 = vmatpush.bf16.msra.mxu0 0
    %1701 = vmatpush.bf16.msra.mxu0 0
    %1702 = vmatpush.bf16.msra.mxu0 %v851
    %1703 = vmatpush.bf16.msra.mxu0 %v850
    %1704 = vmatmul.bf16.gmra.mxu0 %v1691
    %v1705 = vpop.f32.mrf.mxu0
    %v1706 = vadd.f32 0.0, %v1705
    %v1707 = vpop.f32.mrf.mxu0
    %v1708 = vadd.f32 0.0, %v1707
    %1709 = vmatmul.bf16.gmra.mxu0 %v1694
    %v1710 = vpop.f32.mrf.mxu0
    %v1711 = vadd.f32 0.0, %v1710
    %v1712 = vpop.f32.mrf.mxu0
    %v1713 = vadd.f32 0.0, %v1712
    %1714 = vdwg.mxu0
    %v1715 = vpack.c.bf16 %v1708, %v1706
    %v1716 = vpack.c.bf16 %v1713, %v1711
    %s1717 = scalar_lea.vmem [#allocation5], 256
    %v1718 = vld [vmem:[%s1717] sm:$0xf]
    %v1719 = vld [vmem:[%s1717 + $0x4] sm:$0xf]
    %v1720 = vld [vmem:[%s1717 + $0x8] sm:$0xf]
    %v1721 = vld [vmem:[%s1717 + $0xc] sm:$0xf]
    %v1722 = vld [vmem:[%s1717 + $0x10] sm:$0xf]
    %v1723 = vld [vmem:[%s1717 + $0x14] sm:$0xf]
    %v1724 = vld [vmem:[%s1717 + $0x18] sm:$0xf]
    %v1725 = vld [vmem:[%s1717 + $0x1c] sm:$0xf]
    %v1734 = vunpack.c.l.b16 %v1718
    %v1735 = vunpack.c.l.b16 %v1719
    %v1736 = vunpack.c.l.b16 %v1720
    %v1737 = vunpack.c.l.b16 %v1721
    %v1738 = vunpack.c.l.b16 %v1722
    %v1739 = vunpack.c.l.b16 %v1723
    %v1740 = vunpack.c.l.b16 %v1724
    %v1741 = vunpack.c.l.b16 %v1725
    %v1742 = vpack.c.b16 %v1735, %v1734
    %v1743 = vpack.c.b16 %v1737, %v1736
    %v1744 = vpack.c.b16 %v1739, %v1738
    %v1745 = vpack.c.b16 %v1741, %v1740
    %v1751 = vsel %vm290, %v1715, 0
    %v1754 = vsel %vm290, %v1716, 0
    %1756 = vmatpush.bf16.msra.mxu0 0
    %1757 = vmatpush.bf16.msra.mxu0 0
    %1758 = vmatpush.bf16.msra.mxu0 0
    %1759 = vmatpush.bf16.msra.mxu0 0
    %1760 = vmatpush.bf16.msra.mxu0 %v1745
    %1761 = vmatpush.bf16.msra.mxu0 %v1744
    %1762 = vmatpush.bf16.msra.mxu0 %v1743
    %1763 = vmatpush.bf16.msra.mxu0 %v1742
    %1764 = vmatmul.bf16.gmra.mxu0 %v1751
    %v1765 = vpop.f32.mrf.mxu0
    %v1766 = vadd.f32 0.0, %v1765
    %v1767 = vpop.f32.mrf.mxu0
    %v1768 = vadd.f32 0.0, %v1767
    %1769 = vmatmul.bf16.gmra.mxu0 %v1754
    %v1770 = vpop.f32.mrf.mxu0
    %v1771 = vadd.f32 0.0, %v1770
    %v1772 = vpop.f32.mrf.mxu0
    %v1773 = vadd.f32 0.0, %v1772
    %1774 = vdwg.mxu0
    %v1775 = vadd.f32 %v1671, %v1766
    %v1776 = vadd.f32 %v1672, %v1768
    %v1777 = vadd.f32 %v1673, %v1771
    %v1778 = vadd.f32 %v1674, %v1773
    %v1779 = vld [vmem:[%s7] sm:$0x1]
    %v1780 = vld [vmem:[%s8] sm:$0x1]
    %v1781 = vsel %vm290, %v1775, 0.0
    %v1782 = vsel %vm290, %v1776, 0.0
    %v1783 = vadd.f32 %v1781, %v1782
    %v1784 = vsel %vm290, %v1777, 0.0
    %v1785 = vadd.f32 %v1783, %v1784
    %v1786 = vsel %vm290, %v1778, 0.0
    %v1787 = vadd.f32 %v1785, %v1786
    %v1788 = vrot.slane %v1787, 4
    %v1789 = vadd.f32 %v1787, %v1788
    %v1790 = vrot.slane %v1789, 2
    %v1791 = vadd.f32 %v1789, %v1790
    %v1792 = vrot.slane %v1791, 1
    %v1793 = vadd.f32 %v1791, %v1792
    %v1794 = vrcp.pop 32.0
    %v1795 = vmul.f32 32.0, %v1794
    %v1796 = vsub.f32 1.0, %v1795
    %v1797 = vmul.f32 %v1794, %v1796
    %v1798 = vadd.f32 %v1794, %v1797
    %vm1799 = vweird.f32 %v1794
    %v1800 = vsel %vm1799, %v1794, %v1798
    %v1801 = vmul.f32 %v1793, %v1800
    %v1802 = vsub.f32 %v1775, %v1801
    %v1803 = vsub.f32 %v1776, %v1801
    %v1804 = vsub.f32 %v1777, %v1801
    %v1805 = vsub.f32 %v1778, %v1801
    %v1806 = vmul.f32 %v1802, %v1802
    %v1807 = vmul.f32 %v1803, %v1803
    %v1808 = vmul.f32 %v1804, %v1804
    %v1809 = vmul.f32 %v1805, %v1805
    %v1810 = vsel %vm290, %v1806, 0.0
    %v1811 = vsel %vm290, %v1807, 0.0
    %v1812 = vadd.f32 %v1810, %v1811
    %v1813 = vsel %vm290, %v1808, 0.0
    %v1814 = vadd.f32 %v1812, %v1813
    %v1815 = vsel %vm290, %v1809, 0.0
    %v1816 = vadd.f32 %v1814, %v1815
    %v1817 = vrot.slane %v1816, 4
    %v1818 = vadd.f32 %v1816, %v1817
    %v1819 = vrot.slane %v1818, 2
    %v1820 = vadd.f32 %v1818, %v1819
    %v1821 = vrot.slane %v1820, 1
    %v1822 = vadd.f32 %v1820, %v1821
    %v1823 = vmul.f32 %v1822, %v1800
    %v1824 = vadd.f32 %v1823, 1e-05
    %v1825 = vrsqrt.pop %v1824
    %v1826 = vmul.f32 %v1825, %v1824
    %v1827 = vmul.f32 %v1826, %v1825
    %v1828 = vmul.f32 0.5, %v1827
    %v1829 = vsub.f32 1.5, %v1828
    %v1830 = vmul.f32 %v1825, %v1829
    %vm1831 = vweird.f32 %v1824
    %vm1832 = vweird.f32 %v1825
    %vm1833 = vmor %vm1831, %vm1832
    %v1834 = vsel %vm1833, %v1825, %v1830
    %v1835 = vmul.f32 %v1802, %v1834
    %v1836 = vmul.f32 %v1803, %v1834
    %v1837 = vmul.f32 %v1804, %v1834
    %v1838 = vmul.f32 %v1805, %v1834
    %v1840 = vperm.slane %v1779, 0
    %v1842 = vmul.f32 %v1835, %v1840
    %v1843 = vmul.f32 %v1836, %v1840
    %v1844 = vmul.f32 %v1837, %v1840
    %v1845 = vmul.f32 %v1838, %v1840
    %v1847 = vperm.slane %v1780, 0
    %v1849 = vadd.f32 %v1842, %v1847
    %v1850 = vadd.f32 %v1843, %v1847
    %v1851 = vadd.f32 %v1844, %v1847
    %v1852 = vadd.f32 %v1845, %v1847
    %v1853 = vmax.f32 %v1849, 0.0
    %v1854 = vmax.f32 %v1850, 0.0
    %v1855 = vmax.f32 %v1851, 0.0
    %v1856 = vmax.f32 %v1852, 0.0
    %v1857 = vpack.c.bf16 %v1854, %v1853
    %v1858 = vpack.c.bf16 %v1856, %v1855
    %1859 = vmatpush.bf16.msra.mxu0 0
    %1860 = vmatpush.bf16.msra.mxu0 0
    %1861 = vmatpush.bf16.msra.mxu0 0
    %1862 = vmatpush.bf16.msra.mxu0 0
    %1863 = vmatpush.bf16.msra.mxu0 0
    %1864 = vmatpush.bf16.msra.mxu0 0
    %1865 = vmatpush.bf16.msra.mxu0 %v1858
    %1866 = vmatpush.bf16.msra.mxu0 %v1857
    %1867 = vmatmul.bf16.gmra.mxu0 %v868
    %v1868 = vpop.f32.mrf.mxu0
    %v1869 = vadd.f32 0.0, %v1868
    %v1870 = vpop.f32.mrf.mxu0
    %v1871 = vadd.f32 0.0, %v1870
    %1872 = vmatmul.bf16.gmra.mxu0 %v871
    %v1873 = vpop.f32.mrf.mxu0
    %v1874 = vadd.f32 0.0, %v1873
    %v1875 = vpop.f32.mrf.mxu0
    %v1876 = vadd.f32 0.0, %v1875
    %1877 = vdwg.mxu0
    %v1878 = vpack.c.bf16 %v1871, %v1869
    %v1879 = vpack.c.bf16 %v1876, %v1874
    %v1880 = vld [vmem:[#allocation7] sm:$0xf]
    %v1881 = vld [vmem:[#allocation7 + $0x4] sm:$0xf]
    %v1882 = vld [vmem:[#allocation7 + $0x8] sm:$0xf]
    %v1883 = vld [vmem:[#allocation7 + $0xc] sm:$0xf]
    %v1884 = vld [vmem:[#allocation7 + $0x10] sm:$0xf]
    %v1885 = vld [vmem:[#allocation7 + $0x14] sm:$0xf]
    %v1886 = vld [vmem:[#allocation7 + $0x18] sm:$0xf]
    %v1887 = vld [vmem:[#allocation7 + $0x1c] sm:$0xf]
    %1888 = vmatpush.bf16.msra.mxu0 0
    %1889 = vmatpush.bf16.msra.mxu0 0
    %1890 = vmatpush.bf16.msra.mxu0 0
    %1891 = vmatpush.bf16.msra.mxu0 0
    %1892 = vmatpush.bf16.msra.mxu0 0
    %1893 = vmatpush.bf16.msra.mxu0 0
    %1894 = vmatpush.bf16.msra.mxu0 %v1858
    %1895 = vmatpush.bf16.msra.mxu0 %v1857
    %1896 = vmatmul.bf16.gmra.mxu0 %v918
    %v1897 = vpop.f32.mrf.mxu0
    %v1898 = vadd.f32 0.0, %v1897
    %v1899 = vpop.f32.mrf.mxu0
    %v1900 = vadd.f32 0.0, %v1899
    %1901 = vmatmul.bf16.gmra.mxu0 %v921
    %v1902 = vpop.f32.mrf.mxu0
    %v1903 = vadd.f32 0.0, %v1902
    %v1904 = vpop.f32.mrf.mxu0
    %v1905 = vadd.f32 0.0, %v1904
    %1906 = vdwg.mxu0
    %v1907 = vpack.c.bf16 %v1900, %v1898
    %v1908 = vpack.c.bf16 %v1905, %v1903
    %s1909 = scalar_lea.vmem [#allocation7], 32
    %v1910 = vld [vmem:[%s1909] sm:$0xf]
    %v1911 = vld [vmem:[%s1909 + $0x4] sm:$0xf]
    %v1912 = vld [vmem:[%s1909 + $0x8] sm:$0xf]
    %v1913 = vld [vmem:[%s1909 + $0xc] sm:$0xf]
    %v1914 = vld [vmem:[%s1909 + $0x10] sm:$0xf]
    %v1915 = vld [vmem:[%s1909 + $0x14] sm:$0xf]
    %v1916 = vld [vmem:[%s1909 + $0x18] sm:$0xf]
    %v1917 = vld [vmem:[%s1909 + $0x1c] sm:$0xf]
    %v1926 = vunpack.c.l.b16 %v1910
    %v1927 = vunpack.c.l.b16 %v1911
    %v1928 = vunpack.c.l.b16 %v1912
    %v1929 = vunpack.c.l.b16 %v1913
    %v1930 = vunpack.c.l.b16 %v1914
    %v1931 = vunpack.c.l.b16 %v1915
    %v1932 = vunpack.c.l.b16 %v1916
    %v1933 = vunpack.c.l.b16 %v1917
    %v1934 = vpack.c.b16 %v1927, %v1926
    %v1935 = vpack.c.b16 %v1929, %v1928
    %v1936 = vpack.c.b16 %v1931, %v1930
    %v1937 = vpack.c.b16 %v1933, %v1932
    %v1943 = vsel %vm290, %v1907, 0
    %v1946 = vsel %vm290, %v1908, 0
    %1948 = vmatpush.bf16.msra.mxu0 0
    %1949 = vmatpush.bf16.msra.mxu0 0
    %1950 = vmatpush.bf16.msra.mxu0 0
    %1951 = vmatpush.bf16.msra.mxu0 0
    %1952 = vmatpush.bf16.msra.mxu0 %v1937
    %1953 = vmatpush.bf16.msra.mxu0 %v1936
    %1954 = vmatpush.bf16.msra.mxu0 %v1935
    %1955 = vmatpush.bf16.msra.mxu0 %v1934
    %1956 = vmatmul.bf16.gmra.mxu0 %v1943
    %v1957 = vpop.f32.mrf.mxu0
    %v1958 = vadd.f32 0.0, %v1957
    %v1959 = vpop.f32.mrf.mxu0
    %v1960 = vadd.f32 0.0, %v1959
    %1961 = vmatmul.bf16.gmra.mxu0 %v1946
    %v1962 = vpop.f32.mrf.mxu0
    %v1963 = vadd.f32 0.0, %v1962
    %v1964 = vpop.f32.mrf.mxu0
    %v1965 = vadd.f32 0.0, %v1964
    %1966 = vdwg.mxu0
    %v1975 = vunpack.c.l.b16 %v1880
    %v1976 = vunpack.c.l.b16 %v1881
    %v1977 = vunpack.c.l.b16 %v1882
    %v1978 = vunpack.c.l.b16 %v1883
    %v1979 = vunpack.c.l.b16 %v1884
    %v1980 = vunpack.c.l.b16 %v1885
    %v1981 = vunpack.c.l.b16 %v1886
    %v1982 = vunpack.c.l.b16 %v1887
    %v1983 = vpack.c.b16 %v1976, %v1975
    %v1984 = vpack.c.b16 %v1978, %v1977
    %v1985 = vpack.c.b16 %v1980, %v1979
    %v1986 = vpack.c.b16 %v1982, %v1981
    %v1992 = vsel %vm290, %v1878, 0
    %v1995 = vsel %vm290, %v1879, 0
    %1997 = vmatpush.bf16.msra.mxu0 0
    %1998 = vmatpush.bf16.msra.mxu0 0
    %1999 = vmatpush.bf16.msra.mxu0 0
    %2000 = vmatpush.bf16.msra.mxu0 0
    %2001 = vmatpush.bf16.msra.mxu0 %v1986
    %2002 = vmatpush.bf16.msra.mxu0 %v1985
    %2003 = vmatpush.bf16.msra.mxu0 %v1984
    %2004 = vmatpush.bf16.msra.mxu0 %v1983
    %2005 = vmatmul.bf16.gmra.mxu0 %v1992
    %v2006 = vpop.f32.mrf.mxu0
    %v2007 = vadd.f32 %v1958, %v2006
    %v2008 = vpop.f32.mrf.mxu0
    %v2009 = vadd.f32 %v1960, %v2008
    %2010 = vmatmul.bf16.gmra.mxu0 %v1995
    %v2011 = vpop.f32.mrf.mxu0
    %v2012 = vadd.f32 %v1963, %v2011
    %v2013 = vpop.f32.mrf.mxu0
    %v2014 = vadd.f32 %v1965, %v2013
    %2015 = vdwg.mxu0
    %2016 = vmatpush.bf16.msra.mxu0 0
    %2017 = vmatpush.bf16.msra.mxu0 0
    %2018 = vmatpush.bf16.msra.mxu0 0
    %2019 = vmatpush.bf16.msra.mxu0 0
    %2020 = vmatpush.bf16.msra.mxu0 0
    %2021 = vmatpush.bf16.msra.mxu0 0
    %2022 = vmatpush.bf16.msra.mxu0 %v1858
    %2023 = vmatpush.bf16.msra.mxu0 %v1857
    %2024 = vmatmul.bf16.gmra.mxu0 %v1067
    %v2025 = vpop.f32.mrf.mxu0
    %v2026 = vadd.f32 0.0, %v2025
    %v2027 = vpop.f32.mrf.mxu0
    %v2028 = vadd.f32 0.0, %v2027
    %2029 = vmatmul.bf16.gmra.mxu0 %v1070
    %v2030 = vpop.f32.mrf.mxu0
    %v2031 = vadd.f32 0.0, %v2030
    %v2032 = vpop.f32.mrf.mxu0
    %v2033 = vadd.f32 0.0, %v2032
    %2034 = vdwg.mxu0
    %v2035 = vpack.c.bf16 %v2028, %v2026
    %v2036 = vpack.c.bf16 %v2033, %v2031
    %s2037 = scalar_lea.vmem [#allocation7], 64
    %v2038 = vld [vmem:[%s2037] sm:$0xf]
    %v2039 = vld [vmem:[%s2037 + $0x4] sm:$0xf]
    %v2040 = vld [vmem:[%s2037 + $0x8] sm:$0xf]
    %v2041 = vld [vmem:[%s2037 + $0xc] sm:$0xf]
    %v2042 = vld [vmem:[%s2037 + $0x10] sm:$0xf]
    %v2043 = vld [vmem:[%s2037 + $0x14] sm:$0xf]
    %v2044 = vld [vmem:[%s2037 + $0x18] sm:$0xf]
    %v2045 = vld [vmem:[%s2037 + $0x1c] sm:$0xf]
    %v2054 = vunpack.c.l.b16 %v2038
    %v2055 = vunpack.c.l.b16 %v2039
    %v2056 = vunpack.c.l.b16 %v2040
    %v2057 = vunpack.c.l.b16 %v2041
    %v2058 = vunpack.c.l.b16 %v2042
    %v2059 = vunpack.c.l.b16 %v2043
    %v2060 = vunpack.c.l.b16 %v2044
    %v2061 = vunpack.c.l.b16 %v2045
    %v2062 = vpack.c.b16 %v2055, %v2054
    %v2063 = vpack.c.b16 %v2057, %v2056
    %v2064 = vpack.c.b16 %v2059, %v2058
    %v2065 = vpack.c.b16 %v2061, %v2060
    %v2071 = vsel %vm290, %v2035, 0
    %v2074 = vsel %vm290, %v2036, 0
    %2076 = vmatpush.bf16.msra.mxu0 0
    %2077 = vmatpush.bf16.msra.mxu0 0
    %2078 = vmatpush.bf16.msra.mxu0 0
    %2079 = vmatpush.bf16.msra.mxu0 0
    %2080 = vmatpush.bf16.msra.mxu0 %v2065
    %2081 = vmatpush.bf16.msra.mxu0 %v2064
    %2082 = vmatpush.bf16.msra.mxu0 %v2063
    %2083 = vmatpush.bf16.msra.mxu0 %v2062
    %2084 = vmatmul.bf16.gmra.mxu0 %v2071
    %v2085 = vpop.f32.mrf.mxu0
    %v2086 = vadd.f32 0.0, %v2085
    %v2087 = vpop.f32.mrf.mxu0
    %v2088 = vadd.f32 0.0, %v2087
    %2089 = vmatmul.bf16.gmra.mxu0 %v2074
    %v2090 = vpop.f32.mrf.mxu0
    %v2091 = vadd.f32 0.0, %v2090
    %v2092 = vpop.f32.mrf.mxu0
    %v2093 = vadd.f32 0.0, %v2092
    %2094 = vdwg.mxu0
    %v2095 = vadd.f32 %v2007, %v2086
    %v2096 = vadd.f32 %v2009, %v2088
    %v2097 = vadd.f32 %v2012, %v2091
    %v2098 = vadd.f32 %v2014, %v2093
    %2099 = vmatpush.bf16.msra.mxu0 0
    %2100 = vmatpush.bf16.msra.mxu0 0
    %2101 = vmatpush.bf16.msra.mxu0 0
    %2102 = vmatpush.bf16.msra.mxu0 0
    %2103 = vmatpush.bf16.msra.mxu0 0
    %2104 = vmatpush.bf16.msra.mxu0 0
    %2105 = vmatpush.bf16.msra.mxu0 %v1858
    %2106 = vmatpush.bf16.msra.mxu0 %v1857
    %2107 = vmatmul.bf16.gmra.mxu0 %v1171
    %v2108 = vpop.f32.mrf.mxu0
    %v2109 = vadd.f32 0.0, %v2108
    %v2110 = vpop.f32.mrf.mxu0
    %v2111 = vadd.f32 0.0, %v2110
    %2112 = vmatmul.bf16.gmra.mxu0 %v1174
    %v2113 = vpop.f32.mrf.mxu0
    %v2114 = vadd.f32 0.0, %v2113
    %v2115 = vpop.f32.mrf.mxu0
    %v2116 = vadd.f32 0.0, %v2115
    %2117 = vdwg.mxu0
    %v2118 = vpack.c.bf16 %v2111, %v2109
    %v2119 = vpack.c.bf16 %v2116, %v2114
    %s2120 = scalar_lea.vmem [#allocation7], 96
    %v2121 = vld [vmem:[%s2120] sm:$0xf]
    %v2122 = vld [vmem:[%s2120 + $0x4] sm:$0xf]
    %v2123 = vld [vmem:[%s2120 + $0x8] sm:$0xf]
    %v2124 = vld [vmem:[%s2120 + $0xc] sm:$0xf]
    %v2125 = vld [vmem:[%s2120 + $0x10] sm:$0xf]
    %v2126 = vld [vmem:[%s2120 + $0x14] sm:$0xf]
    %v2127 = vld [vmem:[%s2120 + $0x18] sm:$0xf]
    %v2128 = vld [vmem:[%s2120 + $0x1c] sm:$0xf]
    %v2137 = vunpack.c.l.b16 %v2121
    %v2138 = vunpack.c.l.b16 %v2122
    %v2139 = vunpack.c.l.b16 %v2123
    %v2140 = vunpack.c.l.b16 %v2124
    %v2141 = vunpack.c.l.b16 %v2125
    %v2142 = vunpack.c.l.b16 %v2126
    %v2143 = vunpack.c.l.b16 %v2127
    %v2144 = vunpack.c.l.b16 %v2128
    %v2145 = vpack.c.b16 %v2138, %v2137
    %v2146 = vpack.c.b16 %v2140, %v2139
    %v2147 = vpack.c.b16 %v2142, %v2141
    %v2148 = vpack.c.b16 %v2144, %v2143
    %v2154 = vsel %vm290, %v2118, 0
    %v2157 = vsel %vm290, %v2119, 0
    %2159 = vmatpush.bf16.msra.mxu0 0
    %2160 = vmatpush.bf16.msra.mxu0 0
    %2161 = vmatpush.bf16.msra.mxu0 0
    %2162 = vmatpush.bf16.msra.mxu0 0
    %2163 = vmatpush.bf16.msra.mxu0 %v2148
    %2164 = vmatpush.bf16.msra.mxu0 %v2147
    %2165 = vmatpush.bf16.msra.mxu0 %v2146
    %2166 = vmatpush.bf16.msra.mxu0 %v2145
    %2167 = vmatmul.bf16.gmra.mxu0 %v2154
    %v2168 = vpop.f32.mrf.mxu0
    %v2169 = vadd.f32 0.0, %v2168
    %v2170 = vpop.f32.mrf.mxu0
    %v2171 = vadd.f32 0.0, %v2170
    %2172 = vmatmul.bf16.gmra.mxu0 %v2157
    %v2173 = vpop.f32.mrf.mxu0
    %v2174 = vadd.f32 0.0, %v2173
    %v2175 = vpop.f32.mrf.mxu0
    %v2176 = vadd.f32 0.0, %v2175
    %2177 = vdwg.mxu0
    %v2178 = vadd.f32 %v2095, %v2169
    %v2179 = vadd.f32 %v2096, %v2171
    %v2180 = vadd.f32 %v2097, %v2174
    %v2181 = vadd.f32 %v2098, %v2176
    %2182 = vmatpush.bf16.msra.mxu0 0
    %2183 = vmatpush.bf16.msra.mxu0 0
    %2184 = vmatpush.bf16.msra.mxu0 0
    %2185 = vmatpush.bf16.msra.mxu0 0
    %2186 = vmatpush.bf16.msra.mxu0 0
    %2187 = vmatpush.bf16.msra.mxu0 0
    %2188 = vmatpush.bf16.msra.mxu0 %v1858
    %2189 = vmatpush.bf16.msra.mxu0 %v1857
    %2190 = vmatmul.bf16.gmra.mxu0 %v1275
    %v2191 = vpop.f32.mrf.mxu0
    %v2192 = vadd.f32 0.0, %v2191
    %v2193 = vpop.f32.mrf.mxu0
    %v2194 = vadd.f32 0.0, %v2193
    %2195 = vmatmul.bf16.gmra.mxu0 %v1278
    %v2196 = vpop.f32.mrf.mxu0
    %v2197 = vadd.f32 0.0, %v2196
    %v2198 = vpop.f32.mrf.mxu0
    %v2199 = vadd.f32 0.0, %v2198
    %2200 = vdwg.mxu0
    %v2201 = vpack.c.bf16 %v2194, %v2192
    %v2202 = vpack.c.bf16 %v2199, %v2197
    %s2203 = scalar_lea.vmem [#allocation7], 128
    %v2204 = vld [vmem:[%s2203] sm:$0xf]
    %v2205 = vld [vmem:[%s2203 + $0x4] sm:$0xf]
    %v2206 = vld [vmem:[%s2203 + $0x8] sm:$0xf]
    %v2207 = vld [vmem:[%s2203 + $0xc] sm:$0xf]
    %v2208 = vld [vmem:[%s2203 + $0x10] sm:$0xf]
    %v2209 = vld [vmem:[%s2203 + $0x14] sm:$0xf]
    %v2210 = vld [vmem:[%s2203 + $0x18] sm:$0xf]
    %v2211 = vld [vmem:[%s2203 + $0x1c] sm:$0xf]
    %v2220 = vunpack.c.l.b16 %v2204
    %v2221 = vunpack.c.l.b16 %v2205
    %v2222 = vunpack.c.l.b16 %v2206
    %v2223 = vunpack.c.l.b16 %v2207
    %v2224 = vunpack.c.l.b16 %v2208
    %v2225 = vunpack.c.l.b16 %v2209
    %v2226 = vunpack.c.l.b16 %v2210
    %v2227 = vunpack.c.l.b16 %v2211
    %v2228 = vpack.c.b16 %v2221, %v2220
    %v2229 = vpack.c.b16 %v2223, %v2222
    %v2230 = vpack.c.b16 %v2225, %v2224
    %v2231 = vpack.c.b16 %v2227, %v2226
    %v2237 = vsel %vm290, %v2201, 0
    %v2240 = vsel %vm290, %v2202, 0
    %2242 = vmatpush.bf16.msra.mxu0 0
    %2243 = vmatpush.bf16.msra.mxu0 0
    %2244 = vmatpush.bf16.msra.mxu0 0
    %2245 = vmatpush.bf16.msra.mxu0 0
    %2246 = vmatpush.bf16.msra.mxu0 %v2231
    %2247 = vmatpush.bf16.msra.mxu0 %v2230
    %2248 = vmatpush.bf16.msra.mxu0 %v2229
    %2249 = vmatpush.bf16.msra.mxu0 %v2228
    %2250 = vmatmul.bf16.gmra.mxu0 %v2237
    %v2251 = vpop.f32.mrf.mxu0
    %v2252 = vadd.f32 0.0, %v2251
    %v2253 = vpop.f32.mrf.mxu0
    %v2254 = vadd.f32 0.0, %v2253
    %2255 = vmatmul.bf16.gmra.mxu0 %v2240
    %v2256 = vpop.f32.mrf.mxu0
    %v2257 = vadd.f32 0.0, %v2256
    %v2258 = vpop.f32.mrf.mxu0
    %v2259 = vadd.f32 0.0, %v2258
    %2260 = vdwg.mxu0
    %v2261 = vadd.f32 %v2178, %v2252
    %v2262 = vadd.f32 %v2179, %v2254
    %v2263 = vadd.f32 %v2180, %v2257
    %v2264 = vadd.f32 %v2181, %v2259
    %2265 = vmatpush.bf16.msra.mxu0 0
    %2266 = vmatpush.bf16.msra.mxu0 0
    %2267 = vmatpush.bf16.msra.mxu0 0
    %2268 = vmatpush.bf16.msra.mxu0 0
    %2269 = vmatpush.bf16.msra.mxu0 0
    %2270 = vmatpush.bf16.msra.mxu0 0
    %2271 = vmatpush.bf16.msra.mxu0 %v1858
    %2272 = vmatpush.bf16.msra.mxu0 %v1857
    %2273 = vmatmul.bf16.gmra.mxu0 %v1379
    %v2274 = vpop.f32.mrf.mxu0
    %v2275 = vadd.f32 0.0, %v2274
    %v2276 = vpop.f32.mrf.mxu0
    %v2277 = vadd.f32 0.0, %v2276
    %2278 = vmatmul.bf16.gmra.mxu0 %v1382
    %v2279 = vpop.f32.mrf.mxu0
    %v2280 = vadd.f32 0.0, %v2279
    %v2281 = vpop.f32.mrf.mxu0
    %v2282 = vadd.f32 0.0, %v2281
    %2283 = vdwg.mxu0
    %v2284 = vpack.c.bf16 %v2277, %v2275
    %v2285 = vpack.c.bf16 %v2282, %v2280
    %s2286 = scalar_lea.vmem [#allocation7], 160
    %v2287 = vld [vmem:[%s2286] sm:$0xf]
    %v2288 = vld [vmem:[%s2286 + $0x4] sm:$0xf]
    %v2289 = vld [vmem:[%s2286 + $0x8] sm:$0xf]
    %v2290 = vld [vmem:[%s2286 + $0xc] sm:$0xf]
    %v2291 = vld [vmem:[%s2286 + $0x10] sm:$0xf]
    %v2292 = vld [vmem:[%s2286 + $0x14] sm:$0xf]
    %v2293 = vld [vmem:[%s2286 + $0x18] sm:$0xf]
    %v2294 = vld [vmem:[%s2286 + $0x1c] sm:$0xf]
    %v2303 = vunpack.c.l.b16 %v2287
    %v2304 = vunpack.c.l.b16 %v2288
    %v2305 = vunpack.c.l.b16 %v2289
    %v2306 = vunpack.c.l.b16 %v2290
    %v2307 = vunpack.c.l.b16 %v2291
    %v2308 = vunpack.c.l.b16 %v2292
    %v2309 = vunpack.c.l.b16 %v2293
    %v2310 = vunpack.c.l.b16 %v2294
    %v2311 = vpack.c.b16 %v2304, %v2303
    %v2312 = vpack.c.b16 %v2306, %v2305
    %v2313 = vpack.c.b16 %v2308, %v2307
    %v2314 = vpack.c.b16 %v2310, %v2309
    %v2320 = vsel %vm290, %v2284, 0
    %v2323 = vsel %vm290, %v2285, 0
    %2325 = vmatpush.bf16.msra.mxu0 0
    %2326 = vmatpush.bf16.msra.mxu0 0
    %2327 = vmatpush.bf16.msra.mxu0 0
    %2328 = vmatpush.bf16.msra.mxu0 0
    %2329 = vmatpush.bf16.msra.mxu0 %v2314
    %2330 = vmatpush.bf16.msra.mxu0 %v2313
    %2331 = vmatpush.bf16.msra.mxu0 %v2312
    %2332 = vmatpush.bf16.msra.mxu0 %v2311
    %2333 = vmatmul.bf16.gmra.mxu0 %v2320
    %v2334 = vpop.f32.mrf.mxu0
    %v2335 = vadd.f32 0.0, %v2334
    %v2336 = vpop.f32.mrf.mxu0
    %v2337 = vadd.f32 0.0, %v2336
    %2338 = vmatmul.bf16.gmra.mxu0 %v2323
    %v2339 = vpop.f32.mrf.mxu0
    %v2340 = vadd.f32 0.0, %v2339
    %v2341 = vpop.f32.mrf.mxu0
    %v2342 = vadd.f32 0.0, %v2341
    %2343 = vdwg.mxu0
    %v2344 = vadd.f32 %v2261, %v2335
    %v2345 = vadd.f32 %v2262, %v2337
    %v2346 = vadd.f32 %v2263, %v2340
    %v2347 = vadd.f32 %v2264, %v2342
    %2348 = vmatpush.bf16.msra.mxu0 0
    %2349 = vmatpush.bf16.msra.mxu0 0
    %2350 = vmatpush.bf16.msra.mxu0 0
    %2351 = vmatpush.bf16.msra.mxu0 0
    %2352 = vmatpush.bf16.msra.mxu0 0
    %2353 = vmatpush.bf16.msra.mxu0 0
    %2354 = vmatpush.bf16.msra.mxu0 %v1858
    %2355 = vmatpush.bf16.msra.mxu0 %v1857
    %2356 = vmatmul.bf16.gmra.mxu0 %v1483
    %v2357 = vpop.f32.mrf.mxu0
    %v2358 = vadd.f32 0.0, %v2357
    %v2359 = vpop.f32.mrf.mxu0
    %v2360 = vadd.f32 0.0, %v2359
    %2361 = vmatmul.bf16.gmra.mxu0 %v1486
    %v2362 = vpop.f32.mrf.mxu0
    %v2363 = vadd.f32 0.0, %v2362
    %v2364 = vpop.f32.mrf.mxu0
    %v2365 = vadd.f32 0.0, %v2364
    %2366 = vdwg.mxu0
    %v2367 = vpack.c.bf16 %v2360, %v2358
    %v2368 = vpack.c.bf16 %v2365, %v2363
    %s2369 = scalar_lea.vmem [#allocation7], 192
    %v2370 = vld [vmem:[%s2369] sm:$0xf]
    %v2371 = vld [vmem:[%s2369 + $0x4] sm:$0xf]
    %v2372 = vld [vmem:[%s2369 + $0x8] sm:$0xf]
    %v2373 = vld [vmem:[%s2369 + $0xc] sm:$0xf]
    %v2374 = vld [vmem:[%s2369 + $0x10] sm:$0xf]
    %v2375 = vld [vmem:[%s2369 + $0x14] sm:$0xf]
    %v2376 = vld [vmem:[%s2369 + $0x18] sm:$0xf]
    %v2377 = vld [vmem:[%s2369 + $0x1c] sm:$0xf]
    %v2386 = vunpack.c.l.b16 %v2370
    %v2387 = vunpack.c.l.b16 %v2371
    %v2388 = vunpack.c.l.b16 %v2372
    %v2389 = vunpack.c.l.b16 %v2373
    %v2390 = vunpack.c.l.b16 %v2374
    %v2391 = vunpack.c.l.b16 %v2375
    %v2392 = vunpack.c.l.b16 %v2376
    %v2393 = vunpack.c.l.b16 %v2377
    %v2394 = vpack.c.b16 %v2387, %v2386
    %v2395 = vpack.c.b16 %v2389, %v2388
    %v2396 = vpack.c.b16 %v2391, %v2390
    %v2397 = vpack.c.b16 %v2393, %v2392
    %v2403 = vsel %vm290, %v2367, 0
    %v2406 = vsel %vm290, %v2368, 0
    %2408 = vmatpush.bf16.msra.mxu0 0
    %2409 = vmatpush.bf16.msra.mxu0 0
    %2410 = vmatpush.bf16.msra.mxu0 0
    %2411 = vmatpush.bf16.msra.mxu0 0
    %2412 = vmatpush.bf16.msra.mxu0 %v2397
    %2413 = vmatpush.bf16.msra.mxu0 %v2396
    %2414 = vmatpush.bf16.msra.mxu0 %v2395
    %2415 = vmatpush.bf16.msra.mxu0 %v2394
    %2416 = vmatmul.bf16.gmra.mxu0 %v2403
    %v2417 = vpop.f32.mrf.mxu0
    %v2418 = vadd.f32 0.0, %v2417
    %v2419 = vpop.f32.mrf.mxu0
    %v2420 = vadd.f32 0.0, %v2419
    %2421 = vmatmul.bf16.gmra.mxu0 %v2406
    %v2422 = vpop.f32.mrf.mxu0
    %v2423 = vadd.f32 0.0, %v2422
    %v2424 = vpop.f32.mrf.mxu0
    %v2425 = vadd.f32 0.0, %v2424
    %2426 = vdwg.mxu0
    %v2427 = vadd.f32 %v2344, %v2418
    %v2428 = vadd.f32 %v2345, %v2420
    %v2429 = vadd.f32 %v2346, %v2423
    %v2430 = vadd.f32 %v2347, %v2425
    %2431 = vmatpush.bf16.msra.mxu0 0
    %2432 = vmatpush.bf16.msra.mxu0 0
    %2433 = vmatpush.bf16.msra.mxu0 0
    %2434 = vmatpush.bf16.msra.mxu0 0
    %2435 = vmatpush.bf16.msra.mxu0 0
    %2436 = vmatpush.bf16.msra.mxu0 0
    %2437 = vmatpush.bf16.msra.mxu0 %v1858
    %2438 = vmatpush.bf16.msra.mxu0 %v1857
    %2439 = vmatmul.bf16.gmra.mxu0 %v1587
    %v2440 = vpop.f32.mrf.mxu0
    %v2441 = vadd.f32 0.0, %v2440
    %v2442 = vpop.f32.mrf.mxu0
    %v2443 = vadd.f32 0.0, %v2442
    %2444 = vmatmul.bf16.gmra.mxu0 %v1590
    %v2445 = vpop.f32.mrf.mxu0
    %v2446 = vadd.f32 0.0, %v2445
    %v2447 = vpop.f32.mrf.mxu0
    %v2448 = vadd.f32 0.0, %v2447
    %2449 = vdwg.mxu0
    %v2450 = vpack.c.bf16 %v2443, %v2441
    %v2451 = vpack.c.bf16 %v2448, %v2446
    %s2452 = scalar_lea.vmem [#allocation7], 224
    %v2453 = vld [vmem:[%s2452] sm:$0xf]
    %v2454 = vld [vmem:[%s2452 + $0x4] sm:$0xf]
    %v2455 = vld [vmem:[%s2452 + $0x8] sm:$0xf]
    %v2456 = vld [vmem:[%s2452 + $0xc] sm:$0xf]
    %v2457 = vld [vmem:[%s2452 + $0x10] sm:$0xf]
    %v2458 = vld [vmem:[%s2452 + $0x14] sm:$0xf]
    %v2459 = vld [vmem:[%s2452 + $0x18] sm:$0xf]
    %v2460 = vld [vmem:[%s2452 + $0x1c] sm:$0xf]
    %v2469 = vunpack.c.l.b16 %v2453
    %v2470 = vunpack.c.l.b16 %v2454
    %v2471 = vunpack.c.l.b16 %v2455
    %v2472 = vunpack.c.l.b16 %v2456
    %v2473 = vunpack.c.l.b16 %v2457
    %v2474 = vunpack.c.l.b16 %v2458
    %v2475 = vunpack.c.l.b16 %v2459
    %v2476 = vunpack.c.l.b16 %v2460
    %v2477 = vpack.c.b16 %v2470, %v2469
    %v2478 = vpack.c.b16 %v2472, %v2471
    %v2479 = vpack.c.b16 %v2474, %v2473
    %v2480 = vpack.c.b16 %v2476, %v2475
    %v2486 = vsel %vm290, %v2450, 0
    %v2489 = vsel %vm290, %v2451, 0
    %2491 = vmatpush.bf16.msra.mxu0 0
    %2492 = vmatpush.bf16.msra.mxu0 0
    %2493 = vmatpush.bf16.msra.mxu0 0
    %2494 = vmatpush.bf16.msra.mxu0 0
    %2495 = vmatpush.bf16.msra.mxu0 %v2480
    %2496 = vmatpush.bf16.msra.mxu0 %v2479
    %2497 = vmatpush.bf16.msra.mxu0 %v2478
    %2498 = vmatpush.bf16.msra.mxu0 %v2477
    %2499 = vmatmul.bf16.gmra.mxu0 %v2486
    %v2500 = vpop.f32.mrf.mxu0
    %v2501 = vadd.f32 0.0, %v2500
    %v2502 = vpop.f32.mrf.mxu0
    %v2503 = vadd.f32 0.0, %v2502
    %2504 = vmatmul.bf16.gmra.mxu0 %v2489
    %v2505 = vpop.f32.mrf.mxu0
    %v2506 = vadd.f32 0.0, %v2505
    %v2507 = vpop.f32.mrf.mxu0
    %v2508 = vadd.f32 0.0, %v2507
    %2509 = vdwg.mxu0
    %v2510 = vadd.f32 %v2427, %v2501
    %v2511 = vadd.f32 %v2428, %v2503
    %v2512 = vadd.f32 %v2429, %v2506
    %v2513 = vadd.f32 %v2430, %v2508
    %2514 = vmatpush.bf16.msra.mxu0 0
    %2515 = vmatpush.bf16.msra.mxu0 0
    %2516 = vmatpush.bf16.msra.mxu0 0
    %2517 = vmatpush.bf16.msra.mxu0 0
    %2518 = vmatpush.bf16.msra.mxu0 0
    %2519 = vmatpush.bf16.msra.mxu0 0
    %2520 = vmatpush.bf16.msra.mxu0 %v1858
    %2521 = vmatpush.bf16.msra.mxu0 %v1857
    %2522 = vmatmul.bf16.gmra.mxu0 %v1691
    %v2523 = vpop.f32.mrf.mxu0
    %v2524 = vadd.f32 0.0, %v2523
    %v2525 = vpop.f32.mrf.mxu0
    %v2526 = vadd.f32 0.0, %v2525
    %2527 = vmatmul.bf16.gmra.mxu0 %v1694
    %v2528 = vpop.f32.mrf.mxu0
    %v2529 = vadd.f32 0.0, %v2528
    %v2530 = vpop.f32.mrf.mxu0
    %v2531 = vadd.f32 0.0, %v2530
    %2532 = vdwg.mxu0
    %v2533 = vpack.c.bf16 %v2526, %v2524
    %v2534 = vpack.c.bf16 %v2531, %v2529
    %s2535 = scalar_lea.vmem [#allocation7], 256
    %v2536 = vld [vmem:[%s2535] sm:$0xf]
    %v2537 = vld [vmem:[%s2535 + $0x4] sm:$0xf]
    %v2538 = vld [vmem:[%s2535 + $0x8] sm:$0xf]
    %v2539 = vld [vmem:[%s2535 + $0xc] sm:$0xf]
    %v2540 = vld [vmem:[%s2535 + $0x10] sm:$0xf]
    %v2541 = vld [vmem:[%s2535 + $0x14] sm:$0xf]
    %v2542 = vld [vmem:[%s2535 + $0x18] sm:$0xf]
    %v2543 = vld [vmem:[%s2535 + $0x1c] sm:$0xf]
    %v2552 = vunpack.c.l.b16 %v2536
    %v2553 = vunpack.c.l.b16 %v2537
    %v2554 = vunpack.c.l.b16 %v2538
    %v2555 = vunpack.c.l.b16 %v2539
    %v2556 = vunpack.c.l.b16 %v2540
    %v2557 = vunpack.c.l.b16 %v2541
    %v2558 = vunpack.c.l.b16 %v2542
    %v2559 = vunpack.c.l.b16 %v2543
    %v2560 = vpack.c.b16 %v2553, %v2552
    %v2561 = vpack.c.b16 %v2555, %v2554
    %v2562 = vpack.c.b16 %v2557, %v2556
    %v2563 = vpack.c.b16 %v2559, %v2558
    %v2569 = vsel %vm290, %v2533, 0
    %v2572 = vsel %vm290, %v2534, 0
    %2574 = vmatpush.bf16.msra.mxu0 0
    %2575 = vmatpush.bf16.msra.mxu0 0
    %2576 = vmatpush.bf16.msra.mxu0 0
    %2577 = vmatpush.bf16.msra.mxu0 0
    %2578 = vmatpush.bf16.msra.mxu0 %v2563
    %2579 = vmatpush.bf16.msra.mxu0 %v2562
    %2580 = vmatpush.bf16.msra.mxu0 %v2561
    %2581 = vmatpush.bf16.msra.mxu0 %v2560
    %2582 = vmatmul.bf16.gmra.mxu0 %v2569
    %v2583 = vpop.f32.mrf.mxu0
    %v2584 = vadd.f32 0.0, %v2583
    %v2585 = vpop.f32.mrf.mxu0
    %v2586 = vadd.f32 0.0, %v2585
    %2587 = vmatmul.bf16.gmra.mxu0 %v2572
    %v2588 = vpop.f32.mrf.mxu0
    %v2589 = vadd.f32 0.0, %v2588
    %v2590 = vpop.f32.mrf.mxu0
    %v2591 = vadd.f32 0.0, %v2590
    %2592 = vdwg.mxu0
    %v2593 = vadd.f32 %v2510, %v2584
    %v2594 = vadd.f32 %v2511, %v2586
    %v2595 = vadd.f32 %v2512, %v2589
    %v2596 = vadd.f32 %v2513, %v2591
    %v2597 = vld [vmem:[%s10] sm:$0x1]
    %v2598 = vld [vmem:[%s11] sm:$0x1]
    %v2599 = vsel %vm290, %v2593, 0.0
    %v2600 = vsel %vm290, %v2594, 0.0
    %v2601 = vadd.f32 %v2599, %v2600
    %v2602 = vsel %vm290, %v2595, 0.0
    %v2603 = vadd.f32 %v2601, %v2602
    %v2604 = vsel %vm290, %v2596, 0.0
    %v2605 = vadd.f32 %v2603, %v2604
    %v2606 = vrot.slane %v2605, 4
    %v2607 = vadd.f32 %v2605, %v2606
    %v2608 = vrot.slane %v2607, 2
    %v2609 = vadd.f32 %v2607, %v2608
    %v2610 = vrot.slane %v2609, 1
    %v2611 = vadd.f32 %v2609, %v2610
    %v2612 = vmul.f32 %v2611, %v1800
    %v2613 = vsub.f32 %v2593, %v2612
    %v2614 = vsub.f32 %v2594, %v2612
    %v2615 = vsub.f32 %v2595, %v2612
    %v2616 = vsub.f32 %v2596, %v2612
    %v2617 = vmul.f32 %v2613, %v2613
    %v2618 = vmul.f32 %v2614, %v2614
    %v2619 = vmul.f32 %v2615, %v2615
    %v2620 = vmul.f32 %v2616, %v2616
    %v2621 = vsel %vm290, %v2617, 0.0
    %v2622 = vsel %vm290, %v2618, 0.0
    %v2623 = vadd.f32 %v2621, %v2622
    %v2624 = vsel %vm290, %v2619, 0.0
    %v2625 = vadd.f32 %v2623, %v2624
    %v2626 = vsel %vm290, %v2620, 0.0
    %v2627 = vadd.f32 %v2625, %v2626
    %v2628 = vrot.slane %v2627, 4
    %v2629 = vadd.f32 %v2627, %v2628
    %v2630 = vrot.slane %v2629, 2
    %v2631 = vadd.f32 %v2629, %v2630
    %v2632 = vrot.slane %v2631, 1
    %v2633 = vadd.f32 %v2631, %v2632
    %v2634 = vmul.f32 %v2633, %v1800
    %v2635 = vadd.f32 %v2634, 1e-05
    %v2636 = vrsqrt.pop %v2635
    %v2637 = vmul.f32 %v2636, %v2635
    %v2638 = vmul.f32 %v2637, %v2636
    %v2639 = vmul.f32 0.5, %v2638
    %v2640 = vsub.f32 1.5, %v2639
    %v2641 = vmul.f32 %v2636, %v2640
    %vm2642 = vweird.f32 %v2635
    %vm2643 = vweird.f32 %v2636
    %vm2644 = vmor %vm2642, %vm2643
    %v2645 = vsel %vm2644, %v2636, %v2641
    %v2646 = vmul.f32 %v2613, %v2645
    %v2647 = vmul.f32 %v2614, %v2645
    %v2648 = vmul.f32 %v2615, %v2645
    %v2649 = vmul.f32 %v2616, %v2645
    %v2651 = vperm.slane %v2597, 0
    %v2653 = vmul.f32 %v2646, %v2651
    %v2654 = vmul.f32 %v2647, %v2651
    %v2655 = vmul.f32 %v2648, %v2651
    %v2656 = vmul.f32 %v2649, %v2651
    %v2658 = vperm.slane %v2598, 0
    %v2660 = vadd.f32 %v2653, %v2658
    %v2661 = vadd.f32 %v2654, %v2658
    %v2662 = vadd.f32 %v2655, %v2658
    %v2663 = vadd.f32 %v2656, %v2658
    %v2664 = vadd.f32 %v2660, %v846
    %v2665 = vadd.f32 %v2661, %v847
    %v2666 = vadd.f32 %v2662, %v848
    %v2667 = vadd.f32 %v2663, %v849
    %v2668 = vmax.f32 %v2664, 0.0
    %v2669 = vmax.f32 %v2665, 0.0
    %v2670 = vmax.f32 %v2666, 0.0
    %v2671 = vmax.f32 %v2667, 0.0
    %v2672 = vld [vmem:[%s12] sm:$0x1]
    %v2673 = vpack.c.bf16 %v2669, %v2668
    %v2674 = vpack.c.bf16 %v2671, %v2670
    %v2676 = vsel %vm866, %v2672, 0
    %2678 = vmatpush.bf16.msra.mxu0 0
    %2679 = vmatpush.bf16.msra.mxu0 0
    %2680 = vmatpush.bf16.msra.mxu0 0
    %2681 = vmatpush.bf16.msra.mxu0 0
    %2682 = vmatpush.bf16.msra.mxu0 0
    %2683 = vmatpush.bf16.msra.mxu0 0
    %2684 = vmatpush.bf16.msra.mxu0 %v2674
    %2685 = vmatpush.bf16.msra.mxu0 %v2673
    %2686 = vmatmul.bf16.gmra.mxu0 %v2676
    %v2687 = vpop.f32.mrf.mxu0
    %v2688 = vadd.f32 0.0, %v2687
    %v2689 = vpop.f32.mrf.mxu0
    %2690 = vdwg.mxu0
    %v2691 = vpack.c.bf16 %v2688, %v2688
    %v2692 = vld [vmem:[%s13] sm:$0xf]
    %v2693 = vld [vmem:[%s13 + $0x4] sm:$0xf]
    %v2694 = vld [vmem:[%s13 + $0x8] sm:$0xf]
    %v2695 = vld [vmem:[%s13 + $0xc] sm:$0xf]
    %v2696 = vld [vmem:[%s13 + $0x10] sm:$0xf]
    %v2697 = vld [vmem:[%s13 + $0x14] sm:$0xf]
    %v2698 = vld [vmem:[%s13 + $0x18] sm:$0xf]
    %v2699 = vld [vmem:[%s13 + $0x1c] sm:$0xf]
    %v2700 = vld [vmem:[%s14] sm:$0x1]
    %v2702 = vperm.slane %v2700, 0
    %v2712 = vunpack.c.l.b16 %v2692
    %v2713 = vunpack.c.l.b16 %v2693
    %v2714 = vunpack.c.l.b16 %v2694
    %v2715 = vunpack.c.l.b16 %v2695
    %v2716 = vunpack.c.l.b16 %v2696
    %v2717 = vunpack.c.l.b16 %v2697
    %v2718 = vunpack.c.l.b16 %v2698
    %v2719 = vunpack.c.l.b16 %v2699
    %v2720 = vpack.c.b16 %v2713, %v2712
    %v2721 = vpack.c.b16 %v2715, %v2714
    %v2722 = vpack.c.b16 %v2717, %v2716
    %v2723 = vpack.c.b16 %v2719, %v2718
    %v2729 = vsel %vm290, %v2691, 0
    %2731 = vmatpush.bf16.msra.mxu0 0
    %2732 = vmatpush.bf16.msra.mxu0 0
    %2733 = vmatpush.bf16.msra.mxu0 0
    %2734 = vmatpush.bf16.msra.mxu0 0
    %2735 = vmatpush.bf16.msra.mxu0 %v2723
    %2736 = vmatpush.bf16.msra.mxu0 %v2722
    %2737 = vmatpush.bf16.msra.mxu0 %v2721
    %2738 = vmatpush.bf16.msra.mxu0 %v2720
    %2739 = vmatmul.bf16.gmra.mxu0 %v2729
    %v2740 = vpop.f32.mrf.mxu0
    %v2741 = vadd.f32 %v2702, %v2740
    %v2742 = vpop.f32.mrf.mxu0
    %2743 = vdwg.mxu0
    %v2744 = vld [vmem:[%s15] sm:$0x3]
    %v2745 = vmax.f32 %v2744, 0.1
    %2747 = vset.pattern.permute.xlu0 0
    %2748 = vperm.xlu0 %2747, %v2745
    %v2749 = vpop.permute.xlu0 %2748
    %v2751 = vrcp.pop %v2749
    %v2752 = vmul.f32 %v2749, %v2751
    %v2753 = vsub.f32 1.0, %v2752
    %v2754 = vmul.f32 %v2751, %v2753
    %v2755 = vadd.f32 %v2751, %v2754
    %vm2756 = vweird.f32 %v2749
    %vm2757 = vweird.f32 %v2751
    %vm2758 = vmor %vm2756, %vm2757
    %v2759 = vsel %vm2758, %v2751, %v2755
    %v2760 = vand.u32 2147483647, %v2749
    %vm2761 = vcmp.eq.f32.partialorder %v2760, 8.507059e+37
    %v2762 = vand.u32 %v2749, 2147483648
    %v2763 = vor.u32 1.1754944e-38, %v2762
    %v2764 = vsel %vm2761, %v2763, %v2759
    %v2765 = vmul.f32 %v2741, %v2764
    %vm2766 = vcmask 9216
    %2767 = vst.msk [vmem:[#allocation8] sm:$0x3] %vm2766, %v2765
    // Predicated region
    $region78: #{tpu_custom_call.1} parent=1 // pred_check
      _
    $region79: #{tpu_custom_call.1} parent=1 // pred_check_branch
      %2769 = sbr.rel (0) target = $region81
    $region80: #{tpu_custom_call.1} parent=1 // pred_region
      %2771 = vsyncadd [#allocation4], 0
      %s2773 = sshll.u32 [#allocation8], 4
      %s2774 = int_to_ptr.vmem [resolvable:$true] %s2773
      %s2775 = sshll.u32 %s16, 4
      %s2776 = int_to_ptr.hbm [resolvable:$true] %s2775
      %2778 = dma.vmem_to_hbm [thread:$0]  %s2774, 32, %s2776, [#allocation4]
    $region81: #{tpu_custom_call.1} parent=1 // pred_fallthru
      _
    // Predicated region
    $region82: #{tpu_custom_call.1} parent=1 // pred_check
      _
    $region83: #{tpu_custom_call.1} parent=1 // pred_check_branch
      %2780 = sbr.rel (0) target = $region85
    $region84: #{tpu_custom_call.1} parent=1 // pred_region
      %2782 = dma.done [#allocation4], 32
    $region85: #{tpu_custom_call.1} parent=1 // pred_fallthru
      _
    %2783 = vsyncpa [#allocation3], 1
    %2784 = vsyncpa [#allocation6], 1
    %2785 = vsyncpa [#allocation4], 1

</llo_original>
